<compile_context>
chip_gen: v7x
topology: tpu7x:2x2x1
jax: 0.10.0
libtpu: 0.0.40
codegen_flags: <defaults>
</compile_context>

<pallas_src>
import functools
import math

import jax
import jax.numpy as jnp
import numpy as np
from jax import lax
from jax.experimental import pallas as pl
from jax.experimental.pallas import tpu as pltpu

_LN_EPS = 1e-6
_NEG_INF = -1e18


# --------------------------- in-kernel helpers -------------------------------

def _wdot(x, w):
    """Weight matmul: bf16 operands, f32 accumulation (w is stored in bf16)."""
    return jnp.dot(x.astype(jnp.bfloat16), w, preferred_element_type=jnp.float32)


def _layer_norm(x, g, b):
    """MIME LayerNorm: gamma*(x-mean)/(std+eps)+beta, torch unbiased std."""
    n = x.shape[-1]
    mean = jnp.mean(x, axis=-1, keepdims=True)
    d = x - mean
    var = jnp.sum(d * d, axis=-1, keepdims=True) * (1.0 / (n - 1))
    inv = pl.reciprocal(jnp.sqrt(var) + _LN_EPS, approx=True)   # EUP, not VALU
    return g * (d * inv) + b


def _softmax(logits):
    m = jnp.max(logits, axis=-1, keepdims=True)
    e = jnp.exp(logits - m)
    return e * pl.reciprocal(jnp.sum(e, axis=-1, keepdims=True), approx=True)


def _mha_block(xq, kv, wq, wk, wv, wo, nh, bb, lq, lk, bias_fn):
    """Multi-head attention over a batch block.

    xq: [bb*lq, H] queries, kv: [bb*lk, H] key/value source.
    wq/wk: [nh, H, dk], wv: [nh, H, dv], wo: [nh, dv, H] (bf16, pre-split).
    bias_fn(b) -> additive f32 bias broadcastable to [nh, lq, lk], or None.
    Returns [bb*lq, H] f32.
    """
    dk = wq.shape[-1]
    scale = float(dk) ** -0.5
    xq16 = xq.astype(jnp.bfloat16)
    kv16 = kv.astype(jnp.bfloat16)

    # Per-head projections: big-M matmuls, heads assembled on a leading axis
    # (weight indexing is free; no runtime lane-granular activation slicing).
    qh = jnp.stack([jnp.dot(xq16, wq[h], preferred_element_type=jnp.float32)
                    for h in range(nh)], axis=0) * scale          # [nh, Rq, dk]
    kh = jnp.stack([jnp.dot(kv16, wk[h], preferred_element_type=jnp.float32)
                    for h in range(nh)], axis=0)                  # [nh, Rk, dk]
    vh = jnp.stack([jnp.dot(kv16, wv[h], preferred_element_type=jnp.float32)
                    for h in range(nh)], axis=0)                  # [nh, Rk, dv]

    # Attention scores/softmax/context per sequence (leading-batch einsums).
    parts = []
    for b in range(bb):
        qb = qh[:, b * lq:(b + 1) * lq, :]
        kb = kh[:, b * lk:(b + 1) * lk, :]
        vb = vh[:, b * lk:(b + 1) * lk, :]
        logits = jnp.einsum('hqd,hkd->hqk', qb, kb,
                            preferred_element_type=jnp.float32)   # [nh, lq, lk]
        bias = bias_fn(b)
        if bias is not None:
            logits = logits + bias
        p = _softmax(logits)                                      # f32
        parts.append(jnp.einsum('hqk,hkd->hqd', p, vb,
                                preferred_element_type=jnp.float32))
    ctx = parts[0] if bb == 1 else jnp.concatenate(parts, axis=1)  # [nh, Rq, dv]

    # merge_heads + output_linear as ONE batched contraction + leading-dim sum
    heads_out = jnp.einsum('hqd,hde->hqe', ctx.astype(jnp.bfloat16), wo,
                           preferred_element_type=jnp.float32)     # [nh, Rq, H]
    return jnp.sum(heads_out, axis=0)


def _conv3(x, w, bias, taps):
    """Conv1d(k=3) over the flattened [bb*L, C] rows.

    taps: tuple of (shift, mask) — tap j multiplies x[l - shift_j] by w[j];
    mask ([R,1] f32 of 0/1) zeroes rows that would cross a sequence boundary
    (it also kills the circular wrap of jnp.roll).  w: [3, Cin, Cout] bf16.
    """
    y = None
    for j, (shift, mask) in enumerate(taps):
        xi = x if shift == 0 else jnp.roll(x, shift, axis=0) * mask
        t = _wdot(xi, w[j])
        y = t if y is None else y + t
    return y + bias


# ------------------------------- kernels --------------------------------------

def _encoder_stack_kernel(
        enc_ref, emo_ref, pad_ref, timing_ref, pwe_ref, pwm_ref,
        ln1_g_ref, ln1_b_ref, wq_ref, wk_ref, wv_ref, wo_ref,
        ln2_g_ref, ln2_b_ref, c1w_ref, c1b_ref, c2w_ref, c2b_ref,
        lnf_g_ref, lnf_b_ref, out_ref,
        *, num_layers, num_heads, bb, seq_len):
    L = seq_len
    R = bb * L
    H = timing_ref.shape[-1]

    # per-row position inside its sequence -> conv boundary masks (built once)
    pos = lax.broadcasted_iota(jnp.int32, (R, 1), 0) % L
    m_ge1 = (pos >= 1).astype(jnp.float32)
    m_le = (pos <= L - 2).astype(jnp.float32)
    taps = ((1, m_ge1), (0, None), (-1, m_le))          # Conv1d(k=3), padding='both'

    # embedding_proj of cat([encoder_outputs, emotion.expand], -1), decomposed so
    # the concat is never materialized (emotion length == 1, asserted in wrapper)
    x = _wdot(enc_ref[...], pwe_ref[...])                            # [R, H]
    emo_p = _wdot(emo_ref[...].reshape(bb, -1), pwm_ref[...])        # [bb, H]
    x = (x.reshape(bb, L, H) + emo_p[:, None, :]
         + timing_ref[...][None, :, :]).reshape(R, H)

    key_bias = pad_ref[...] * _NEG_INF                               # [bb, 1, L]
    bias_fn = lambda b: key_bias[b]                                  # -> [1, L]

    for l in range(num_layers):
        xn = _layer_norm(x, ln1_g_ref[l], ln1_b_ref[l])
        x = x + _mha_block(xn, xn, wq_ref[l], wk_ref[l], wv_ref[l], wo_ref[l],
                           num_heads, bb, L, L, bias_fn)
        xn = _layer_norm(x, ln2_g_ref[l], ln2_b_ref[l])
        h = jnp.maximum(_conv3(xn, c1w_ref[l], c1b_ref[l], taps), 0.0)
        x = x + _conv3(h, c2w_ref[l], c2b_ref[l], taps)

    out_ref[...] = _layer_norm(x, lnf_g_ref[...], lnf_b_ref[...]).astype(out_ref.dtype)


def _decoder_stack_kernel(
        enc_ref, emo_ref, pad_ref, timing_ref, pw_ref,
        ln1_g_ref, ln1_b_ref, swq_ref, swk_ref, swv_ref, swo_ref,
        ln2_g_ref, ln2_b_ref, cwq_ref, cwk_ref, cwv_ref, cwo_ref,
        ln3_g_ref, ln3_b_ref, c1w_ref, c1b_ref, c2w_ref, c2b_ref,
        lnf_g_ref, lnf_b_ref, out_ref,
        *, num_layers, num_heads, bb, seq_len, mem_len):
    L = seq_len
    Le = mem_len
    R = bb * L
    H = timing_ref.shape[-1]

    pos = lax.broadcasted_iota(jnp.int32, (R, 1), 0) % L
    m_ge1 = (pos >= 1).astype(jnp.float32)
    m_ge2 = (pos >= 2).astype(jnp.float32)
    taps = ((2, m_ge2), (1, m_ge1), (0, None))          # Conv1d(k=3), padding='left'

    x = _wdot(enc_ref[...], pw_ref[...])                             # [R, H]
    x = (x.reshape(bb, L, H) + timing_ref[...][None, :, :]).reshape(R, H)

    # decoder self-attn mask: key padding OR strictly-causal, built in-kernel
    qi = lax.broadcasted_iota(jnp.int32, (L, L), 0)
    ki = lax.broadcasted_iota(jnp.int32, (L, L), 1)
    causal = ki > qi                                                 # [L, L]
    pad = pad_ref[...] > 0.5                                         # [bb, 1, L]

    def self_bias(b):
        return jnp.where(jnp.logical_or(causal, pad[b]), _NEG_INF, 0.0)

    no_bias = lambda b: None                 # cross-attn mask is None in reference
    mem = emo_ref[...].reshape(bb * Le, -1)  # cross-attention memory [bb*Le, H]

    for l in range(num_layers):
        xn = _layer_norm(x, ln1_g_ref[l], ln1_b_ref[l])
        x = x + _mha_block(xn, xn, swq_ref[l], swk_ref[l], swv_ref[l], swo_ref[l],
                           num_heads, bb, L, L, self_bias)
        xn = _layer_norm(x, ln2_g_ref[l], ln2_b_ref[l])
        x = x + _mha_block(xn, mem, cwq_ref[l], cwk_ref[l], cwv_ref[l], cwo_ref[l],
                           num_heads, bb, L, Le, no_bias)
        xn = _layer_norm(x, ln3_g_ref[l], ln3_b_ref[l])
        h = jnp.maximum(_conv3(xn, c1w_ref[l], c1b_ref[l], taps), 0.0)
        x = x + _conv3(h, c2w_ref[l], c2b_ref[l], taps)

    out_ref[...] = _layer_norm(x, lnf_g_ref[...], lnf_b_ref[...]).astype(out_ref.dtype)


# ----------------------------- spec helpers -----------------------------------

def _full_spec(a):
    shape = tuple(int(d) for d in a.shape)
    nd = len(shape)
    return pl.BlockSpec(shape, lambda b, nd=nd: (0,) * nd)


def _nbytes(a):
    return int(np.prod(a.shape)) * jnp.dtype(a.dtype).itemsize


# --------------------------- module-level pieces ------------------------------

def gen_timing_signal(length, channels, min_timescale=1.0, max_timescale=1.0e4):
    position = np.arange(length, dtype=np.float64)
    num_timescales = channels // 2
    log_timescale_increment = (math.log(float(max_timescale) / float(min_timescale))
                               / max(num_timescales - 1, 1))
    inv_timescales = min_timescale * np.exp(
        np.arange(num_timescales, dtype=np.float64) * -log_timescale_increment)
    scaled_time = position[:, None] * inv_timescales[None, :]
    signal = np.concatenate([np.sin(scaled_time), np.cos(scaled_time)], axis=1)
    signal = np.pad(signal, [[0, 0], [0, channels % (num_timescales * 2)]])
    return jnp.asarray(signal.reshape(1, length, channels), dtype=jnp.float32)


class EmotionInputEncoderPallas:
    """Pallas/TPU re-implementation of EmotionInputEncoder (eval mode)."""

    def __init__(self, emb_dim, hidden_size, num_layers, num_heads,
                 total_key_depth, total_value_depth, filter_size,
                 universal=False, emo_input='self_att',
                 max_length=64, seed=1234):
        if universal:
            # TODO(synk): universal / ACT adaptive-computation branch not implemented.
            raise NotImplementedError('universal/ACT path not implemented')
        if emo_input not in ('self_att', 'cross_att'):
            raise ValueError('Invalid attention mode.')
        assert total_key_depth % num_heads == 0
        assert total_value_depth % num_heads == 0

        self.emo_input = emo_input
        self.num_heads = num_heads
        self.num_layers = num_layers
        self.hidden = hidden_size
        self.filter = filter_size
        self.emb_dim = emb_dim
        self.timing = gen_timing_signal(max_length, hidden_size)

        self._key = jax.random.PRNGKey(seed)

        def w(shape, scale=0.05, dtype=jnp.bfloat16):
            self._key, sub = jax.random.split(self._key)
            return (scale * jax.random.normal(sub, shape, dtype=jnp.float32)).astype(dtype)

        nl, nh, H = num_layers, num_heads, hidden_size
        dk = total_key_depth // nh
        dv = total_value_depth // nh
        fs = filter_size

        def ln_stack(n=nl):
            return (jnp.ones((n, 1, H), jnp.float32),
                    jnp.zeros((n, 1, H), jnp.float32))

        # conv-FFN (Conv1d k=3 -> ReLU -> Conv1d k=3), stacked over layers
        self.c1_w = w((nl, 3, H, fs))
        self.c1_b = jnp.zeros((nl, 1, fs), jnp.float32)
        self.c2_w = w((nl, 3, fs, H))
        self.c2_b = jnp.zeros((nl, 1, H), jnp.float32)
        self.lnf_g = jnp.ones((1, H), jnp.float32)
        self.lnf_b = jnp.zeros((1, H), jnp.float32)

        if emo_input == 'self_att':                 # Encoder(2*emb_dim, H, ...)
            self.pw_enc = w((emb_dim, H))           # proj weight split: enc half
            self.pw_emo = w((emb_dim, H))           #                    emotion half
            self.ln1_g, self.ln1_b = ln_stack()
            self.ln2_g, self.ln2_b = ln_stack()
            self.att_wq = w((nl, nh, H, dk))
            self.att_wk = w((nl, nh, H, dk))
            self.att_wv = w((nl, nh, H, dv))
            self.att_wo = w((nl, nh, dv, H))
        else:                                       # Decoder(emb_dim, H, ...)
            self.pw = w((emb_dim, H))
            self.ln1_g, self.ln1_b = ln_stack()
            self.ln2_g, self.ln2_b = ln_stack()
            self.ln3_g, self.ln3_b = ln_stack()
            self.self_wq = w((nl, nh, H, dk))
            self.self_wk = w((nl, nh, H, dk))
            self.self_wv = w((nl, nh, H, dv))
            self.self_wo = w((nl, nh, dv, H))
            self.cross_wq = w((nl, nh, H, dk))
            self.cross_wk = w((nl, nh, H, dk))
            self.cross_wv = w((nl, nh, H, dv))
            self.cross_wo = w((nl, nh, dv, H))

    def __call__(self, emotion, encoder_outputs, mask_src):
        B, L, E_in = (int(d) for d in encoder_outputs.shape)
        H, fs = self.hidden, self.filter
        Le = int(emotion.shape[1])
        Em = int(emotion.shape[2])
        assert L <= int(self.timing.shape[1])
        timing = self.timing[0, :L, :]                            # [L, H]

        # ---- batch blocking: fold sequences so row matmuls see M = bb*L -----
        bb = max(1, min(B, max(1, 128 // max(L, 1))))
        while bb > 1 and B % bb != 0:
            bb -= 1
        if bb < B and (bb * L) % 8 != 0:
            bb = B                      # full-extent block always satisfies tiling
        grid = (B // bb,)
        R = bb * L

        enc_flat = encoder_outputs.reshape(B * L, E_in).astype(jnp.float32)
        pad_f = mask_src.reshape(B, 1, L).astype(jnp.float32)     # 1.0 == PAD
        emo = emotion.astype(jnp.float32)

        if self.emo_input == 'self_att':
            assert Le == 1, 'torch expand in self_att requires emotion length 1'
            assert E_in == self.emb_dim
            kernel = functools.partial(_encoder_stack_kernel,
                                       num_layers=self.num_layers,
                                       num_heads=self.num_heads,
                                       bb=bb, seq_len=L)
            operands = [enc_flat, emo, pad_f, timing,
                        self.pw_enc, self.pw_emo,
                        self.ln1_g, self.ln1_b,
                        self.att_wq, self.att_wk, self.att_wv, self.att_wo,
                        self.ln2_g, self.ln2_b,
                        self.c1_w, self.c1_b, self.c2_w, self.c2_b,
                        self.lnf_g, self.lnf_b]
        else:
            assert E_in == self.emb_dim
            assert Em == H, 'cross-attention memory must have hidden_size features'
            kernel = functools.partial(_decoder_stack_kernel,
                                       num_layers=self.num_layers,
                                       num_heads=self.num_heads,
                                       bb=bb, seq_len=L, mem_len=Le)
            operands = [enc_flat, emo, pad_f, timing, self.pw,
                        self.ln1_g, self.ln1_b,
                        self.self_wq, self.self_wk, self.self_wv, self.self_wo,
                        self.ln2_g, self.ln2_b,
                        self.cross_wq, self.cross_wk, self.cross_wv, self.cross_wo,
                        self.ln3_g, self.ln3_b,
                        self.c1_w, self.c1_b, self.c2_w, self.c2_b,
                        self.lnf_g, self.lnf_b]

        in_specs = [pl.BlockSpec((R, E_in), lambda b: (b, 0)),        # rows block
                    pl.BlockSpec((bb, Le, Em), lambda b: (b, 0, 0)),  # emotion
                    pl.BlockSpec((bb, 1, L), lambda b: (b, 0, 0))]    # key padding
        in_specs += [_full_spec(a) for a in operands[3:]]             # weights (resident)
        out_spec = pl.BlockSpec((R, H), lambda b: (b, 0))

        # Explicit scoped-VMEM budget from the real footprint (weights are
        # double-buffered by default; cap keeps us safe on v7x's 64 MiB).
        weight_bytes = sum(_nbytes(a) for a in operands[3:])
        act_bytes = 4 * R * (E_in + 10 * H + 4 * max(fs, H))
        vmem_limit = int(min(64 * 2 ** 20,
                             max(32 * 2 ** 20, 2 * weight_bytes + act_bytes)))

        out = pl.pallas_call(
            kernel,
            out_shape=jax.ShapeDtypeStruct((B * L, H), jnp.float32),
            grid_spec=pltpu.PrefetchScalarGridSpec(
                num_scalar_prefetch=0,
                grid=grid,
                in_specs=in_specs,
                out_specs=out_spec,
                scratch_shapes=[]),
            compiler_params=pltpu.CompilerParams(
                dimension_semantics=("parallel",),
                vmem_limit_bytes=vmem_limit),
        )(*operands)
        return out.reshape(B, L, H)


# ---------------------------------- main --------------------------------------

if __name__ == "__main__":
    B, L = 2, 8
    emb_dim = hidden = 32
    num_layers, num_heads = 2, 2
    total_key_depth = total_value_depth = 32
    filter_size = 64

    key = jax.random.PRNGKey(0)
    k1, k2 = jax.random.split(key)
    encoder_outputs = jax.random.normal(k1, (B, L, hidden), dtype=jnp.float32)
    emotion = jax.random.normal(k2, (B, 1, emb_dim), dtype=jnp.float32)
    lengths = jnp.array([L, L - 2])
    mask_src = (jnp.arange(L)[None, :] >= lengths[:, None])[:, None, :]  # [B,1,L] bool, True==PAD

    for mode in ('self_att', 'cross_att'):
        enc = EmotionInputEncoderPallas(
            emb_dim, hidden, num_layers, num_heads,
            total_key_depth, total_value_depth, filter_size,
            universal=False, emo_input=mode)
        y = enc(emotion, encoder_outputs, mask_src)
        y = jax.block_until_ready(y)
        assert y.shape == (B, L, hidden), y.shape
        assert bool(jnp.all(jnp.isfinite(y)))

    print("KERNEL_OK")
</pallas_src>

<mosaic_0001>
module attributes {stable_mosaic.version = 11 : i64} {
  func.func @_encoder_stack_kernel(%arg0: i32, %arg1: memref<16x32xf32, #tpu.memory_space<vmem>>, %arg2: memref<2x1x32xf32, #tpu.memory_space<vmem>>, %arg3: memref<2x1x8xf32, #tpu.memory_space<vmem>>, %arg4: memref<8x32xf32, #tpu.memory_space<vmem>>, %arg5: memref<32x32xbf16, #tpu.memory_space<vmem>>, %arg6: memref<32x32xbf16, #tpu.memory_space<vmem>>, %arg7: memref<2x1x32xf32, #tpu.memory_space<vmem>>, %arg8: memref<2x1x32xf32, #tpu.memory_space<vmem>>, %arg9: memref<2x2x32x16xbf16, #tpu.memory_space<vmem>>, %arg10: memref<2x2x32x16xbf16, #tpu.memory_space<vmem>>, %arg11: memref<2x2x32x16xbf16, #tpu.memory_space<vmem>>, %arg12: memref<2x2x16x32xbf16, #tpu.memory_space<vmem>>, %arg13: memref<2x1x32xf32, #tpu.memory_space<vmem>>, %arg14: memref<2x1x32xf32, #tpu.memory_space<vmem>>, %arg15: memref<2x3x32x64xbf16, #tpu.memory_space<vmem>>, %arg16: memref<2x1x64xf32, #tpu.memory_space<vmem>>, %arg17: memref<2x3x64x32xbf16, #tpu.memory_space<vmem>>, %arg18: memref<2x1x32xf32, #tpu.memory_space<vmem>>, %arg19: memref<1x32xf32, #tpu.memory_space<vmem>>, %arg20: memref<1x32xf32, #tpu.memory_space<vmem>>, %arg21: memref<16x32xf32, #tpu.memory_space<vmem>>) attributes {dimension_semantics = [#tpu.dimension_semantics<parallel>], iteration_bounds = array<i64: 1>, scalar_prefetch = 0 : i64, scratch_operands = 0 : i64, tpu.core_type = #tpu.core_type<tc>, window_params = [{transform_indices = @transform_0, window_bounds = array<i64: 16, 32>}, {transform_indices = @transform_1, window_bounds = array<i64: 2, 1, 32>}, {transform_indices = @transform_2, window_bounds = array<i64: 2, 1, 8>}, {pipeline_mode = #tpu.pipeline_mode<synchronous>, transform_indices = @transform_3, window_bounds = array<i64: 8, 32>}, {pipeline_mode = #tpu.pipeline_mode<synchronous>, transform_indices = @transform_4, window_bounds = array<i64: 32, 32>}, {pipeline_mode = #tpu.pipeline_mode<synchronous>, transform_indices = @transform_5, window_bounds = array<i64: 32, 32>}, {pipeline_mode = #tpu.pipeline_mode<synchronous>, transform_indices = @transform_6, window_bounds = array<i64: 2, 1, 32>}, {pipeline_mode = #tpu.pipeline_mode<synchronous>, transform_indices = @transform_7, window_bounds = array<i64: 2, 1, 32>}, {pipeline_mode = #tpu.pipeline_mode<synchronous>, transform_indices = @transform_8, window_bounds = array<i64: 2, 2, 32, 16>}, {pipeline_mode = #tpu.pipeline_mode<synchronous>, transform_indices = @transform_9, window_bounds = array<i64: 2, 2, 32, 16>}, {pipeline_mode = #tpu.pipeline_mode<synchronous>, transform_indices = @transform_10, window_bounds = array<i64: 2, 2, 32, 16>}, {pipeline_mode = #tpu.pipeline_mode<synchronous>, transform_indices = @transform_11, window_bounds = array<i64: 2, 2, 16, 32>}, {pipeline_mode = #tpu.pipeline_mode<synchronous>, transform_indices = @transform_12, window_bounds = array<i64: 2, 1, 32>}, {pipeline_mode = #tpu.pipeline_mode<synchronous>, transform_indices = @transform_13, window_bounds = array<i64: 2, 1, 32>}, {pipeline_mode = #tpu.pipeline_mode<synchronous>, transform_indices = @transform_14, window_bounds = array<i64: 2, 3, 32, 64>}, {pipeline_mode = #tpu.pipeline_mode<synchronous>, transform_indices = @transform_15, window_bounds = array<i64: 2, 1, 64>}, {pipeline_mode = #tpu.pipeline_mode<synchronous>, transform_indices = @transform_16, window_bounds = array<i64: 2, 3, 64, 32>}, {pipeline_mode = #tpu.pipeline_mode<synchronous>, transform_indices = @transform_17, window_bounds = array<i64: 2, 1, 32>}, {pipeline_mode = #tpu.pipeline_mode<synchronous>, transform_indices = @transform_18, window_bounds = array<i64: 1, 32>}, {pipeline_mode = #tpu.pipeline_mode<synchronous>, transform_indices = @transform_19, window_bounds = array<i64: 1, 32>}, {transform_indices = @transform_20, window_bounds = array<i64: 16, 32>}]} {
    %0 = tpu.iota {dimensions = array<i32: 0>} : vector<16x1xi32>
    %c8_i32 = arith.constant 8 : i32
    %c0_i32 = arith.constant 0 : i32
    %1 = arith.cmpi eq, %c8_i32, %c0_i32 : i32
    %c1_i32 = arith.constant 1 : i32
    %2 = arith.select %1, %c1_i32, %c8_i32 : i32
    %3 = vector.broadcast %2 : i32 to vector<16x1xi32>
    %4 = arith.remsi %0, %3 : vector<16x1xi32>
    %c0_i32_0 = arith.constant 0 : i32
    %5 = vector.broadcast %c0_i32_0 : i32 to vector<16x1xi32>
    %6 = arith.cmpi ne, %4, %5 : vector<16x1xi32>
    %c0_i32_1 = arith.constant 0 : i32
    %7 = vector.broadcast %c0_i32_1 : i32 to vector<16x1xi32>
    %8 = arith.cmpi slt, %4, %7 : vector<16x1xi32>
    %c0_i32_2 = arith.constant 0 : i32
    %9 = arith.cmpi slt, %2, %c0_i32_2 : i32
    %10 = vector.broadcast %9 : i1 to vector<16x1xi1>
    %11 = vector.broadcast %10 : vector<16x1xi1> to vector<16x1xi1>
    %12 = arith.xori %8, %11 : vector<16x1xi1>
    %13 = arith.andi %12, %6 : vector<16x1xi1>
    %14 = vector.broadcast %2 : i32 to vector<16x1xi32>
    %15 = arith.addi %4, %14 : vector<16x1xi32>
    %16 = arith.select %13, %15, %4 : vector<16x1xi1>, vector<16x1xi32>
    %c1_i32_3 = arith.constant 1 : i32
    %17 = vector.broadcast %c1_i32_3 : i32 to vector<16x1xi32>
    %18 = arith.cmpi sge, %16, %17 : vector<16x1xi32>
    %19 = arith.extui %18 : vector<16x1xi1> to vector<16x1xi32>
    %20 = arith.sitofp %19 : vector<16x1xi32> to vector<16x1xf32>
    %c6_i32 = arith.constant 6 : i32
    %21 = vector.broadcast %c6_i32 : i32 to vector<16x1xi32>
    %22 = arith.cmpi sle, %16, %21 : vector<16x1xi32>
    %23 = arith.extui %22 : vector<16x1xi1> to vector<16x1xi32>
    %24 = arith.sitofp %23 : vector<16x1xi32> to vector<16x1xf32>
    %c0 = arith.constant 0 : index
    %c0_4 = arith.constant 0 : index
    %25 = vector.load %arg1[%c0, %c0_4] : memref<16x32xf32, #tpu.memory_space<vmem>>, vector<16x32xf32>
    %c0_5 = arith.constant 0 : index
    %c0_6 = arith.constant 0 : index
    %26 = vector.load %arg5[%c0_5, %c0_6] : memref<32x32xbf16, #tpu.memory_space<vmem>>, vector<32x32xbf16>
    %27 = arith.truncf %25 : vector<16x32xf32> to vector<16x32xbf16>
    %cst = arith.constant dense<0.000000e+00> : vector<16x32xf32>
    %28 = tpu.matmul %27, %26, %cst {dimension_numbers = #tpu.dot_dimension_numbers<[1], [0], [0], [1], [0, 0, 1, 1], [], []>} : vector<16x32xbf16>, vector<32x32xbf16>, vector<16x32xf32> -> vector<16x32xf32>
    %c0_7 = arith.constant 0 : index
    %c0_8 = arith.constant 0 : index
    %c0_9 = arith.constant 0 : index
    %29 = vector.load %arg2[%c0_7, %c0_8, %c0_9] : memref<2x1x32xf32, #tpu.memory_space<vmem>>, vector<2x1x32xf32>
    %30 = vector.shape_cast %29 : vector<2x1x32xf32> to vector<2x32xf32>
    %c0_10 = arith.constant 0 : index
    %c0_11 = arith.constant 0 : index
    %31 = vector.load %arg6[%c0_10, %c0_11] : memref<32x32xbf16, #tpu.memory_space<vmem>>, vector<32x32xbf16>
    %32 = arith.truncf %30 : vector<2x32xf32> to vector<2x32xbf16>
    %cst_12 = arith.constant dense<0.000000e+00> : vector<2x32xf32>
    %33 = tpu.matmul %32, %31, %cst_12 {dimension_numbers = #tpu.dot_dimension_numbers<[1], [0], [0], [1], [0, 0, 1, 1], [], []>} : vector<2x32xbf16>, vector<32x32xbf16>, vector<2x32xf32> -> vector<2x32xf32>
    %34 = vector.shape_cast %28 : vector<16x32xf32> to vector<2x8x32xf32>
    %35 = vector.shape_cast %33 : vector<2x32xf32> to vector<2x1x32xf32>
    %36 = vector.broadcast %35 : vector<2x1x32xf32> to vector<2x8x32xf32>
    %37 = arith.addf %34, %36 : vector<2x8x32xf32>
    %c0_13 = arith.constant 0 : index
    %c0_14 = arith.constant 0 : index
    %38 = vector.load %arg4[%c0_13, %c0_14] : memref<8x32xf32, #tpu.memory_space<vmem>>, vector<8x32xf32>
    %39 = vector.shape_cast %38 : vector<8x32xf32> to vector<1x8x32xf32>
    %40 = vector.broadcast %39 : vector<1x8x32xf32> to vector<2x8x32xf32>
    %41 = arith.addf %37, %40 : vector<2x8x32xf32>
    %42 = vector.shape_cast %41 : vector<2x8x32xf32> to vector<16x32xf32>
    %c0_15 = arith.constant 0 : index
    %c0_16 = arith.constant 0 : index
    %c0_17 = arith.constant 0 : index
    %43 = vector.load %arg3[%c0_15, %c0_16, %c0_17] : memref<2x1x8xf32, #tpu.memory_space<vmem>>, vector<2x1x8xf32>
    %cst_18 = arith.constant -9.99999984E+17 : f32
    %44 = vector.broadcast %cst_18 : f32 to vector<2x1x8xf32>
    %45 = arith.mulf %43, %44 : vector<2x1x8xf32>
    %c0_19 = arith.constant 0 : index
    %c0_20 = arith.constant 0 : index
    %c0_21 = arith.constant 0 : index
    %46 = vector.load %arg7[%c0_19, %c0_20, %c0_21] : memref<2x1x32xf32, #tpu.memory_space<vmem>>, vector<1x1x32xf32>
    %47 = vector.shape_cast %46 : vector<1x1x32xf32> to vector<1x32xf32>
    %c0_22 = arith.constant 0 : index
    %c0_23 = arith.constant 0 : index
    %c0_24 = arith.constant 0 : index
    %48 = vector.load %arg8[%c0_22, %c0_23, %c0_24] : memref<2x1x32xf32, #tpu.memory_space<vmem>>, vector<1x1x32xf32>
    %49 = vector.shape_cast %48 : vector<1x1x32xf32> to vector<1x32xf32>
    %cst_25 = arith.constant dense<0.000000e+00> : vector<16xf32>
    %50 = vector.multi_reduction <add>, %42, %cst_25 [1] : vector<16x32xf32> to vector<16xf32>
    %51 = vector.shape_cast %50 : vector<16xf32> to vector<16x1xf32>
    %cst_26 = arith.constant 3.200000e+01 : f32
    %52 = vector.broadcast %cst_26 : f32 to vector<16x1xf32>
    %53 = arith.divf %51, %52 : vector<16x1xf32>
    %54 = vector.broadcast %53 : vector<16x1xf32> to vector<16x32xf32>
    %55 = arith.subf %42, %54 : vector<16x32xf32>
    %56 = arith.mulf %55, %55 : vector<16x32xf32>
    %cst_27 = arith.constant dense<0.000000e+00> : vector<16xf32>
    %57 = vector.multi_reduction <add>, %56, %cst_27 [1] : vector<16x32xf32> to vector<16xf32>
    %58 = vector.shape_cast %57 : vector<16xf32> to vector<16x1xf32>
    %cst_28 = arith.constant 0.0322580636 : f32
    %59 = vector.broadcast %cst_28 : f32 to vector<16x1xf32>
    %60 = arith.mulf %58, %59 : vector<16x1xf32>
    %61 = math.sqrt %60 : vector<16x1xf32>
    %cst_29 = arith.constant 9.99999997E-7 : f32
    %62 = vector.broadcast %cst_29 : f32 to vector<16x1xf32>
    %63 = arith.addf %61, %62 : vector<16x1xf32>
    %64 = tpu.reciprocal %63 {approx = true} : vector<16x1xf32> -> vector<16x1xf32>
    %65 = vector.broadcast %64 : vector<16x1xf32> to vector<16x32xf32>
    %66 = arith.mulf %55, %65 : vector<16x32xf32>
    %67 = vector.broadcast %47 : vector<1x32xf32> to vector<16x32xf32>
    %68 = arith.mulf %67, %66 : vector<16x32xf32>
    %69 = vector.broadcast %49 : vector<1x32xf32> to vector<16x32xf32>
    %70 = arith.addf %68, %69 : vector<16x32xf32>
    %c0_30 = arith.constant 0 : index
    %c0_31 = arith.constant 0 : index
    %c0_32 = arith.constant 0 : index
    %c0_33 = arith.constant 0 : index
    %71 = vector.load %arg9[%c0_30, %c0_31, %c0_32, %c0_33] : memref<2x2x32x16xbf16, #tpu.memory_space<vmem>>, vector<1x2x32x16xbf16>
    %72 = vector.shape_cast %71 : vector<1x2x32x16xbf16> to vector<2x32x16xbf16>
    %c0_34 = arith.constant 0 : index
    %c0_35 = arith.constant 0 : index
    %c0_36 = arith.constant 0 : index
    %c0_37 = arith.constant 0 : index
    %73 = vector.load %arg10[%c0_34, %c0_35, %c0_36, %c0_37] : memref<2x2x32x16xbf16, #tpu.memory_space<vmem>>, vector<1x2x32x16xbf16>
    %74 = vector.shape_cast %73 : vector<1x2x32x16xbf16> to vector<2x32x16xbf16>
    %c0_38 = arith.constant 0 : index
    %c0_39 = arith.constant 0 : index
    %c0_40 = arith.constant 0 : index
    %c0_41 = arith.constant 0 : index
    %75 = vector.load %arg11[%c0_38, %c0_39, %c0_40, %c0_41] : memref<2x2x32x16xbf16, #tpu.memory_space<vmem>>, vector<1x2x32x16xbf16>
    %76 = vector.shape_cast %75 : vector<1x2x32x16xbf16> to vector<2x32x16xbf16>
    %c0_42 = arith.constant 0 : index
    %c0_43 = arith.constant 0 : index
    %c0_44 = arith.constant 0 : index
    %c0_45 = arith.constant 0 : index
    %77 = vector.load %arg12[%c0_42, %c0_43, %c0_44, %c0_45] : memref<2x2x16x32xbf16, #tpu.memory_space<vmem>>, vector<1x2x16x32xbf16>
    %78 = vector.shape_cast %77 : vector<1x2x16x32xbf16> to vector<2x16x32xbf16>
    %79 = arith.truncf %70 : vector<16x32xf32> to vector<16x32xbf16>
    %80 = arith.truncf %70 : vector<16x32xf32> to vector<16x32xbf16>
    %81 = vector.extract_strided_slice %72 {offsets = [0, 0, 0], sizes = [1, 32, 16], strides = [1, 1, 1]} : vector<2x32x16xbf16> to vector<1x32x16xbf16>
    %82 = vector.shape_cast %81 : vector<1x32x16xbf16> to vector<32x16xbf16>
    %cst_46 = arith.constant dense<0.000000e+00> : vector<16x16xf32>
    %83 = tpu.matmul %79, %82, %cst_46 {dimension_numbers = #tpu.dot_dimension_numbers<[1], [0], [0], [1], [0, 0, 1, 1], [], []>} : vector<16x32xbf16>, vector<32x16xbf16>, vector<16x16xf32> -> vector<16x16xf32>
    %84 = vector.extract_strided_slice %72 {offsets = [1, 0, 0], sizes = [1, 32, 16], strides = [1, 1, 1]} : vector<2x32x16xbf16> to vector<1x32x16xbf16>
    %85 = vector.shape_cast %84 : vector<1x32x16xbf16> to vector<32x16xbf16>
    %cst_47 = arith.constant dense<0.000000e+00> : vector<16x16xf32>
    %86 = tpu.matmul %79, %85, %cst_47 {dimension_numbers = #tpu.dot_dimension_numbers<[1], [0], [0], [1], [0, 0, 1, 1], [], []>} : vector<16x32xbf16>, vector<32x16xbf16>, vector<16x16xf32> -> vector<16x16xf32>
    %87 = vector.shape_cast %83 : vector<16x16xf32> to vector<1x16x16xf32>
    %88 = vector.shape_cast %86 : vector<16x16xf32> to vector<1x16x16xf32>
    %89 = tpu.concatenate %87, %88 in 0 : vector<1x16x16xf32>, vector<1x16x16xf32> -> vector<2x16x16xf32>
    %cst_48 = arith.constant 2.500000e-01 : f32
    %90 = vector.broadcast %cst_48 : f32 to vector<2x16x16xf32>
    %91 = arith.mulf %89, %90 : vector<2x16x16xf32>
    %92 = vector.extract_strided_slice %74 {offsets = [0, 0, 0], sizes = [1, 32, 16], strides = [1, 1, 1]} : vector<2x32x16xbf16> to vector<1x32x16xbf16>
    %93 = vector.shape_cast %92 : vector<1x32x16xbf16> to vector<32x16xbf16>
    %cst_49 = arith.constant dense<0.000000e+00> : vector<16x16xf32>
    %94 = tpu.matmul %80, %93, %cst_49 {dimension_numbers = #tpu.dot_dimension_numbers<[1], [0], [0], [1], [0, 0, 1, 1], [], []>} : vector<16x32xbf16>, vector<32x16xbf16>, vector<16x16xf32> -> vector<16x16xf32>
    %95 = vector.extract_strided_slice %74 {offsets = [1, 0, 0], sizes = [1, 32, 16], strides = [1, 1, 1]} : vector<2x32x16xbf16> to vector<1x32x16xbf16>
    %96 = vector.shape_cast %95 : vector<1x32x16xbf16> to vector<32x16xbf16>
    %cst_50 = arith.constant dense<0.000000e+00> : vector<16x16xf32>
    %97 = tpu.matmul %80, %96, %cst_50 {dimension_numbers = #tpu.dot_dimension_numbers<[1], [0], [0], [1], [0, 0, 1, 1], [], []>} : vector<16x32xbf16>, vector<32x16xbf16>, vector<16x16xf32> -> vector<16x16xf32>
    %98 = vector.shape_cast %94 : vector<16x16xf32> to vector<1x16x16xf32>
    %99 = vector.shape_cast %97 : vector<16x16xf32> to vector<1x16x16xf32>
    %100 = tpu.concatenate %98, %99 in 0 : vector<1x16x16xf32>, vector<1x16x16xf32> -> vector<2x16x16xf32>
    %101 = vector.extract_strided_slice %76 {offsets = [0, 0, 0], sizes = [1, 32, 16], strides = [1, 1, 1]} : vector<2x32x16xbf16> to vector<1x32x16xbf16>
    %102 = vector.shape_cast %101 : vector<1x32x16xbf16> to vector<32x16xbf16>
    %cst_51 = arith.constant dense<0.000000e+00> : vector<16x16xf32>
    %103 = tpu.matmul %80, %102, %cst_51 {dimension_numbers = #tpu.dot_dimension_numbers<[1], [0], [0], [1], [0, 0, 1, 1], [], []>} : vector<16x32xbf16>, vector<32x16xbf16>, vector<16x16xf32> -> vector<16x16xf32>
    %104 = vector.extract_strided_slice %76 {offsets = [1, 0, 0], sizes = [1, 32, 16], strides = [1, 1, 1]} : vector<2x32x16xbf16> to vector<1x32x16xbf16>
    %105 = vector.shape_cast %104 : vector<1x32x16xbf16> to vector<32x16xbf16>
    %cst_52 = arith.constant dense<0.000000e+00> : vector<16x16xf32>
    %106 = tpu.matmul %80, %105, %cst_52 {dimension_numbers = #tpu.dot_dimension_numbers<[1], [0], [0], [1], [0, 0, 1, 1], [], []>} : vector<16x32xbf16>, vector<32x16xbf16>, vector<16x16xf32> -> vector<16x16xf32>
    %107 = vector.shape_cast %103 : vector<16x16xf32> to vector<1x16x16xf32>
    %108 = vector.shape_cast %106 : vector<16x16xf32> to vector<1x16x16xf32>
    %109 = tpu.concatenate %107, %108 in 0 : vector<1x16x16xf32>, vector<1x16x16xf32> -> vector<2x16x16xf32>
    %110 = vector.extract_strided_slice %91 {offsets = [0, 0, 0], sizes = [2, 8, 16], strides = [1, 1, 1]} : vector<2x16x16xf32> to vector<2x8x16xf32>
    %111 = vector.extract_strided_slice %100 {offsets = [0, 0, 0], sizes = [2, 8, 16], strides = [1, 1, 1]} : vector<2x16x16xf32> to vector<2x8x16xf32>
    %112 = vector.extract_strided_slice %109 {offsets = [0, 0, 0], sizes = [2, 8, 16], strides = [1, 1, 1]} : vector<2x16x16xf32> to vector<2x8x16xf32>
    "tpu.trace_start"() <{level = 10 : i32, message = "hqd,hkd->hqk"}> : () -> ()
    %cst_53 = arith.constant dense<0.000000e+00> : vector<2x8x8xf32>
    %113 = tpu.matmul %110, %111, %cst_53 {dimension_numbers = #tpu.dot_dimension_numbers<[2], [2], [1], [1], [0, 0, 0, 1, 1, 1], [0], [0]>} : vector<2x8x16xf32>, vector<2x8x16xf32>, vector<2x8x8xf32> -> vector<2x8x8xf32>
    "tpu.trace_stop"() : () -> ()
    %114 = vector.extract_strided_slice %45 {offsets = [0, 0, 0], sizes = [1, 1, 8], strides = [1, 1, 1]} : vector<2x1x8xf32> to vector<1x1x8xf32>
    %115 = vector.shape_cast %114 : vector<1x1x8xf32> to vector<1x8xf32>
    %116 = vector.shape_cast %115 : vector<1x8xf32> to vector<1x1x8xf32>
    %117 = vector.broadcast %116 : vector<1x1x8xf32> to vector<2x8x8xf32>
    %118 = arith.addf %113, %117 : vector<2x8x8xf32>
    %cst_54 = arith.constant dense<0xFF800000> : vector<2x8xf32>
    %119 = vector.multi_reduction <maximumf>, %118, %cst_54 [2] : vector<2x8x8xf32> to vector<2x8xf32>
    %120 = vector.shape_cast %119 : vector<2x8xf32> to vector<2x8x1xf32>
    %121 = vector.broadcast %120 : vector<2x8x1xf32> to vector<2x8x8xf32>
    %122 = arith.subf %118, %121 : vector<2x8x8xf32>
    %123 = math.exp %122 : vector<2x8x8xf32>
    %cst_55 = arith.constant dense<0.000000e+00> : vector<2x8xf32>
    %124 = vector.multi_reduction <add>, %123, %cst_55 [2] : vector<2x8x8xf32> to vector<2x8xf32>
    %125 = vector.shape_cast %124 : vector<2x8xf32> to vector<2x8x1xf32>
    %126 = tpu.reciprocal %125 {approx = true} : vector<2x8x1xf32> -> vector<2x8x1xf32>
    %127 = vector.broadcast %126 : vector<2x8x1xf32> to vector<2x8x8xf32>
    %128 = arith.mulf %123, %127 : vector<2x8x8xf32>
    "tpu.trace_start"() <{level = 10 : i32, message = "hqk,hkd->hqd"}> : () -> ()
    %cst_56 = arith.constant dense<0.000000e+00> : vector<2x8x16xf32>
    %129 = tpu.matmul %128, %112, %cst_56 {dimension_numbers = #tpu.dot_dimension_numbers<[2], [1], [1], [2], [0, 0, 0, 1, 1, 2], [0], [0]>} : vector<2x8x8xf32>, vector<2x8x16xf32>, vector<2x8x16xf32> -> vector<2x8x16xf32>
    "tpu.trace_stop"() : () -> ()
    %130 = vector.extract_strided_slice %91 {offsets = [0, 8, 0], sizes = [2, 8, 16], strides = [1, 1, 1]} : vector<2x16x16xf32> to vector<2x8x16xf32>
    %131 = vector.extract_strided_slice %100 {offsets = [0, 8, 0], sizes = [2, 8, 16], strides = [1, 1, 1]} : vector<2x16x16xf32> to vector<2x8x16xf32>
    %132 = vector.extract_strided_slice %109 {offsets = [0, 8, 0], sizes = [2, 8, 16], strides = [1, 1, 1]} : vector<2x16x16xf32> to vector<2x8x16xf32>
    "tpu.trace_start"() <{level = 10 : i32, message = "hqd,hkd->hqk"}> : () -> ()
    %cst_57 = arith.constant dense<0.000000e+00> : vector<2x8x8xf32>
    %133 = tpu.matmul %130, %131, %cst_57 {dimension_numbers = #tpu.dot_dimension_numbers<[2], [2], [1], [1], [0, 0, 0, 1, 1, 1], [0], [0]>} : vector<2x8x16xf32>, vector<2x8x16xf32>, vector<2x8x8xf32> -> vector<2x8x8xf32>
    "tpu.trace_stop"() : () -> ()
    %134 = vector.extract_strided_slice %45 {offsets = [1, 0, 0], sizes = [1, 1, 8], strides = [1, 1, 1]} : vector<2x1x8xf32> to vector<1x1x8xf32>
    %135 = vector.shape_cast %134 : vector<1x1x8xf32> to vector<1x8xf32>
    %136 = vector.shape_cast %135 : vector<1x8xf32> to vector<1x1x8xf32>
    %137 = vector.broadcast %136 : vector<1x1x8xf32> to vector<2x8x8xf32>
    %138 = arith.addf %133, %137 : vector<2x8x8xf32>
    %cst_58 = arith.constant dense<0xFF800000> : vector<2x8xf32>
    %139 = vector.multi_reduction <maximumf>, %138, %cst_58 [2] : vector<2x8x8xf32> to vector<2x8xf32>
    %140 = vector.shape_cast %139 : vector<2x8xf32> to vector<2x8x1xf32>
    %141 = vector.broadcast %140 : vector<2x8x1xf32> to vector<2x8x8xf32>
    %142 = arith.subf %138, %141 : vector<2x8x8xf32>
    %143 = math.exp %142 : vector<2x8x8xf32>
    %cst_59 = arith.constant dense<0.000000e+00> : vector<2x8xf32>
    %144 = vector.multi_reduction <add>, %143, %cst_59 [2] : vector<2x8x8xf32> to vector<2x8xf32>
    %145 = vector.shape_cast %144 : vector<2x8xf32> to vector<2x8x1xf32>
    %146 = tpu.reciprocal %145 {approx = true} : vector<2x8x1xf32> -> vector<2x8x1xf32>
    %147 = vector.broadcast %146 : vector<2x8x1xf32> to vector<2x8x8xf32>
    %148 = arith.mulf %143, %147 : vector<2x8x8xf32>
    "tpu.trace_start"() <{level = 10 : i32, message = "hqk,hkd->hqd"}> : () -> ()
    %cst_60 = arith.constant dense<0.000000e+00> : vector<2x8x16xf32>
    %149 = tpu.matmul %148, %132, %cst_60 {dimension_numbers = #tpu.dot_dimension_numbers<[2], [1], [1], [2], [0, 0, 0, 1, 1, 2], [0], [0]>} : vector<2x8x8xf32>, vector<2x8x16xf32>, vector<2x8x16xf32> -> vector<2x8x16xf32>
    "tpu.trace_stop"() : () -> ()
    %150 = tpu.concatenate %129, %149 in 1 : vector<2x8x16xf32>, vector<2x8x16xf32> -> vector<2x16x16xf32>
    %151 = arith.truncf %150 : vector<2x16x16xf32> to vector<2x16x16xbf16>
    "tpu.trace_start"() <{level = 10 : i32, message = "hqd,hde->hqe"}> : () -> ()
    %cst_61 = arith.constant dense<0.000000e+00> : vector<2x16x32xf32>
    %152 = tpu.matmul %151, %78, %cst_61 {dimension_numbers = #tpu.dot_dimension_numbers<[2], [1], [1], [2], [0, 0, 0, 1, 1, 2], [0], [0]>} : vector<2x16x16xbf16>, vector<2x16x32xbf16>, vector<2x16x32xf32> -> vector<2x16x32xf32>
    "tpu.trace_stop"() : () -> ()
    %cst_62 = arith.constant dense<0.000000e+00> : vector<16x32xf32>
    %153 = vector.multi_reduction <add>, %152, %cst_62 [0] : vector<2x16x32xf32> to vector<16x32xf32>
    %154 = arith.addf %42, %153 : vector<16x32xf32>
    %c0_63 = arith.constant 0 : index
    %c0_64 = arith.constant 0 : index
    %c0_65 = arith.constant 0 : index
    %155 = vector.load %arg13[%c0_63, %c0_64, %c0_65] : memref<2x1x32xf32, #tpu.memory_space<vmem>>, vector<1x1x32xf32>
    %156 = vector.shape_cast %155 : vector<1x1x32xf32> to vector<1x32xf32>
    %c0_66 = arith.constant 0 : index
    %c0_67 = arith.constant 0 : index
    %c0_68 = arith.constant 0 : index
    %157 = vector.load %arg14[%c0_66, %c0_67, %c0_68] : memref<2x1x32xf32, #tpu.memory_space<vmem>>, vector<1x1x32xf32>
    %158 = vector.shape_cast %157 : vector<1x1x32xf32> to vector<1x32xf32>
    %cst_69 = arith.constant dense<0.000000e+00> : vector<16xf32>
    %159 = vector.multi_reduction <add>, %154, %cst_69 [1] : vector<16x32xf32> to vector<16xf32>
    %160 = vector.shape_cast %159 : vector<16xf32> to vector<16x1xf32>
    %cst_70 = arith.constant 3.200000e+01 : f32
    %161 = vector.broadcast %cst_70 : f32 to vector<16x1xf32>
    %162 = arith.divf %160, %161 : vector<16x1xf32>
    %163 = vector.broadcast %162 : vector<16x1xf32> to vector<16x32xf32>
    %164 = arith.subf %154, %163 : vector<16x32xf32>
    %165 = arith.mulf %164, %164 : vector<16x32xf32>
    %cst_71 = arith.constant dense<0.000000e+00> : vector<16xf32>
    %166 = vector.multi_reduction <add>, %165, %cst_71 [1] : vector<16x32xf32> to vector<16xf32>
    %167 = vector.shape_cast %166 : vector<16xf32> to vector<16x1xf32>
    %cst_72 = arith.constant 0.0322580636 : f32
    %168 = vector.broadcast %cst_72 : f32 to vector<16x1xf32>
    %169 = arith.mulf %167, %168 : vector<16x1xf32>
    %170 = math.sqrt %169 : vector<16x1xf32>
    %cst_73 = arith.constant 9.99999997E-7 : f32
    %171 = vector.broadcast %cst_73 : f32 to vector<16x1xf32>
    %172 = arith.addf %170, %171 : vector<16x1xf32>
    %173 = tpu.reciprocal %172 {approx = true} : vector<16x1xf32> -> vector<16x1xf32>
    %174 = vector.broadcast %173 : vector<16x1xf32> to vector<16x32xf32>
    %175 = arith.mulf %164, %174 : vector<16x32xf32>
    %176 = vector.broadcast %156 : vector<1x32xf32> to vector<16x32xf32>
    %177 = arith.mulf %176, %175 : vector<16x32xf32>
    %178 = vector.broadcast %158 : vector<1x32xf32> to vector<16x32xf32>
    %179 = arith.addf %177, %178 : vector<16x32xf32>
    %c0_74 = arith.constant 0 : index
    %c0_75 = arith.constant 0 : index
    %c0_76 = arith.constant 0 : index
    %c0_77 = arith.constant 0 : index
    %180 = vector.load %arg15[%c0_74, %c0_75, %c0_76, %c0_77] : memref<2x3x32x64xbf16, #tpu.memory_space<vmem>>, vector<1x3x32x64xbf16>
    %181 = vector.shape_cast %180 : vector<1x3x32x64xbf16> to vector<3x32x64xbf16>
    %c0_78 = arith.constant 0 : index
    %c0_79 = arith.constant 0 : index
    %c0_80 = arith.constant 0 : index
    %182 = vector.load %arg16[%c0_78, %c0_79, %c0_80] : memref<2x1x64xf32, #tpu.memory_space<vmem>>, vector<1x1x64xf32>
    %183 = vector.shape_cast %182 : vector<1x1x64xf32> to vector<1x64xf32>
    %184 = vector.extract_strided_slice %179 {offsets = [15, 0], sizes = [1, 32], strides = [1, 1]} : vector<16x32xf32> to vector<1x32xf32>
    %185 = vector.extract_strided_slice %179 {offsets = [0, 0], sizes = [15, 32], strides = [1, 1]} : vector<16x32xf32> to vector<15x32xf32>
    %186 = tpu.concatenate %184, %185 in 0 : vector<1x32xf32>, vector<15x32xf32> -> vector<16x32xf32>
    %187 = vector.broadcast %20 : vector<16x1xf32> to vector<16x32xf32>
    %188 = arith.mulf %186, %187 : vector<16x32xf32>
    %189 = vector.extract_strided_slice %181 {offsets = [0, 0, 0], sizes = [1, 32, 64], strides = [1, 1, 1]} : vector<3x32x64xbf16> to vector<1x32x64xbf16>
    %190 = vector.shape_cast %189 : vector<1x32x64xbf16> to vector<32x64xbf16>
    %191 = arith.truncf %188 : vector<16x32xf32> to vector<16x32xbf16>
    %cst_81 = arith.constant dense<0.000000e+00> : vector<16x64xf32>
    %192 = tpu.matmul %191, %190, %cst_81 {dimension_numbers = #tpu.dot_dimension_numbers<[1], [0], [0], [1], [0, 0, 1, 1], [], []>} : vector<16x32xbf16>, vector<32x64xbf16>, vector<16x64xf32> -> vector<16x64xf32>
    %193 = vector.extract_strided_slice %181 {offsets = [1, 0, 0], sizes = [1, 32, 64], strides = [1, 1, 1]} : vector<3x32x64xbf16> to vector<1x32x64xbf16>
    %194 = vector.shape_cast %193 : vector<1x32x64xbf16> to vector<32x64xbf16>
    %195 = arith.truncf %179 : vector<16x32xf32> to vector<16x32xbf16>
    %cst_82 = arith.constant dense<0.000000e+00> : vector<16x64xf32>
    %196 = tpu.matmul %195, %194, %cst_82 {dimension_numbers = #tpu.dot_dimension_numbers<[1], [0], [0], [1], [0, 0, 1, 1], [], []>} : vector<16x32xbf16>, vector<32x64xbf16>, vector<16x64xf32> -> vector<16x64xf32>
    %197 = arith.addf %192, %196 : vector<16x64xf32>
    %198 = vector.extract_strided_slice %179 {offsets = [1, 0], sizes = [15, 32], strides = [1, 1]} : vector<16x32xf32> to vector<15x32xf32>
    %199 = vector.extract_strided_slice %179 {offsets = [0, 0], sizes = [1, 32], strides = [1, 1]} : vector<16x32xf32> to vector<1x32xf32>
    %200 = tpu.concatenate %198, %199 in 0 : vector<15x32xf32>, vector<1x32xf32> -> vector<16x32xf32>
    %201 = vector.broadcast %24 : vector<16x1xf32> to vector<16x32xf32>
    %202 = arith.mulf %200, %201 : vector<16x32xf32>
    %203 = vector.extract_strided_slice %181 {offsets = [2, 0, 0], sizes = [1, 32, 64], strides = [1, 1, 1]} : vector<3x32x64xbf16> to vector<1x32x64xbf16>
    %204 = vector.shape_cast %203 : vector<1x32x64xbf16> to vector<32x64xbf16>
    %205 = arith.truncf %202 : vector<16x32xf32> to vector<16x32xbf16>
    %cst_83 = arith.constant dense<0.000000e+00> : vector<16x64xf32>
    %206 = tpu.matmul %205, %204, %cst_83 {dimension_numbers = #tpu.dot_dimension_numbers<[1], [0], [0], [1], [0, 0, 1, 1], [], []>} : vector<16x32xbf16>, vector<32x64xbf16>, vector<16x64xf32> -> vector<16x64xf32>
    %207 = arith.addf %197, %206 : vector<16x64xf32>
    %208 = vector.broadcast %183 : vector<1x64xf32> to vector<16x64xf32>
    %209 = arith.addf %207, %208 : vector<16x64xf32>
    %cst_84 = arith.constant 0.000000e+00 : f32
    %210 = vector.broadcast %cst_84 : f32 to vector<16x64xf32>
    %211 = arith.maximumf %209, %210 : vector<16x64xf32>
    %c0_85 = arith.constant 0 : index
    %c0_86 = arith.constant 0 : index
    %c0_87 = arith.constant 0 : index
    %c0_88 = arith.constant 0 : index
    %212 = vector.load %arg17[%c0_85, %c0_86, %c0_87, %c0_88] : memref<2x3x64x32xbf16, #tpu.memory_space<vmem>>, vector<1x3x64x32xbf16>
    %213 = vector.shape_cast %212 : vector<1x3x64x32xbf16> to vector<3x64x32xbf16>
    %c0_89 = arith.constant 0 : index
    %c0_90 = arith.constant 0 : index
    %c0_91 = arith.constant 0 : index
    %214 = vector.load %arg18[%c0_89, %c0_90, %c0_91] : memref<2x1x32xf32, #tpu.memory_space<vmem>>, vector<1x1x32xf32>
    %215 = vector.shape_cast %214 : vector<1x1x32xf32> to vector<1x32xf32>
    %216 = vector.extract_strided_slice %211 {offsets = [15, 0], sizes = [1, 64], strides = [1, 1]} : vector<16x64xf32> to vector<1x64xf32>
    %217 = vector.extract_strided_slice %211 {offsets = [0, 0], sizes = [15, 64], strides = [1, 1]} : vector<16x64xf32> to vector<15x64xf32>
    %218 = tpu.concatenate %216, %217 in 0 : vector<1x64xf32>, vector<15x64xf32> -> vector<16x64xf32>
    %219 = vector.broadcast %20 : vector<16x1xf32> to vector<16x64xf32>
    %220 = arith.mulf %218, %219 : vector<16x64xf32>
    %221 = vector.extract_strided_slice %213 {offsets = [0, 0, 0], sizes = [1, 64, 32], strides = [1, 1, 1]} : vector<3x64x32xbf16> to vector<1x64x32xbf16>
    %222 = vector.shape_cast %221 : vector<1x64x32xbf16> to vector<64x32xbf16>
    %223 = arith.truncf %220 : vector<16x64xf32> to vector<16x64xbf16>
    %cst_92 = arith.constant dense<0.000000e+00> : vector<16x32xf32>
    %224 = tpu.matmul %223, %222, %cst_92 {dimension_numbers = #tpu.dot_dimension_numbers<[1], [0], [0], [1], [0, 0, 1, 1], [], []>} : vector<16x64xbf16>, vector<64x32xbf16>, vector<16x32xf32> -> vector<16x32xf32>
    %225 = vector.extract_strided_slice %213 {offsets = [1, 0, 0], sizes = [1, 64, 32], strides = [1, 1, 1]} : vector<3x64x32xbf16> to vector<1x64x32xbf16>
    %226 = vector.shape_cast %225 : vector<1x64x32xbf16> to vector<64x32xbf16>
    %227 = arith.truncf %211 : vector<16x64xf32> to vector<16x64xbf16>
    %cst_93 = arith.constant dense<0.000000e+00> : vector<16x32xf32>
    %228 = tpu.matmul %227, %226, %cst_93 {dimension_numbers = #tpu.dot_dimension_numbers<[1], [0], [0], [1], [0, 0, 1, 1], [], []>} : vector<16x64xbf16>, vector<64x32xbf16>, vector<16x32xf32> -> vector<16x32xf32>
    %229 = arith.addf %224, %228 : vector<16x32xf32>
    %230 = vector.extract_strided_slice %211 {offsets = [1, 0], sizes = [15, 64], strides = [1, 1]} : vector<16x64xf32> to vector<15x64xf32>
    %231 = vector.extract_strided_slice %211 {offsets = [0, 0], sizes = [1, 64], strides = [1, 1]} : vector<16x64xf32> to vector<1x64xf32>
    %232 = tpu.concatenate %230, %231 in 0 : vector<15x64xf32>, vector<1x64xf32> -> vector<16x64xf32>
    %233 = vector.broadcast %24 : vector<16x1xf32> to vector<16x64xf32>
    %234 = arith.mulf %232, %233 : vector<16x64xf32>
    %235 = vector.extract_strided_slice %213 {offsets = [2, 0, 0], sizes = [1, 64, 32], strides = [1, 1, 1]} : vector<3x64x32xbf16> to vector<1x64x32xbf16>
    %236 = vector.shape_cast %235 : vector<1x64x32xbf16> to vector<64x32xbf16>
    %237 = arith.truncf %234 : vector<16x64xf32> to vector<16x64xbf16>
    %cst_94 = arith.constant dense<0.000000e+00> : vector<16x32xf32>
    %238 = tpu.matmul %237, %236, %cst_94 {dimension_numbers = #tpu.dot_dimension_numbers<[1], [0], [0], [1], [0, 0, 1, 1], [], []>} : vector<16x64xbf16>, vector<64x32xbf16>, vector<16x32xf32> -> vector<16x32xf32>
    %239 = arith.addf %229, %238 : vector<16x32xf32>
    %240 = vector.broadcast %215 : vector<1x32xf32> to vector<16x32xf32>
    %241 = arith.addf %239, %240 : vector<16x32xf32>
    %242 = arith.addf %154, %241 : vector<16x32xf32>
    %c1 = arith.constant 1 : index
    %c0_95 = arith.constant 0 : index
    %c0_96 = arith.constant 0 : index
    %243 = vector.load %arg7[%c1, %c0_95, %c0_96] : memref<2x1x32xf32, #tpu.memory_space<vmem>>, vector<1x1x32xf32>
    %244 = vector.shape_cast %243 : vector<1x1x32xf32> to vector<1x32xf32>
    %c1_97 = arith.constant 1 : index
    %c0_98 = arith.constant 0 : index
    %c0_99 = arith.constant 0 : index
    %245 = vector.load %arg8[%c1_97, %c0_98, %c0_99] : memref<2x1x32xf32, #tpu.memory_space<vmem>>, vector<1x1x32xf32>
    %246 = vector.shape_cast %245 : vector<1x1x32xf32> to vector<1x32xf32>
    %cst_100 = arith.constant dense<0.000000e+00> : vector<16xf32>
    %247 = vector.multi_reduction <add>, %242, %cst_100 [1] : vector<16x32xf32> to vector<16xf32>
    %248 = vector.shape_cast %247 : vector<16xf32> to vector<16x1xf32>
    %cst_101 = arith.constant 3.200000e+01 : f32
    %249 = vector.broadcast %cst_101 : f32 to vector<16x1xf32>
    %250 = arith.divf %248, %249 : vector<16x1xf32>
    %251 = vector.broadcast %250 : vector<16x1xf32> to vector<16x32xf32>
    %252 = arith.subf %242, %251 : vector<16x32xf32>
    %253 = arith.mulf %252, %252 : vector<16x32xf32>
    %cst_102 = arith.constant dense<0.000000e+00> : vector<16xf32>
    %254 = vector.multi_reduction <add>, %253, %cst_102 [1] : vector<16x32xf32> to vector<16xf32>
    %255 = vector.shape_cast %254 : vector<16xf32> to vector<16x1xf32>
    %cst_103 = arith.constant 0.0322580636 : f32
    %256 = vector.broadcast %cst_103 : f32 to vector<16x1xf32>
    %257 = arith.mulf %255, %256 : vector<16x1xf32>
    %258 = math.sqrt %257 : vector<16x1xf32>
    %cst_104 = arith.constant 9.99999997E-7 : f32
    %259 = vector.broadcast %cst_104 : f32 to vector<16x1xf32>
    %260 = arith.addf %258, %259 : vector<16x1xf32>
    %261 = tpu.reciprocal %260 {approx = true} : vector<16x1xf32> -> vector<16x1xf32>
    %262 = vector.broadcast %261 : vector<16x1xf32> to vector<16x32xf32>
    %263 = arith.mulf %252, %262 : vector<16x32xf32>
    %264 = vector.broadcast %244 : vector<1x32xf32> to vector<16x32xf32>
    %265 = arith.mulf %264, %263 : vector<16x32xf32>
    %266 = vector.broadcast %246 : vector<1x32xf32> to vector<16x32xf32>
    %267 = arith.addf %265, %266 : vector<16x32xf32>
    %c1_105 = arith.constant 1 : index
    %c0_106 = arith.constant 0 : index
    %c0_107 = arith.constant 0 : index
    %c0_108 = arith.constant 0 : index
    %268 = vector.load %arg9[%c1_105, %c0_106, %c0_107, %c0_108] : memref<2x2x32x16xbf16, #tpu.memory_space<vmem>>, vector<1x2x32x16xbf16>
    %269 = vector.shape_cast %268 : vector<1x2x32x16xbf16> to vector<2x32x16xbf16>
    %c1_109 = arith.constant 1 : index
    %c0_110 = arith.constant 0 : index
    %c0_111 = arith.constant 0 : index
    %c0_112 = arith.constant 0 : index
    %270 = vector.load %arg10[%c1_109, %c0_110, %c0_111, %c0_112] : memref<2x2x32x16xbf16, #tpu.memory_space<vmem>>, vector<1x2x32x16xbf16>
    %271 = vector.shape_cast %270 : vector<1x2x32x16xbf16> to vector<2x32x16xbf16>
    %c1_113 = arith.constant 1 : index
    %c0_114 = arith.constant 0 : index
    %c0_115 = arith.constant 0 : index
    %c0_116 = arith.constant 0 : index
    %272 = vector.load %arg11[%c1_113, %c0_114, %c0_115, %c0_116] : memref<2x2x32x16xbf16, #tpu.memory_space<vmem>>, vector<1x2x32x16xbf16>
    %273 = vector.shape_cast %272 : vector<1x2x32x16xbf16> to vector<2x32x16xbf16>
    %c1_117 = arith.constant 1 : index
    %c0_118 = arith.constant 0 : index
    %c0_119 = arith.constant 0 : index
    %c0_120 = arith.constant 0 : index
    %274 = vector.load %arg12[%c1_117, %c0_118, %c0_119, %c0_120] : memref<2x2x16x32xbf16, #tpu.memory_space<vmem>>, vector<1x2x16x32xbf16>
    %275 = vector.shape_cast %274 : vector<1x2x16x32xbf16> to vector<2x16x32xbf16>
    %276 = arith.truncf %267 : vector<16x32xf32> to vector<16x32xbf16>
    %277 = arith.truncf %267 : vector<16x32xf32> to vector<16x32xbf16>
    %278 = vector.extract_strided_slice %269 {offsets = [0, 0, 0], sizes = [1, 32, 16], strides = [1, 1, 1]} : vector<2x32x16xbf16> to vector<1x32x16xbf16>
    %279 = vector.shape_cast %278 : vector<1x32x16xbf16> to vector<32x16xbf16>
    %cst_121 = arith.constant dense<0.000000e+00> : vector<16x16xf32>
    %280 = tpu.matmul %276, %279, %cst_121 {dimension_numbers = #tpu.dot_dimension_numbers<[1], [0], [0], [1], [0, 0, 1, 1], [], []>} : vector<16x32xbf16>, vector<32x16xbf16>, vector<16x16xf32> -> vector<16x16xf32>
    %281 = vector.extract_strided_slice %269 {offsets = [1, 0, 0], sizes = [1, 32, 16], strides = [1, 1, 1]} : vector<2x32x16xbf16> to vector<1x32x16xbf16>
    %282 = vector.shape_cast %281 : vector<1x32x16xbf16> to vector<32x16xbf16>
    %cst_122 = arith.constant dense<0.000000e+00> : vector<16x16xf32>
    %283 = tpu.matmul %276, %282, %cst_122 {dimension_numbers = #tpu.dot_dimension_numbers<[1], [0], [0], [1], [0, 0, 1, 1], [], []>} : vector<16x32xbf16>, vector<32x16xbf16>, vector<16x16xf32> -> vector<16x16xf32>
    %284 = vector.shape_cast %280 : vector<16x16xf32> to vector<1x16x16xf32>
    %285 = vector.shape_cast %283 : vector<16x16xf32> to vector<1x16x16xf32>
    %286 = tpu.concatenate %284, %285 in 0 : vector<1x16x16xf32>, vector<1x16x16xf32> -> vector<2x16x16xf32>
    %cst_123 = arith.constant 2.500000e-01 : f32
    %287 = vector.broadcast %cst_123 : f32 to vector<2x16x16xf32>
    %288 = arith.mulf %286, %287 : vector<2x16x16xf32>
    %289 = vector.extract_strided_slice %271 {offsets = [0, 0, 0], sizes = [1, 32, 16], strides = [1, 1, 1]} : vector<2x32x16xbf16> to vector<1x32x16xbf16>
    %290 = vector.shape_cast %289 : vector<1x32x16xbf16> to vector<32x16xbf16>
    %cst_124 = arith.constant dense<0.000000e+00> : vector<16x16xf32>
    %291 = tpu.matmul %277, %290, %cst_124 {dimension_numbers = #tpu.dot_dimension_numbers<[1], [0], [0], [1], [0, 0, 1, 1], [], []>} : vector<16x32xbf16>, vector<32x16xbf16>, vector<16x16xf32> -> vector<16x16xf32>
    %292 = vector.extract_strided_slice %271 {offsets = [1, 0, 0], sizes = [1, 32, 16], strides = [1, 1, 1]} : vector<2x32x16xbf16> to vector<1x32x16xbf16>
    %293 = vector.shape_cast %292 : vector<1x32x16xbf16> to vector<32x16xbf16>
    %cst_125 = arith.constant dense<0.000000e+00> : vector<16x16xf32>
    %294 = tpu.matmul %277, %293, %cst_125 {dimension_numbers = #tpu.dot_dimension_numbers<[1], [0], [0], [1], [0, 0, 1, 1], [], []>} : vector<16x32xbf16>, vector<32x16xbf16>, vector<16x16xf32> -> vector<16x16xf32>
    %295 = vector.shape_cast %291 : vector<16x16xf32> to vector<1x16x16xf32>
    %296 = vector.shape_cast %294 : vector<16x16xf32> to vector<1x16x16xf32>
    %297 = tpu.concatenate %295, %296 in 0 : vector<1x16x16xf32>, vector<1x16x16xf32> -> vector<2x16x16xf32>
    %298 = vector.extract_strided_slice %273 {offsets = [0, 0, 0], sizes = [1, 32, 16], strides = [1, 1, 1]} : vector<2x32x16xbf16> to vector<1x32x16xbf16>
    %299 = vector.shape_cast %298 : vector<1x32x16xbf16> to vector<32x16xbf16>
    %cst_126 = arith.constant dense<0.000000e+00> : vector<16x16xf32>
    %300 = tpu.matmul %277, %299, %cst_126 {dimension_numbers = #tpu.dot_dimension_numbers<[1], [0], [0], [1], [0, 0, 1, 1], [], []>} : vector<16x32xbf16>, vector<32x16xbf16>, vector<16x16xf32> -> vector<16x16xf32>
    %301 = vector.extract_strided_slice %273 {offsets = [1, 0, 0], sizes = [1, 32, 16], strides = [1, 1, 1]} : vector<2x32x16xbf16> to vector<1x32x16xbf16>
    %302 = vector.shape_cast %301 : vector<1x32x16xbf16> to vector<32x16xbf16>
    %cst_127 = arith.constant dense<0.000000e+00> : vector<16x16xf32>
    %303 = tpu.matmul %277, %302, %cst_127 {dimension_numbers = #tpu.dot_dimension_numbers<[1], [0], [0], [1], [0, 0, 1, 1], [], []>} : vector<16x32xbf16>, vector<32x16xbf16>, vector<16x16xf32> -> vector<16x16xf32>
    %304 = vector.shape_cast %300 : vector<16x16xf32> to vector<1x16x16xf32>
    %305 = vector.shape_cast %303 : vector<16x16xf32> to vector<1x16x16xf32>
    %306 = tpu.concatenate %304, %305 in 0 : vector<1x16x16xf32>, vector<1x16x16xf32> -> vector<2x16x16xf32>
    %307 = vector.extract_strided_slice %288 {offsets = [0, 0, 0], sizes = [2, 8, 16], strides = [1, 1, 1]} : vector<2x16x16xf32> to vector<2x8x16xf32>
    %308 = vector.extract_strided_slice %297 {offsets = [0, 0, 0], sizes = [2, 8, 16], strides = [1, 1, 1]} : vector<2x16x16xf32> to vector<2x8x16xf32>
    %309 = vector.extract_strided_slice %306 {offsets = [0, 0, 0], sizes = [2, 8, 16], strides = [1, 1, 1]} : vector<2x16x16xf32> to vector<2x8x16xf32>
    "tpu.trace_start"() <{level = 10 : i32, message = "hqd,hkd->hqk"}> : () -> ()
    %cst_128 = arith.constant dense<0.000000e+00> : vector<2x8x8xf32>
    %310 = tpu.matmul %307, %308, %cst_128 {dimension_numbers = #tpu.dot_dimension_numbers<[2], [2], [1], [1], [0, 0, 0, 1, 1, 1], [0], [0]>} : vector<2x8x16xf32>, vector<2x8x16xf32>, vector<2x8x8xf32> -> vector<2x8x8xf32>
    "tpu.trace_stop"() : () -> ()
    %311 = vector.extract_strided_slice %45 {offsets = [0, 0, 0], sizes = [1, 1, 8], strides = [1, 1, 1]} : vector<2x1x8xf32> to vector<1x1x8xf32>
    %312 = vector.shape_cast %311 : vector<1x1x8xf32> to vector<1x8xf32>
    %313 = vector.shape_cast %312 : vector<1x8xf32> to vector<1x1x8xf32>
    %314 = vector.broadcast %313 : vector<1x1x8xf32> to vector<2x8x8xf32>
    %315 = arith.addf %310, %314 : vector<2x8x8xf32>
    %cst_129 = arith.constant dense<0xFF800000> : vector<2x8xf32>
    %316 = vector.multi_reduction <maximumf>, %315, %cst_129 [2] : vector<2x8x8xf32> to vector<2x8xf32>
    %317 = vector.shape_cast %316 : vector<2x8xf32> to vector<2x8x1xf32>
    %318 = vector.broadcast %317 : vector<2x8x1xf32> to vector<2x8x8xf32>
    %319 = arith.subf %315, %318 : vector<2x8x8xf32>
    %320 = math.exp %319 : vector<2x8x8xf32>
    %cst_130 = arith.constant dense<0.000000e+00> : vector<2x8xf32>
    %321 = vector.multi_reduction <add>, %320, %cst_130 [2] : vector<2x8x8xf32> to vector<2x8xf32>
    %322 = vector.shape_cast %321 : vector<2x8xf32> to vector<2x8x1xf32>
    %323 = tpu.reciprocal %322 {approx = true} : vector<2x8x1xf32> -> vector<2x8x1xf32>
    %324 = vector.broadcast %323 : vector<2x8x1xf32> to vector<2x8x8xf32>
    %325 = arith.mulf %320, %324 : vector<2x8x8xf32>
    "tpu.trace_start"() <{level = 10 : i32, message = "hqk,hkd->hqd"}> : () -> ()
    %cst_131 = arith.constant dense<0.000000e+00> : vector<2x8x16xf32>
    %326 = tpu.matmul %325, %309, %cst_131 {dimension_numbers = #tpu.dot_dimension_numbers<[2], [1], [1], [2], [0, 0, 0, 1, 1, 2], [0], [0]>} : vector<2x8x8xf32>, vector<2x8x16xf32>, vector<2x8x16xf32> -> vector<2x8x16xf32>
    "tpu.trace_stop"() : () -> ()
    %327 = vector.extract_strided_slice %288 {offsets = [0, 8, 0], sizes = [2, 8, 16], strides = [1, 1, 1]} : vector<2x16x16xf32> to vector<2x8x16xf32>
    %328 = vector.extract_strided_slice %297 {offsets = [0, 8, 0], sizes = [2, 8, 16], strides = [1, 1, 1]} : vector<2x16x16xf32> to vector<2x8x16xf32>
    %329 = vector.extract_strided_slice %306 {offsets = [0, 8, 0], sizes = [2, 8, 16], strides = [1, 1, 1]} : vector<2x16x16xf32> to vector<2x8x16xf32>
    "tpu.trace_start"() <{level = 10 : i32, message = "hqd,hkd->hqk"}> : () -> ()
    %cst_132 = arith.constant dense<0.000000e+00> : vector<2x8x8xf32>
    %330 = tpu.matmul %327, %328, %cst_132 {dimension_numbers = #tpu.dot_dimension_numbers<[2], [2], [1], [1], [0, 0, 0, 1, 1, 1], [0], [0]>} : vector<2x8x16xf32>, vector<2x8x16xf32>, vector<2x8x8xf32> -> vector<2x8x8xf32>
    "tpu.trace_stop"() : () -> ()
    %331 = vector.extract_strided_slice %45 {offsets = [1, 0, 0], sizes = [1, 1, 8], strides = [1, 1, 1]} : vector<2x1x8xf32> to vector<1x1x8xf32>
    %332 = vector.shape_cast %331 : vector<1x1x8xf32> to vector<1x8xf32>
    %333 = vector.shape_cast %332 : vector<1x8xf32> to vector<1x1x8xf32>
    %334 = vector.broadcast %333 : vector<1x1x8xf32> to vector<2x8x8xf32>
    %335 = arith.addf %330, %334 : vector<2x8x8xf32>
    %cst_133 = arith.constant dense<0xFF800000> : vector<2x8xf32>
    %336 = vector.multi_reduction <maximumf>, %335, %cst_133 [2] : vector<2x8x8xf32> to vector<2x8xf32>
    %337 = vector.shape_cast %336 : vector<2x8xf32> to vector<2x8x1xf32>
    %338 = vector.broadcast %337 : vector<2x8x1xf32> to vector<2x8x8xf32>
    %339 = arith.subf %335, %338 : vector<2x8x8xf32>
    %340 = math.exp %339 : vector<2x8x8xf32>
    %cst_134 = arith.constant dense<0.000000e+00> : vector<2x8xf32>
    %341 = vector.multi_reduction <add>, %340, %cst_134 [2] : vector<2x8x8xf32> to vector<2x8xf32>
    %342 = vector.shape_cast %341 : vector<2x8xf32> to vector<2x8x1xf32>
    %343 = tpu.reciprocal %342 {approx = true} : vector<2x8x1xf32> -> vector<2x8x1xf32>
    %344 = vector.broadcast %343 : vector<2x8x1xf32> to vector<2x8x8xf32>
    %345 = arith.mulf %340, %344 : vector<2x8x8xf32>
    "tpu.trace_start"() <{level = 10 : i32, message = "hqk,hkd->hqd"}> : () -> ()
    %cst_135 = arith.constant dense<0.000000e+00> : vector<2x8x16xf32>
    %346 = tpu.matmul %345, %329, %cst_135 {dimension_numbers = #tpu.dot_dimension_numbers<[2], [1], [1], [2], [0, 0, 0, 1, 1, 2], [0], [0]>} : vector<2x8x8xf32>, vector<2x8x16xf32>, vector<2x8x16xf32> -> vector<2x8x16xf32>
    "tpu.trace_stop"() : () -> ()
    %347 = tpu.concatenate %326, %346 in 1 : vector<2x8x16xf32>, vector<2x8x16xf32> -> vector<2x16x16xf32>
    %348 = arith.truncf %347 : vector<2x16x16xf32> to vector<2x16x16xbf16>
    "tpu.trace_start"() <{level = 10 : i32, message = "hqd,hde->hqe"}> : () -> ()
    %cst_136 = arith.constant dense<0.000000e+00> : vector<2x16x32xf32>
    %349 = tpu.matmul %348, %275, %cst_136 {dimension_numbers = #tpu.dot_dimension_numbers<[2], [1], [1], [2], [0, 0, 0, 1, 1, 2], [0], [0]>} : vector<2x16x16xbf16>, vector<2x16x32xbf16>, vector<2x16x32xf32> -> vector<2x16x32xf32>
    "tpu.trace_stop"() : () -> ()
    %cst_137 = arith.constant dense<0.000000e+00> : vector<16x32xf32>
    %350 = vector.multi_reduction <add>, %349, %cst_137 [0] : vector<2x16x32xf32> to vector<16x32xf32>
    %351 = arith.addf %242, %350 : vector<16x32xf32>
    %c1_138 = arith.constant 1 : index
    %c0_139 = arith.constant 0 : index
    %c0_140 = arith.constant 0 : index
    %352 = vector.load %arg13[%c1_138, %c0_139, %c0_140] : memref<2x1x32xf32, #tpu.memory_space<vmem>>, vector<1x1x32xf32>
    %353 = vector.shape_cast %352 : vector<1x1x32xf32> to vector<1x32xf32>
    %c1_141 = arith.constant 1 : index
    %c0_142 = arith.constant 0 : index
    %c0_143 = arith.constant 0 : index
    %354 = vector.load %arg14[%c1_141, %c0_142, %c0_143] : memref<2x1x32xf32, #tpu.memory_space<vmem>>, vector<1x1x32xf32>
    %355 = vector.shape_cast %354 : vector<1x1x32xf32> to vector<1x32xf32>
    %cst_144 = arith.constant dense<0.000000e+00> : vector<16xf32>
    %356 = vector.multi_reduction <add>, %351, %cst_144 [1] : vector<16x32xf32> to vector<16xf32>
    %357 = vector.shape_cast %356 : vector<16xf32> to vector<16x1xf32>
    %cst_145 = arith.constant 3.200000e+01 : f32
    %358 = vector.broadcast %cst_145 : f32 to vector<16x1xf32>
    %359 = arith.divf %357, %358 : vector<16x1xf32>
    %360 = vector.broadcast %359 : vector<16x1xf32> to vector<16x32xf32>
    %361 = arith.subf %351, %360 : vector<16x32xf32>
    %362 = arith.mulf %361, %361 : vector<16x32xf32>
    %cst_146 = arith.constant dense<0.000000e+00> : vector<16xf32>
    %363 = vector.multi_reduction <add>, %362, %cst_146 [1] : vector<16x32xf32> to vector<16xf32>
    %364 = vector.shape_cast %363 : vector<16xf32> to vector<16x1xf32>
    %cst_147 = arith.constant 0.0322580636 : f32
    %365 = vector.broadcast %cst_147 : f32 to vector<16x1xf32>
    %366 = arith.mulf %364, %365 : vector<16x1xf32>
    %367 = math.sqrt %366 : vector<16x1xf32>
    %cst_148 = arith.constant 9.99999997E-7 : f32
    %368 = vector.broadcast %cst_148 : f32 to vector<16x1xf32>
    %369 = arith.addf %367, %368 : vector<16x1xf32>
    %370 = tpu.reciprocal %369 {approx = true} : vector<16x1xf32> -> vector<16x1xf32>
    %371 = vector.broadcast %370 : vector<16x1xf32> to vector<16x32xf32>
    %372 = arith.mulf %361, %371 : vector<16x32xf32>
    %373 = vector.broadcast %353 : vector<1x32xf32> to vector<16x32xf32>
    %374 = arith.mulf %373, %372 : vector<16x32xf32>
    %375 = vector.broadcast %355 : vector<1x32xf32> to vector<16x32xf32>
    %376 = arith.addf %374, %375 : vector<16x32xf32>
    %c1_149 = arith.constant 1 : index
    %c0_150 = arith.constant 0 : index
    %c0_151 = arith.constant 0 : index
    %c0_152 = arith.constant 0 : index
    %377 = vector.load %arg15[%c1_149, %c0_150, %c0_151, %c0_152] : memref<2x3x32x64xbf16, #tpu.memory_space<vmem>>, vector<1x3x32x64xbf16>
    %378 = vector.shape_cast %377 : vector<1x3x32x64xbf16> to vector<3x32x64xbf16>
    %c1_153 = arith.constant 1 : index
    %c0_154 = arith.constant 0 : index
    %c0_155 = arith.constant 0 : index
    %379 = vector.load %arg16[%c1_153, %c0_154, %c0_155] : memref<2x1x64xf32, #tpu.memory_space<vmem>>, vector<1x1x64xf32>
    %380 = vector.shape_cast %379 : vector<1x1x64xf32> to vector<1x64xf32>
    %381 = vector.extract_strided_slice %376 {offsets = [15, 0], sizes = [1, 32], strides = [1, 1]} : vector<16x32xf32> to vector<1x32xf32>
    %382 = vector.extract_strided_slice %376 {offsets = [0, 0], sizes = [15, 32], strides = [1, 1]} : vector<16x32xf32> to vector<15x32xf32>
    %383 = tpu.concatenate %381, %382 in 0 : vector<1x32xf32>, vector<15x32xf32> -> vector<16x32xf32>
    %384 = vector.broadcast %20 : vector<16x1xf32> to vector<16x32xf32>
    %385 = arith.mulf %383, %384 : vector<16x32xf32>
    %386 = vector.extract_strided_slice %378 {offsets = [0, 0, 0], sizes = [1, 32, 64], strides = [1, 1, 1]} : vector<3x32x64xbf16> to vector<1x32x64xbf16>
    %387 = vector.shape_cast %386 : vector<1x32x64xbf16> to vector<32x64xbf16>
    %388 = arith.truncf %385 : vector<16x32xf32> to vector<16x32xbf16>
    %cst_156 = arith.constant dense<0.000000e+00> : vector<16x64xf32>
    %389 = tpu.matmul %388, %387, %cst_156 {dimension_numbers = #tpu.dot_dimension_numbers<[1], [0], [0], [1], [0, 0, 1, 1], [], []>} : vector<16x32xbf16>, vector<32x64xbf16>, vector<16x64xf32> -> vector<16x64xf32>
    %390 = vector.extract_strided_slice %378 {offsets = [1, 0, 0], sizes = [1, 32, 64], strides = [1, 1, 1]} : vector<3x32x64xbf16> to vector<1x32x64xbf16>
    %391 = vector.shape_cast %390 : vector<1x32x64xbf16> to vector<32x64xbf16>
    %392 = arith.truncf %376 : vector<16x32xf32> to vector<16x32xbf16>
    %cst_157 = arith.constant dense<0.000000e+00> : vector<16x64xf32>
    %393 = tpu.matmul %392, %391, %cst_157 {dimension_numbers = #tpu.dot_dimension_numbers<[1], [0], [0], [1], [0, 0, 1, 1], [], []>} : vector<16x32xbf16>, vector<32x64xbf16>, vector<16x64xf32> -> vector<16x64xf32>
    %394 = arith.addf %389, %393 : vector<16x64xf32>
    %395 = vector.extract_strided_slice %376 {offsets = [1, 0], sizes = [15, 32], strides = [1, 1]} : vector<16x32xf32> to vector<15x32xf32>
    %396 = vector.extract_strided_slice %376 {offsets = [0, 0], sizes = [1, 32], strides = [1, 1]} : vector<16x32xf32> to vector<1x32xf32>
    %397 = tpu.concatenate %395, %396 in 0 : vector<15x32xf32>, vector<1x32xf32> -> vector<16x32xf32>
    %398 = vector.broadcast %24 : vector<16x1xf32> to vector<16x32xf32>
    %399 = arith.mulf %397, %398 : vector<16x32xf32>
    %400 = vector.extract_strided_slice %378 {offsets = [2, 0, 0], sizes = [1, 32, 64], strides = [1, 1, 1]} : vector<3x32x64xbf16> to vector<1x32x64xbf16>
    %401 = vector.shape_cast %400 : vector<1x32x64xbf16> to vector<32x64xbf16>
    %402 = arith.truncf %399 : vector<16x32xf32> to vector<16x32xbf16>
    %cst_158 = arith.constant dense<0.000000e+00> : vector<16x64xf32>
    %403 = tpu.matmul %402, %401, %cst_158 {dimension_numbers = #tpu.dot_dimension_numbers<[1], [0], [0], [1], [0, 0, 1, 1], [], []>} : vector<16x32xbf16>, vector<32x64xbf16>, vector<16x64xf32> -> vector<16x64xf32>
    %404 = arith.addf %394, %403 : vector<16x64xf32>
    %405 = vector.broadcast %380 : vector<1x64xf32> to vector<16x64xf32>
    %406 = arith.addf %404, %405 : vector<16x64xf32>
    %cst_159 = arith.constant 0.000000e+00 : f32
    %407 = vector.broadcast %cst_159 : f32 to vector<16x64xf32>
    %408 = arith.maximumf %406, %407 : vector<16x64xf32>
    %c1_160 = arith.constant 1 : index
    %c0_161 = arith.constant 0 : index
    %c0_162 = arith.constant 0 : index
    %c0_163 = arith.constant 0 : index
    %409 = vector.load %arg17[%c1_160, %c0_161, %c0_162, %c0_163] : memref<2x3x64x32xbf16, #tpu.memory_space<vmem>>, vector<1x3x64x32xbf16>
    %410 = vector.shape_cast %409 : vector<1x3x64x32xbf16> to vector<3x64x32xbf16>
    %c1_164 = arith.constant 1 : index
    %c0_165 = arith.constant 0 : index
    %c0_166 = arith.constant 0 : index
    %411 = vector.load %arg18[%c1_164, %c0_165, %c0_166] : memref<2x1x32xf32, #tpu.memory_space<vmem>>, vector<1x1x32xf32>
    %412 = vector.shape_cast %411 : vector<1x1x32xf32> to vector<1x32xf32>
    %413 = vector.extract_strided_slice %408 {offsets = [15, 0], sizes = [1, 64], strides = [1, 1]} : vector<16x64xf32> to vector<1x64xf32>
    %414 = vector.extract_strided_slice %408 {offsets = [0, 0], sizes = [15, 64], strides = [1, 1]} : vector<16x64xf32> to vector<15x64xf32>
    %415 = tpu.concatenate %413, %414 in 0 : vector<1x64xf32>, vector<15x64xf32> -> vector<16x64xf32>
    %416 = vector.broadcast %20 : vector<16x1xf32> to vector<16x64xf32>
    %417 = arith.mulf %415, %416 : vector<16x64xf32>
    %418 = vector.extract_strided_slice %410 {offsets = [0, 0, 0], sizes = [1, 64, 32], strides = [1, 1, 1]} : vector<3x64x32xbf16> to vector<1x64x32xbf16>
    %419 = vector.shape_cast %418 : vector<1x64x32xbf16> to vector<64x32xbf16>
    %420 = arith.truncf %417 : vector<16x64xf32> to vector<16x64xbf16>
    %cst_167 = arith.constant dense<0.000000e+00> : vector<16x32xf32>
    %421 = tpu.matmul %420, %419, %cst_167 {dimension_numbers = #tpu.dot_dimension_numbers<[1], [0], [0], [1], [0, 0, 1, 1], [], []>} : vector<16x64xbf16>, vector<64x32xbf16>, vector<16x32xf32> -> vector<16x32xf32>
    %422 = vector.extract_strided_slice %410 {offsets = [1, 0, 0], sizes = [1, 64, 32], strides = [1, 1, 1]} : vector<3x64x32xbf16> to vector<1x64x32xbf16>
    %423 = vector.shape_cast %422 : vector<1x64x32xbf16> to vector<64x32xbf16>
    %424 = arith.truncf %408 : vector<16x64xf32> to vector<16x64xbf16>
    %cst_168 = arith.constant dense<0.000000e+00> : vector<16x32xf32>
    %425 = tpu.matmul %424, %423, %cst_168 {dimension_numbers = #tpu.dot_dimension_numbers<[1], [0], [0], [1], [0, 0, 1, 1], [], []>} : vector<16x64xbf16>, vector<64x32xbf16>, vector<16x32xf32> -> vector<16x32xf32>
    %426 = arith.addf %421, %425 : vector<16x32xf32>
    %427 = vector.extract_strided_slice %408 {offsets = [1, 0], sizes = [15, 64], strides = [1, 1]} : vector<16x64xf32> to vector<15x64xf32>
    %428 = vector.extract_strided_slice %408 {offsets = [0, 0], sizes = [1, 64], strides = [1, 1]} : vector<16x64xf32> to vector<1x64xf32>
    %429 = tpu.concatenate %427, %428 in 0 : vector<15x64xf32>, vector<1x64xf32> -> vector<16x64xf32>
    %430 = vector.broadcast %24 : vector<16x1xf32> to vector<16x64xf32>
    %431 = arith.mulf %429, %430 : vector<16x64xf32>
    %432 = vector.extract_strided_slice %410 {offsets = [2, 0, 0], sizes = [1, 64, 32], strides = [1, 1, 1]} : vector<3x64x32xbf16> to vector<1x64x32xbf16>
    %433 = vector.shape_cast %432 : vector<1x64x32xbf16> to vector<64x32xbf16>
    %434 = arith.truncf %431 : vector<16x64xf32> to vector<16x64xbf16>
    %cst_169 = arith.constant dense<0.000000e+00> : vector<16x32xf32>
    %435 = tpu.matmul %434, %433, %cst_169 {dimension_numbers = #tpu.dot_dimension_numbers<[1], [0], [0], [1], [0, 0, 1, 1], [], []>} : vector<16x64xbf16>, vector<64x32xbf16>, vector<16x32xf32> -> vector<16x32xf32>
    %436 = arith.addf %426, %435 : vector<16x32xf32>
    %437 = vector.broadcast %412 : vector<1x32xf32> to vector<16x32xf32>
    %438 = arith.addf %436, %437 : vector<16x32xf32>
    %439 = arith.addf %351, %438 : vector<16x32xf32>
    %c0_170 = arith.constant 0 : index
    %c0_171 = arith.constant 0 : index
    %440 = vector.load %arg19[%c0_170, %c0_171] : memref<1x32xf32, #tpu.memory_space<vmem>>, vector<1x32xf32>
    %c0_172 = arith.constant 0 : index
    %c0_173 = arith.constant 0 : index
    %441 = vector.load %arg20[%c0_172, %c0_173] : memref<1x32xf32, #tpu.memory_space<vmem>>, vector<1x32xf32>
    %cst_174 = arith.constant dense<0.000000e+00> : vector<16xf32>
    %442 = vector.multi_reduction <add>, %439, %cst_174 [1] : vector<16x32xf32> to vector<16xf32>
    %443 = vector.shape_cast %442 : vector<16xf32> to vector<16x1xf32>
    %cst_175 = arith.constant 3.200000e+01 : f32
    %444 = vector.broadcast %cst_175 : f32 to vector<16x1xf32>
    %445 = arith.divf %443, %444 : vector<16x1xf32>
    %446 = vector.broadcast %445 : vector<16x1xf32> to vector<16x32xf32>
    %447 = arith.subf %439, %446 : vector<16x32xf32>
    %448 = arith.mulf %447, %447 : vector<16x32xf32>
    %cst_176 = arith.constant dense<0.000000e+00> : vector<16xf32>
    %449 = vector.multi_reduction <add>, %448, %cst_176 [1] : vector<16x32xf32> to vector<16xf32>
    %450 = vector.shape_cast %449 : vector<16xf32> to vector<16x1xf32>
    %cst_177 = arith.constant 0.0322580636 : f32
    %451 = vector.broadcast %cst_177 : f32 to vector<16x1xf32>
    %452 = arith.mulf %450, %451 : vector<16x1xf32>
    %453 = math.sqrt %452 : vector<16x1xf32>
    %cst_178 = arith.constant 9.99999997E-7 : f32
    %454 = vector.broadcast %cst_178 : f32 to vector<16x1xf32>
    %455 = arith.addf %453, %454 : vector<16x1xf32>
    %456 = tpu.reciprocal %455 {approx = true} : vector<16x1xf32> -> vector<16x1xf32>
    %457 = vector.broadcast %456 : vector<16x1xf32> to vector<16x32xf32>
    %458 = arith.mulf %447, %457 : vector<16x32xf32>
    %459 = vector.broadcast %440 : vector<1x32xf32> to vector<16x32xf32>
    %460 = arith.mulf %459, %458 : vector<16x32xf32>
    %461 = vector.broadcast %441 : vector<1x32xf32> to vector<16x32xf32>
    %462 = arith.addf %460, %461 : vector<16x32xf32>
    %c0_179 = arith.constant 0 : index
    %c0_180 = arith.constant 0 : index
    %463 = vector.load %arg21[%c0_179, %c0_180] : memref<16x32xf32, #tpu.memory_space<vmem>>, vector<16x32xf32>
    tpu.vector_store %arg21[%c0_179, %c0_180], %462 {strides = array<i32>} : memref<16x32xf32, #tpu.memory_space<vmem>>, vector<16x32xf32>,
    return
  }
  func.func @transform_0(%arg0: i32) -> (i32, i32) {
    %c0_i32 = arith.constant 0 : i32
    %c0_i32_0 = arith.constant 0 : i32
    return %arg0, %c0_i32 : i32, i32
  }
  func.func @transform_1(%arg0: i32) -> (i32, i32, i32) {
    %c0_i32 = arith.constant 0 : i32
    %c0_i32_0 = arith.constant 0 : i32
    %c0_i32_1 = arith.constant 0 : i32
    return %arg0, %c0_i32, %c0_i32_0 : i32, i32, i32
  }
  func.func @transform_2(%arg0: i32) -> (i32, i32, i32) {
    %c0_i32 = arith.constant 0 : i32
    %c0_i32_0 = arith.constant 0 : i32
    %c0_i32_1 = arith.constant 0 : i32
    return %arg0, %c0_i32, %c0_i32_0 : i32, i32, i32
  }
  func.func @transform_3(%arg0: i32) -> (i32, i32) {
    %c0_i32 = arith.constant 0 : i32
    %c0_i32_0 = arith.constant 0 : i32
    %c0_i32_1 = arith.constant 0 : i32
    return %c0_i32, %c0_i32_0 : i32, i32
  }
  func.func @transform_4(%arg0: i32) -> (i32, i32) {
    %c0_i32 = arith.constant 0 : i32
    %c0_i32_0 = arith.constant 0 : i32
    %c0_i32_1 = arith.constant 0 : i32
    return %c0_i32, %c0_i32_0 : i32, i32
  }
  func.func @transform_5(%arg0: i32) -> (i32, i32) {
    %c0_i32 = arith.constant 0 : i32
    %c0_i32_0 = arith.constant 0 : i32
    %c0_i32_1 = arith.constant 0 : i32
    return %c0_i32, %c0_i32_0 : i32, i32
  }
  func.func @transform_6(%arg0: i32) -> (i32, i32, i32) {
    %c0_i32 = arith.constant 0 : i32
    %c0_i32_0 = arith.constant 0 : i32
    %c0_i32_1 = arith.constant 0 : i32
    %c0_i32_2 = arith.constant 0 : i32
    return %c0_i32, %c0_i32_0, %c0_i32_1 : i32, i32, i32
  }
  func.func @transform_7(%arg0: i32) -> (i32, i32, i32) {
    %c0_i32 = arith.constant 0 : i32
    %c0_i32_0 = arith.constant 0 : i32
    %c0_i32_1 = arith.constant 0 : i32
    %c0_i32_2 = arith.constant 0 : i32
    return %c0_i32, %c0_i32_0, %c0_i32_1 : i32, i32, i32
  }
  func.func @transform_8(%arg0: i32) -> (i32, i32, i32, i32) {
    %c0_i32 = arith.constant 0 : i32
    %c0_i32_0 = arith.constant 0 : i32
    %c0_i32_1 = arith.constant 0 : i32
    %c0_i32_2 = arith.constant 0 : i32
    %c0_i32_3 = arith.constant 0 : i32
    return %c0_i32, %c0_i32_0, %c0_i32_1, %c0_i32_2 : i32, i32, i32, i32
  }
  func.func @transform_9(%arg0: i32) -> (i32, i32, i32, i32) {
    %c0_i32 = arith.constant 0 : i32
    %c0_i32_0 = arith.constant 0 : i32
    %c0_i32_1 = arith.constant 0 : i32
    %c0_i32_2 = arith.constant 0 : i32
    %c0_i32_3 = arith.constant 0 : i32
    return %c0_i32, %c0_i32_0, %c0_i32_1, %c0_i32_2 : i32, i32, i32, i32
  }
  func.func @transform_10(%arg0: i32) -> (i32, i32, i32, i32) {
    %c0_i32 = arith.constant 0 : i32
    %c0_i32_0 = arith.constant 0 : i32
    %c0_i32_1 = arith.constant 0 : i32
    %c0_i32_2 = arith.constant 0 : i32
    %c0_i32_3 = arith.constant 0 : i32
    return %c0_i32, %c0_i32_0, %c0_i32_1, %c0_i32_2 : i32, i32, i32, i32
  }
  func.func @transform_11(%arg0: i32) -> (i32, i32, i32, i32) {
    %c0_i32 = arith.constant 0 : i32
    %c0_i32_0 = arith.constant 0 : i32
    %c0_i32_1 = arith.constant 0 : i32
    %c0_i32_2 = arith.constant 0 : i32
    %c0_i32_3 = arith.constant 0 : i32
    return %c0_i32, %c0_i32_0, %c0_i32_1, %c0_i32_2 : i32, i32, i32, i32
  }
  func.func @transform_12(%arg0: i32) -> (i32, i32, i32) {
    %c0_i32 = arith.constant 0 : i32
    %c0_i32_0 = arith.constant 0 : i32
    %c0_i32_1 = arith.constant 0 : i32
    %c0_i32_2 = arith.constant 0 : i32
    return %c0_i32, %c0_i32_0, %c0_i32_1 : i32, i32, i32
  }
  func.func @transform_13(%arg0: i32) -> (i32, i32, i32) {
    %c0_i32 = arith.constant 0 : i32
    %c0_i32_0 = arith.constant 0 : i32
    %c0_i32_1 = arith.constant 0 : i32
    %c0_i32_2 = arith.constant 0 : i32
    return %c0_i32, %c0_i32_0, %c0_i32_1 : i32, i32, i32
  }
  func.func @transform_14(%arg0: i32) -> (i32, i32, i32, i32) {
    %c0_i32 = arith.constant 0 : i32
    %c0_i32_0 = arith.constant 0 : i32
    %c0_i32_1 = arith.constant 0 : i32
    %c0_i32_2 = arith.constant 0 : i32
    %c0_i32_3 = arith.constant 0 : i32
    return %c0_i32, %c0_i32_0, %c0_i32_1, %c0_i32_2 : i32, i32, i32, i32
  }
  func.func @transform_15(%arg0: i32) -> (i32, i32, i32) {
    %c0_i32 = arith.constant 0 : i32
    %c0_i32_0 = arith.constant 0 : i32
    %c0_i32_1 = arith.constant 0 : i32
    %c0_i32_2 = arith.constant 0 : i32
    return %c0_i32, %c0_i32_0, %c0_i32_1 : i32, i32, i32
  }
  func.func @transform_16(%arg0: i32) -> (i32, i32, i32, i32) {
    %c0_i32 = arith.constant 0 : i32
    %c0_i32_0 = arith.constant 0 : i32
    %c0_i32_1 = arith.constant 0 : i32
    %c0_i32_2 = arith.constant 0 : i32
    %c0_i32_3 = arith.constant 0 : i32
    return %c0_i32, %c0_i32_0, %c0_i32_1, %c0_i32_2 : i32, i32, i32, i32
  }
  func.func @transform_17(%arg0: i32) -> (i32, i32, i32) {
    %c0_i32 = arith.constant 0 : i32
    %c0_i32_0 = arith.constant 0 : i32
    %c0_i32_1 = arith.constant 0 : i32
    %c0_i32_2 = arith.constant 0 : i32
    return %c0_i32, %c0_i32_0, %c0_i32_1 : i32, i32, i32
  }
  func.func @transform_18(%arg0: i32) -> (i32, i32) {
    %c0_i32 = arith.constant 0 : i32
    %c0_i32_0 = arith.constant 0 : i32
    %c0_i32_1 = arith.constant 0 : i32
    return %c0_i32, %c0_i32_0 : i32, i32
  }
  func.func @transform_19(%arg0: i32) -> (i32, i32) {
    %c0_i32 = arith.constant 0 : i32
    %c0_i32_0 = arith.constant 0 : i32
    %c0_i32_1 = arith.constant 0 : i32
    return %c0_i32, %c0_i32_0 : i32, i32
  }
  func.func @transform_20(%arg0: i32) -> (i32, i32) {
    %c0_i32 = arith.constant 0 : i32
    %c0_i32_0 = arith.constant 0 : i32
    return %arg0, %c0_i32 : i32, i32
  }
}

</mosaic_0001>

<llo_original>
// kernel: tpu_custom_call.1
$region0: #{tpu_custom_call.1}
  #allocation0 [shape = 'u32[]', space=smem, size = 0x4, offset = 0x4, fixed_abs, tag = 'smem constant byte address 0x4 - core index']
  #allocation1 [shape = 'u32[144,128]{1,0:T(1,128)}', space=vmem, size = 0x12000, scoped, tag = 'internal scratch']
  %s0 = inlined_call_operand.vmem [shape: f32[16,32], index: 0, kind: input, shape index: {}]
  %s1 = inlined_call_operand.vmem [shape: f32[2,1,32], index: 1, kind: input, shape index: {}]
  %s2 = inlined_call_operand.vmem [shape: f32[2,1,8], index: 2, kind: input, shape index: {}]
  %s3 = inlined_call_operand.vmem [shape: f32[8,32], index: 3, kind: input, shape index: {}]
  %s4 = inlined_call_operand.vmem [shape: bf16[32,32], index: 4, kind: input, shape index: {}]
  %s5 = inlined_call_operand.vmem [shape: bf16[32,32], index: 5, kind: input, shape index: {}]
  %s6 = inlined_call_operand.vmem [shape: f32[2,1,32], index: 6, kind: input, shape index: {}]
  %s7 = inlined_call_operand.vmem [shape: f32[2,1,32], index: 7, kind: input, shape index: {}]
  %s8 = inlined_call_operand.vmem [shape: bf16[2,2,32,16], index: 8, kind: input, shape index: {}]
  %s9 = inlined_call_operand.vmem [shape: bf16[2,2,32,16], index: 9, kind: input, shape index: {}]
  %s10 = inlined_call_operand.vmem [shape: bf16[2,2,32,16], index: 10, kind: input, shape index: {}]
  %s11 = inlined_call_operand.vmem [shape: bf16[2,2,16,32], index: 11, kind: input, shape index: {}]
  %s12 = inlined_call_operand.vmem [shape: f32[2,1,32], index: 12, kind: input, shape index: {}]
  %s13 = inlined_call_operand.vmem [shape: f32[2,1,32], index: 13, kind: input, shape index: {}]
  %s14 = inlined_call_operand.vmem [shape: bf16[2,3,32,64], index: 14, kind: input, shape index: {}]
  %s15 = inlined_call_operand.vmem [shape: f32[2,1,64], index: 15, kind: input, shape index: {}]
  %s16 = inlined_call_operand.vmem [shape: bf16[2,3,64,32], index: 16, kind: input, shape index: {}]
  %s17 = inlined_call_operand.vmem [shape: f32[2,1,32], index: 17, kind: input, shape index: {}]
  %s18 = inlined_call_operand.vmem [shape: f32[1,32], index: 18, kind: input, shape index: {}]
  %s19 = inlined_call_operand.vmem [shape: f32[1,32], index: 19, kind: input, shape index: {}]
  %s20 = inlined_call_operand.hbm [shape: f32[16,32], index: 20, kind: output, shape index: {}]
  %s21 = sld [smem:[#allocation0]]
  $region90: #{tpu_custom_call.1} parent=0
    _
  %s23 = ssub.s32 1, %s21
  %s24 = scalar_select 0, %s23, %s21
  $region1: #{tpu_custom_call.1} parent=0
    #allocation2 [shape = 'u8[8192]{0}', space=vmem, size = 0x2000, scoped, tag = 'output window, operand 0, single buffered']
    #allocation3 [shape = 's32[1]{0}', space=sflag, size = 0x4, scoped, tag = 'scoped memory for tpu_custom_call.1']
    %25 = vsyncpa [#allocation3], 0
    // Predicated region
    $region2: #{tpu_custom_call.1} parent=1 // pred_check
      _
    $region3: #{tpu_custom_call.1} parent=1 // pred_check_branch
      %27 = sbr.rel (0) target = $region5
    $region4: #{tpu_custom_call.1} parent=1 // pred_region
      _
    $region5: #{tpu_custom_call.1} parent=1 // pred_fallthru
      _
    // Predicated region
    $region6: #{tpu_custom_call.1} parent=1 // pred_check
      _
    $region7: #{tpu_custom_call.1} parent=1 // pred_check_branch
      %29 = sbr.rel (0) target = $region9
    $region8: #{tpu_custom_call.1} parent=1 // pred_region
      _
    $region9: #{tpu_custom_call.1} parent=1 // pred_fallthru
      _
    // Predicated region
    $region10: #{tpu_custom_call.1} parent=1 // pred_check
      _
    $region11: #{tpu_custom_call.1} parent=1 // pred_check_branch
      %31 = sbr.rel (0) target = $region13
    $region12: #{tpu_custom_call.1} parent=1 // pred_region
      _
    $region13: #{tpu_custom_call.1} parent=1 // pred_fallthru
      _
    // Predicated region
    $region14: #{tpu_custom_call.1} parent=1 // pred_check
      _
    $region15: #{tpu_custom_call.1} parent=1 // pred_check_branch
      %33 = sbr.rel (0) target = $region17
    $region16: #{tpu_custom_call.1} parent=1 // pred_region
      _
    $region17: #{tpu_custom_call.1} parent=1 // pred_fallthru
      _
    // Predicated region
    $region18: #{tpu_custom_call.1} parent=1 // pred_check
      _
    $region19: #{tpu_custom_call.1} parent=1 // pred_check_branch
      %35 = sbr.rel (0) target = $region21
    $region20: #{tpu_custom_call.1} parent=1 // pred_region
      _
    $region21: #{tpu_custom_call.1} parent=1 // pred_fallthru
      _
    // Predicated region
    $region22: #{tpu_custom_call.1} parent=1 // pred_check
      _
    $region23: #{tpu_custom_call.1} parent=1 // pred_check_branch
      %37 = sbr.rel (0) target = $region25
    $region24: #{tpu_custom_call.1} parent=1 // pred_region
      _
    $region25: #{tpu_custom_call.1} parent=1 // pred_fallthru
      _
    // Predicated region
    $region26: #{tpu_custom_call.1} parent=1 // pred_check
      _
    $region27: #{tpu_custom_call.1} parent=1 // pred_check_branch
      %39 = sbr.rel (0) target = $region29
    $region28: #{tpu_custom_call.1} parent=1 // pred_region
      _
    $region29: #{tpu_custom_call.1} parent=1 // pred_fallthru
      _
    // Predicated region
    $region30: #{tpu_custom_call.1} parent=1 // pred_check
      _
    $region31: #{tpu_custom_call.1} parent=1 // pred_check_branch
      %41 = sbr.rel (0) target = $region33
    $region32: #{tpu_custom_call.1} parent=1 // pred_region
      _
    $region33: #{tpu_custom_call.1} parent=1 // pred_fallthru
      _
    // Predicated region
    $region34: #{tpu_custom_call.1} parent=1 // pred_check
      _
    $region35: #{tpu_custom_call.1} parent=1 // pred_check_branch
      %43 = sbr.rel (0) target = $region37
    $region36: #{tpu_custom_call.1} parent=1 // pred_region
      _
    $region37: #{tpu_custom_call.1} parent=1 // pred_fallthru
      _
    // Predicated region
    $region38: #{tpu_custom_call.1} parent=1 // pred_check
      _
    $region39: #{tpu_custom_call.1} parent=1 // pred_check_branch
      %45 = sbr.rel (0) target = $region41
    $region40: #{tpu_custom_call.1} parent=1 // pred_region
      _
    $region41: #{tpu_custom_call.1} parent=1 // pred_fallthru
      _
    // Predicated region
    $region42: #{tpu_custom_call.1} parent=1 // pred_check
      _
    $region43: #{tpu_custom_call.1} parent=1 // pred_check_branch
      %47 = sbr.rel (0) target = $region45
    $region44: #{tpu_custom_call.1} parent=1 // pred_region
      _
    $region45: #{tpu_custom_call.1} parent=1 // pred_fallthru
      _
    // Predicated region
    $region46: #{tpu_custom_call.1} parent=1 // pred_check
      _
    $region47: #{tpu_custom_call.1} parent=1 // pred_check_branch
      %49 = sbr.rel (0) target = $region49
    $region48: #{tpu_custom_call.1} parent=1 // pred_region
      _
    $region49: #{tpu_custom_call.1} parent=1 // pred_fallthru
      _
    // Predicated region
    $region50: #{tpu_custom_call.1} parent=1 // pred_check
      _
    $region51: #{tpu_custom_call.1} parent=1 // pred_check_branch
      %51 = sbr.rel (0) target = $region53
    $region52: #{tpu_custom_call.1} parent=1 // pred_region
      _
    $region53: #{tpu_custom_call.1} parent=1 // pred_fallthru
      _
    // Predicated region
    $region54: #{tpu_custom_call.1} parent=1 // pred_check
      _
    $region55: #{tpu_custom_call.1} parent=1 // pred_check_branch
      %53 = sbr.rel (0) target = $region57
    $region56: #{tpu_custom_call.1} parent=1 // pred_region
      _
    $region57: #{tpu_custom_call.1} parent=1 // pred_fallthru
      _
    // Predicated region
    $region58: #{tpu_custom_call.1} parent=1 // pred_check
      _
    $region59: #{tpu_custom_call.1} parent=1 // pred_check_branch
      %55 = sbr.rel (0) target = $region61
    $region60: #{tpu_custom_call.1} parent=1 // pred_region
      _
    $region61: #{tpu_custom_call.1} parent=1 // pred_fallthru
      _
    // Predicated region
    $region62: #{tpu_custom_call.1} parent=1 // pred_check
      _
    $region63: #{tpu_custom_call.1} parent=1 // pred_check_branch
      %57 = sbr.rel (0) target = $region65
    $region64: #{tpu_custom_call.1} parent=1 // pred_region
      _
    $region65: #{tpu_custom_call.1} parent=1 // pred_fallthru
      _
    // Predicated region
    $region66: #{tpu_custom_call.1} parent=1 // pred_check
      _
    $region67: #{tpu_custom_call.1} parent=1 // pred_check_branch
      %59 = sbr.rel (0) target = $region69
    $region68: #{tpu_custom_call.1} parent=1 // pred_region
      _
    $region69: #{tpu_custom_call.1} parent=1 // pred_fallthru
      _
    // Predicated region
    $region70: #{tpu_custom_call.1} parent=1 // pred_check
      _
    $region71: #{tpu_custom_call.1} parent=1 // pred_check_branch
      %61 = sbr.rel (0) target = $region73
    $region72: #{tpu_custom_call.1} parent=1 // pred_region
      _
    $region73: #{tpu_custom_call.1} parent=1 // pred_fallthru
      _
    // Predicated region
    $region74: #{tpu_custom_call.1} parent=1 // pred_check
      _
    $region75: #{tpu_custom_call.1} parent=1 // pred_check_branch
      %63 = sbr.rel (0) target = $region77
    $region76: #{tpu_custom_call.1} parent=1 // pred_region
      _
    $region77: #{tpu_custom_call.1} parent=1 // pred_fallthru
      _
    // Predicated region
    $region78: #{tpu_custom_call.1} parent=1 // pred_check
      _
    $region79: #{tpu_custom_call.1} parent=1 // pred_check_branch
      %65 = sbr.rel (0) target = $region81
    $region80: #{tpu_custom_call.1} parent=1 // pred_region
      _
    $region81: #{tpu_custom_call.1} parent=1 // pred_fallthru
      _
    %v67 = vlaneseq
    %v68 = vshrl.u32 %v67, 7
    %v69 = vadd.s32 %v68, 8
    %vm70 = vcmp.lt.s32.totalorder %v68, 0
    %v71 = vsub.s32 0, %v68
    %v72 = vsel %vm70, %v71, %v68
    %v73 = vshrl.u32 %v72, 3
    %v74 = vand.u32 %v72, 7
    %v75 = vsub.s32 0, %v74
    %v76 = vsel %vm70, %v75, %v74
    %vm77 = vcmp.lt.s32.totalorder %v69, 0
    %v78 = vsub.s32 0, %v69
    %v79 = vsel %vm77, %v78, %v69
    %v80 = vshrl.u32 %v79, 3
    %v81 = vand.u32 %v79, 7
    %v82 = vsub.s32 0, %v81
    %v83 = vsel %vm77, %v82, %v81
    %vm84 = vcmp.ne.s32.totalorder %v76, 0
    %vm85 = vcmp.ne.s32.totalorder %v83, 0
    %vm86 = vcmp.lt.s32.totalorder %v76, 0
    %vm87 = vcmp.lt.s32.totalorder %v83, 0
    %vm88 = vmand %vm86, %vm84
    %vm89 = vmand %vm87, %vm85
    %v90 = vadd.s32 %v76, 8
    %v91 = vadd.s32 %v83, 8
    %v92 = vsel %vm88, %v90, %v76
    %v93 = vsel %vm89, %v91, %v83
    %vm94 = vcmp.ge.s32.totalorder %v92, 1
    %vm95 = vcmp.ge.s32.totalorder %v93, 1
    %v96 = vsel %vm94, 1, 0
    %v97 = vsel %vm95, 1, 0
    %v98 = vcvt.s32.f32 %v96
    %v99 = vcvt.s32.f32 %v97
    %vm100 = vcmp.le.s32.totalorder %v92, 6
    %vm101 = vcmp.le.s32.totalorder %v93, 6
    %v102 = vsel %vm100, 1, 0
    %v103 = vsel %vm101, 1, 0
    %v104 = vcvt.s32.f32 %v102
    %v105 = vcvt.s32.f32 %v103
    %v106 = vld [vmem:[%s0] sm:$0xff]
    %v107 = vld [vmem:[%s0 + $0x8] sm:$0xff]
    %v108 = vld [vmem:[%s4] sm:$0xf]
    %v109 = vld [vmem:[%s4 + $0x4] sm:$0xf]
    %v110 = vld [vmem:[%s4 + $0x8] sm:$0xf]
    %v111 = vld [vmem:[%s4 + $0xc] sm:$0xf]
    %v112 = vpack.c.bf16 %v107, %v106
    %v117 = vunpack.c.l.b16 %v108
    %v118 = vunpack.c.l.b16 %v109
    %v119 = vunpack.c.l.b16 %v110
    %v120 = vunpack.c.l.b16 %v111
    %v121 = vpack.c.b16 %v118, %v117
    %v122 = vpack.c.b16 %v120, %v119
    %vm125 = vcmask 261120
    %v127 = vsel %vm125, %v112, 0
    %129 = vmatprep.subr.bf16.mxu0 0
    %130 = vmatpush1.bf16.msra.mxu0 %v121
    %131 = vmatprep.subr.bf16.mxu0 0
    %132 = vmatpush1.bf16.msra.mxu0 %v122
    %133 = vmatprep.subr.bf16.mxu0 0
    %134 = vmatpush1.bf16.msra.mxu0 0
    %135 = vmatprep.subr.bf16.mxu0 0
    %136 = vmatpush1.bf16.msra.mxu0 0
    %137 = vmatprep.subr.bf16.mxu0 0
    %138 = vmatpush1.bf16.msra.mxu0 0
    %139 = vmatprep.subr.bf16.mxu0 0
    %140 = vmatpush1.bf16.msra.mxu0 0
    %141 = vmatprep.subr.bf16.mxu0 0
    %142 = vmatpush1.bf16.msra.mxu0 0
    %143 = vmatprep.subr.bf16.mxu0 0
    %144 = vmatpush1.bf16.msra.mxu0 0
    %145 = vmatprep.subr.bf16.mxu0 0
    %146 = vmatpush1.bf16.msra.mxu0 0
    %147 = vmatprep.subr.bf16.mxu0 0
    %148 = vmatpush1.bf16.msra.mxu0 0
    %149 = vmatprep.subr.bf16.mxu0 0
    %150 = vmatpush1.bf16.msra.mxu0 0
    %151 = vmatprep.subr.bf16.mxu0 0
    %152 = vmatpush1.bf16.msra.mxu0 0
    %153 = vmatprep.subr.bf16.mxu0 0
    %154 = vmatpush1.bf16.msra.mxu0 0
    %155 = vmatprep.subr.bf16.mxu0 0
    %156 = vmatpush1.bf16.msra.mxu0 0
    %157 = vmatprep.subr.bf16.mxu0 0
    %158 = vmatpush1.bf16.msra.mxu0 0
    %159 = vmatprep.subr.bf16.mxu0 0
    %160 = vmatpush1.bf16.msra.mxu0 0
    %161 = vmatprep.mubr.bf16.mxu0 0
    %162 = vmatmul.mubr.bf16.gmra.mrb[0].mxu0 %v127
    %v163 = vpop.f32.mrb[0].mxu0
    %v164 = vadd.f32 0.0, %v163
    %v165 = vpop.f32.mrb[0].mxu0
    %v166 = vpop.f32.mrb[0].mxu0
    %v167 = vadd.f32 0.0, %v166
    %v168 = vpop.f32.mrb[0].mxu0
    %169 = vdwg.mxu0
    %v170 = vld [vmem:[%s1] sm:$0x1]
    %v171 = vld [vmem:[%s1 + $0x1] sm:$0x1]
    %v172 = vld [vmem:[%s5] sm:$0xf]
    %v173 = vld [vmem:[%s5 + $0x4] sm:$0xf]
    %v174 = vld [vmem:[%s5 + $0x8] sm:$0xf]
    %v175 = vld [vmem:[%s5 + $0xc] sm:$0xf]
    %v176 = vpack.c.bf16 %v170, %v170
    %v177 = vpack.c.bf16 %v171, %v171
    %v180 = vunpack.c.l.b16 %v176
    %v181 = vunpack.c.l.b16 %v177
    %v182 = vrot.slane %v181, 7
    %vm183 = vcmask 1041409
    %v184 = vsel %vm183, %v182, %v180
    %v185 = vpack.c.b16 %v184, %v184
    %v190 = vunpack.c.l.b16 %v172
    %v191 = vunpack.c.l.b16 %v173
    %v192 = vunpack.c.l.b16 %v174
    %v193 = vunpack.c.l.b16 %v175
    %v194 = vpack.c.b16 %v191, %v190
    %v195 = vpack.c.b16 %v193, %v192
    %v199 = vsel %vm125, %v185, 0
    %201 = vmatprep.subr.bf16.mxu0 0
    %202 = vmatpush1.bf16.msra.mxu0 %v194
    %203 = vmatprep.subr.bf16.mxu0 0
    %204 = vmatpush1.bf16.msra.mxu0 %v195
    %205 = vmatprep.subr.bf16.mxu0 0
    %206 = vmatpush1.bf16.msra.mxu0 0
    %207 = vmatprep.subr.bf16.mxu0 0
    %208 = vmatpush1.bf16.msra.mxu0 0
    %209 = vmatprep.subr.bf16.mxu0 0
    %210 = vmatpush1.bf16.msra.mxu0 0
    %211 = vmatprep.subr.bf16.mxu0 0
    %212 = vmatpush1.bf16.msra.mxu0 0
    %213 = vmatprep.subr.bf16.mxu0 0
    %214 = vmatpush1.bf16.msra.mxu0 0
    %215 = vmatprep.subr.bf16.mxu0 0
    %216 = vmatpush1.bf16.msra.mxu0 0
    %217 = vmatprep.subr.bf16.mxu0 0
    %218 = vmatpush1.bf16.msra.mxu0 0
    %219 = vmatprep.subr.bf16.mxu0 0
    %220 = vmatpush1.bf16.msra.mxu0 0
    %221 = vmatprep.subr.bf16.mxu0 0
    %222 = vmatpush1.bf16.msra.mxu0 0
    %223 = vmatprep.subr.bf16.mxu0 0
    %224 = vmatpush1.bf16.msra.mxu0 0
    %225 = vmatprep.subr.bf16.mxu0 0
    %226 = vmatpush1.bf16.msra.mxu0 0
    %227 = vmatprep.subr.bf16.mxu0 0
    %228 = vmatpush1.bf16.msra.mxu0 0
    %229 = vmatprep.subr.bf16.mxu0 0
    %230 = vmatpush1.bf16.msra.mxu0 0
    %231 = vmatprep.subr.bf16.mxu0 0
    %232 = vmatpush1.bf16.msra.mxu0 0
    %233 = vmatprep.mubr.bf16.mxu0 0
    %234 = vmatmul.mubr.bf16.gmra.mrb[0].mxu0 %v199
    %v235 = vpop.f32.mrb[0].mxu0
    %v236 = vadd.f32 0.0, %v235
    %v237 = vpop.f32.mrb[0].mxu0
    %v238 = vpop.f32.mrb[0].mxu0
    %v239 = vpop.f32.mrb[0].mxu0
    %240 = vdwg.mxu0
    %v243 = vunpack.c.l.s4 1966171168
    %v244 = vunpack.c.0.s8 %v243
    %v245 = vlaneseq
    %v246 = vshrl.u32 %v245, 7
    %v247 = vsub.s32 %v244, %v246
    %v248 = vrot.slane %v236, %v247
    %v249 = vcombine.high %v248, %v248
    %v251 = vunpack.c.l.s4 1966171168
    %v252 = vunpack.c.0.s8 %v251
    %v253 = vlaneseq
    %v254 = vshrl.u32 %v253, 7
    %v255 = vsub.s32 %v252, %v254
    %v256 = vrot.slane %v248, %v255
    %v258 = vunpack.c.l.s4 1966171168
    %v259 = vunpack.c.0.s8 %v258
    %v260 = vlaneseq
    %v261 = vshrl.u32 %v260, 7
    %v262 = vsub.s32 %v259, %v261
    %v263 = vrot.slane %v249, %v262
    %v264 = vlaneseq
    %v265 = vshrl.u32 %v264, 7
    %v266 = vsub.s32 0, %v265
    %v267 = vrot.slane %v256, %v266
    %v268 = vlaneseq
    %v269 = vshrl.u32 %v268, 7
    %v270 = vsub.s32 0, %v269
    %v271 = vrot.slane %v263, %v270
    %v274 = vadd.f32 %v164, %v267
    %v275 = vadd.f32 %v167, %v271
    %v276 = vld [vmem:[%s3] sm:$0xff]
    %v277 = vadd.f32 %v274, %v276
    %v278 = vadd.f32 %v275, %v276
    %v279 = vld [vmem:[%s2] sm:$0x1]
    %v280 = vld [vmem:[%s2 + $0x1] sm:$0x1]
    %v281 = vmul.f32 %v279, -1e+18
    %v282 = vmul.f32 %v280, -1e+18
    %v283 = vld [vmem:[%s6] sm:$0x1]
    %v284 = vld [vmem:[%s7] sm:$0x1]
    %v285 = vsel %vm125, %v277, 0.0
    %286 = vadd.xlane.f32.xlu0 %v285
    %v287 = vpop.xlane.xlu0 %286
    %v288 = vsel %vm125, %v278, 0.0
    %289 = vadd.xlane.f32.xlu0 %v288
    %v290 = vpop.xlane.xlu0 %289
    %v291 = vrcp.pop 32.0
    %v292 = vmul.f32 %v287, %v291
    %v293 = vmul.f32 %v290, %v291
    %v294 = vsub.f32 %v277, %v292
    %v295 = vsub.f32 %v278, %v293
    %v296 = vmul.f32 %v294, %v294
    %v297 = vmul.f32 %v295, %v295
    %v298 = vsel %vm125, %v296, 0.0
    %299 = vadd.xlane.f32.xlu0 %v298
    %v300 = vpop.xlane.xlu0 %299
    %v301 = vsel %vm125, %v297, 0.0
    %302 = vadd.xlane.f32.xlu0 %v301
    %v303 = vpop.xlane.xlu0 %302
    %v304 = vmul.f32 %v300, 0.032258064
    %v305 = vmul.f32 %v303, 0.032258064
    %v306 = vrsqrt.pop %v304
    %v307 = vmul.f32 %v304, %v306
    %vm308 = vcmp.eq.f32.partialorder %v304, inf
    %v309 = vsel %vm308, %v304, %v307
    %vm310 = vcmp.eq.f32.partialorder %v304, 0.0
    %v311 = vand.u32 %v304, 2147483648
    %v312 = vsel %vm310, %v311, %v309
    %v313 = vrsqrt.pop %v305
    %v314 = vmul.f32 %v305, %v313
    %vm315 = vcmp.eq.f32.partialorder %v305, inf
    %v316 = vsel %vm315, %v305, %v314
    %vm317 = vcmp.eq.f32.partialorder %v305, 0.0
    %v318 = vand.u32 %v305, 2147483648
    %v319 = vsel %vm317, %v318, %v316
    %v320 = vadd.f32 %v312, 1e-06
    %v321 = vadd.f32 %v319, 1e-06
    %v322 = vrcp.pop %v320
    %v323 = vrcp.pop %v321
    %v324 = vmul.f32 %v294, %v322
    %v325 = vmul.f32 %v295, %v323
    %v327 = vlaneseq
    %v328 = vshrl.u32 %v327, 7
    %v329 = vsub.s32 0, %v328
    %v330 = vrot.slane %v283, %v329
    %v332 = vmul.f32 %v330, %v324
    %v333 = vmul.f32 %v330, %v325
    %v335 = vlaneseq
    %v336 = vshrl.u32 %v335, 7
    %v337 = vsub.s32 0, %v336
    %v338 = vrot.slane %v284, %v337
    %v340 = vadd.f32 %v332, %v338
    %v341 = vadd.f32 %v333, %v338
    %v342 = vld [vmem:[%s8] sm:$0xf]
    %v343 = vld [vmem:[%s8 + $0x4] sm:$0xf]
    %v344 = vld [vmem:[%s8 + $0x8] sm:$0xf]
    %v345 = vld [vmem:[%s8 + $0xc] sm:$0xf]
    %v346 = vld [vmem:[%s8 + $0x10] sm:$0xf]
    %v347 = vld [vmem:[%s8 + $0x14] sm:$0xf]
    %v348 = vld [vmem:[%s8 + $0x18] sm:$0xf]
    %v349 = vld [vmem:[%s8 + $0x1c] sm:$0xf]
    %v350 = vld [vmem:[%s9] sm:$0xf]
    %v351 = vld [vmem:[%s9 + $0x4] sm:$0xf]
    %v352 = vld [vmem:[%s9 + $0x8] sm:$0xf]
    %v353 = vld [vmem:[%s9 + $0xc] sm:$0xf]
    %v354 = vld [vmem:[%s9 + $0x10] sm:$0xf]
    %v355 = vld [vmem:[%s9 + $0x14] sm:$0xf]
    %v356 = vld [vmem:[%s9 + $0x18] sm:$0xf]
    %v357 = vld [vmem:[%s9 + $0x1c] sm:$0xf]
    %v358 = vld [vmem:[%s10] sm:$0xf]
    %v359 = vld [vmem:[%s10 + $0x4] sm:$0xf]
    %v360 = vld [vmem:[%s10 + $0x8] sm:$0xf]
    %v361 = vld [vmem:[%s10 + $0xc] sm:$0xf]
    %v362 = vld [vmem:[%s10 + $0x10] sm:$0xf]
    %v363 = vld [vmem:[%s10 + $0x14] sm:$0xf]
    %v364 = vld [vmem:[%s10 + $0x18] sm:$0xf]
    %v365 = vld [vmem:[%s10 + $0x1c] sm:$0xf]
    %v366 = vld [vmem:[%s11] sm:$0xf]
    %v367 = vld [vmem:[%s11 + $0x4] sm:$0xf]
    %v368 = vld [vmem:[%s11 + $0x8] sm:$0xf]
    %v369 = vld [vmem:[%s11 + $0xc] sm:$0xf]
    %v370 = vpack.c.bf16 %v341, %v340
    %v375 = vunpack.c.l.b16 %v342
    %v376 = vunpack.c.l.b16 %v343
    %v377 = vunpack.c.l.b16 %v344
    %v378 = vunpack.c.l.b16 %v345
    %v379 = vpack.c.b16 %v376, %v375
    %v380 = vpack.c.b16 %v378, %v377
    %v384 = vsel %vm125, %v370, 0
    %386 = vmatprep.subr.bf16.mxu0 0
    %387 = vmatpush1.bf16.msra.mxu0 %v379
    %388 = vmatprep.subr.bf16.mxu0 0
    %389 = vmatpush1.bf16.msra.mxu0 %v380
    %390 = vmatprep.subr.bf16.mxu0 0
    %391 = vmatpush1.bf16.msra.mxu0 0
    %392 = vmatprep.subr.bf16.mxu0 0
    %393 = vmatpush1.bf16.msra.mxu0 0
    %394 = vmatprep.subr.bf16.mxu0 0
    %395 = vmatpush1.bf16.msra.mxu0 0
    %396 = vmatprep.subr.bf16.mxu0 0
    %397 = vmatpush1.bf16.msra.mxu0 0
    %398 = vmatprep.subr.bf16.mxu0 0
    %399 = vmatpush1.bf16.msra.mxu0 0
    %400 = vmatprep.subr.bf16.mxu0 0
    %401 = vmatpush1.bf16.msra.mxu0 0
    %402 = vmatprep.subr.bf16.mxu0 0
    %403 = vmatpush1.bf16.msra.mxu0 0
    %404 = vmatprep.subr.bf16.mxu0 0
    %405 = vmatpush1.bf16.msra.mxu0 0
    %406 = vmatprep.subr.bf16.mxu0 0
    %407 = vmatpush1.bf16.msra.mxu0 0
    %408 = vmatprep.subr.bf16.mxu0 0
    %409 = vmatpush1.bf16.msra.mxu0 0
    %410 = vmatprep.subr.bf16.mxu0 0
    %411 = vmatpush1.bf16.msra.mxu0 0
    %412 = vmatprep.subr.bf16.mxu0 0
    %413 = vmatpush1.bf16.msra.mxu0 0
    %414 = vmatprep.subr.bf16.mxu0 0
    %415 = vmatpush1.bf16.msra.mxu0 0
    %416 = vmatprep.subr.bf16.mxu0 0
    %417 = vmatpush1.bf16.msra.mxu0 0
    %418 = vmatprep.mubr.bf16.mxu0 0
    %419 = vmatmul.mubr.bf16.gmra.mrb[0].mxu0 %v384
    %v420 = vpop.f32.mrb[0].mxu0
    %v421 = vadd.f32 0.0, %v420
    %v422 = vpop.f32.mrb[0].mxu0
    %v423 = vpop.f32.mrb[0].mxu0
    %v424 = vadd.f32 0.0, %v423
    %v425 = vpop.f32.mrb[0].mxu0
    %426 = vdwg.mxu0
    %v431 = vunpack.c.l.b16 %v346
    %v432 = vunpack.c.l.b16 %v347
    %v433 = vunpack.c.l.b16 %v348
    %v434 = vunpack.c.l.b16 %v349
    %v435 = vpack.c.b16 %v432, %v431
    %v436 = vpack.c.b16 %v434, %v433
    %439 = vmatprep.subr.bf16.mxu0 0
    %440 = vmatpush1.bf16.msra.mxu0 %v435
    %441 = vmatprep.subr.bf16.mxu0 0
    %442 = vmatpush1.bf16.msra.mxu0 %v436
    %443 = vmatprep.subr.bf16.mxu0 0
    %444 = vmatpush1.bf16.msra.mxu0 0
    %445 = vmatprep.subr.bf16.mxu0 0
    %446 = vmatpush1.bf16.msra.mxu0 0
    %447 = vmatprep.subr.bf16.mxu0 0
    %448 = vmatpush1.bf16.msra.mxu0 0
    %449 = vmatprep.subr.bf16.mxu0 0
    %450 = vmatpush1.bf16.msra.mxu0 0
    %451 = vmatprep.subr.bf16.mxu0 0
    %452 = vmatpush1.bf16.msra.mxu0 0
    %453 = vmatprep.subr.bf16.mxu0 0
    %454 = vmatpush1.bf16.msra.mxu0 0
    %455 = vmatprep.subr.bf16.mxu0 0
    %456 = vmatpush1.bf16.msra.mxu0 0
    %457 = vmatprep.subr.bf16.mxu0 0
    %458 = vmatpush1.bf16.msra.mxu0 0
    %459 = vmatprep.subr.bf16.mxu0 0
    %460 = vmatpush1.bf16.msra.mxu0 0
    %461 = vmatprep.subr.bf16.mxu0 0
    %462 = vmatpush1.bf16.msra.mxu0 0
    %463 = vmatprep.subr.bf16.mxu0 0
    %464 = vmatpush1.bf16.msra.mxu0 0
    %465 = vmatprep.subr.bf16.mxu0 0
    %466 = vmatpush1.bf16.msra.mxu0 0
    %467 = vmatprep.subr.bf16.mxu0 0
    %468 = vmatpush1.bf16.msra.mxu0 0
    %469 = vmatprep.subr.bf16.mxu0 0
    %470 = vmatpush1.bf16.msra.mxu0 0
    %471 = vmatprep.mubr.bf16.mxu0 0
    %472 = vmatmul.mubr.bf16.gmra.mrb[0].mxu0 %v384
    %v473 = vpop.f32.mrb[0].mxu0
    %v474 = vadd.f32 0.0, %v473
    %v475 = vpop.f32.mrb[0].mxu0
    %v476 = vpop.f32.mrb[0].mxu0
    %v477 = vadd.f32 0.0, %v476
    %v478 = vpop.f32.mrb[0].mxu0
    %479 = vdwg.mxu0
    %v480 = vmul.f32 %v421, 0.25
    %v481 = vmul.f32 %v424, 0.25
    %v482 = vmul.f32 %v474, 0.25
    %v483 = vmul.f32 %v477, 0.25
    %v488 = vunpack.c.l.b16 %v350
    %v489 = vunpack.c.l.b16 %v351
    %v490 = vunpack.c.l.b16 %v352
    %v491 = vunpack.c.l.b16 %v353
    %v492 = vpack.c.b16 %v489, %v488
    %v493 = vpack.c.b16 %v491, %v490
    %496 = vmatprep.subr.bf16.mxu0 0
    %497 = vmatpush1.bf16.msra.mxu0 %v492
    %498 = vmatprep.subr.bf16.mxu0 0
    %499 = vmatpush1.bf16.msra.mxu0 %v493
    %500 = vmatprep.subr.bf16.mxu0 0
    %501 = vmatpush1.bf16.msra.mxu0 0
    %502 = vmatprep.subr.bf16.mxu0 0
    %503 = vmatpush1.bf16.msra.mxu0 0
    %504 = vmatprep.subr.bf16.mxu0 0
    %505 = vmatpush1.bf16.msra.mxu0 0
    %506 = vmatprep.subr.bf16.mxu0 0
    %507 = vmatpush1.bf16.msra.mxu0 0
    %508 = vmatprep.subr.bf16.mxu0 0
    %509 = vmatpush1.bf16.msra.mxu0 0
    %510 = vmatprep.subr.bf16.mxu0 0
    %511 = vmatpush1.bf16.msra.mxu0 0
    %512 = vmatprep.subr.bf16.mxu0 0
    %513 = vmatpush1.bf16.msra.mxu0 0
    %514 = vmatprep.subr.bf16.mxu0 0
    %515 = vmatpush1.bf16.msra.mxu0 0
    %516 = vmatprep.subr.bf16.mxu0 0
    %517 = vmatpush1.bf16.msra.mxu0 0
    %518 = vmatprep.subr.bf16.mxu0 0
    %519 = vmatpush1.bf16.msra.mxu0 0
    %520 = vmatprep.subr.bf16.mxu0 0
    %521 = vmatpush1.bf16.msra.mxu0 0
    %522 = vmatprep.subr.bf16.mxu0 0
    %523 = vmatpush1.bf16.msra.mxu0 0
    %524 = vmatprep.subr.bf16.mxu0 0
    %525 = vmatpush1.bf16.msra.mxu0 0
    %526 = vmatprep.subr.bf16.mxu0 0
    %527 = vmatpush1.bf16.msra.mxu0 0
    %528 = vmatprep.mubr.bf16.mxu0 0
    %529 = vmatmul.mubr.bf16.gmra.mrb[0].mxu0 %v384
    %v530 = vpop.f32.mrb[0].mxu0
    %v531 = vadd.f32 0.0, %v530
    %v532 = vpop.f32.mrb[0].mxu0
    %v533 = vpop.f32.mrb[0].mxu0
    %v534 = vadd.f32 0.0, %v533
    %v535 = vpop.f32.mrb[0].mxu0
    %536 = vdwg.mxu0
    %v541 = vunpack.c.l.b16 %v354
    %v542 = vunpack.c.l.b16 %v355
    %v543 = vunpack.c.l.b16 %v356
    %v544 = vunpack.c.l.b16 %v357
    %v545 = vpack.c.b16 %v542, %v541
    %v546 = vpack.c.b16 %v544, %v543
    %549 = vmatprep.subr.bf16.mxu0 0
    %550 = vmatpush1.bf16.msra.mxu0 %v545
    %551 = vmatprep.subr.bf16.mxu0 0
    %552 = vmatpush1.bf16.msra.mxu0 %v546
    %553 = vmatprep.subr.bf16.mxu0 0
    %554 = vmatpush1.bf16.msra.mxu0 0
    %555 = vmatprep.subr.bf16.mxu0 0
    %556 = vmatpush1.bf16.msra.mxu0 0
    %557 = vmatprep.subr.bf16.mxu0 0
    %558 = vmatpush1.bf16.msra.mxu0 0
    %559 = vmatprep.subr.bf16.mxu0 0
    %560 = vmatpush1.bf16.msra.mxu0 0
    %561 = vmatprep.subr.bf16.mxu0 0
    %562 = vmatpush1.bf16.msra.mxu0 0
    %563 = vmatprep.subr.bf16.mxu0 0
    %564 = vmatpush1.bf16.msra.mxu0 0
    %565 = vmatprep.subr.bf16.mxu0 0
    %566 = vmatpush1.bf16.msra.mxu0 0
    %567 = vmatprep.subr.bf16.mxu0 0
    %568 = vmatpush1.bf16.msra.mxu0 0
    %569 = vmatprep.subr.bf16.mxu0 0
    %570 = vmatpush1.bf16.msra.mxu0 0
    %571 = vmatprep.subr.bf16.mxu0 0
    %572 = vmatpush1.bf16.msra.mxu0 0
    %573 = vmatprep.subr.bf16.mxu0 0
    %574 = vmatpush1.bf16.msra.mxu0 0
    %575 = vmatprep.subr.bf16.mxu0 0
    %576 = vmatpush1.bf16.msra.mxu0 0
    %577 = vmatprep.subr.bf16.mxu0 0
    %578 = vmatpush1.bf16.msra.mxu0 0
    %579 = vmatprep.subr.bf16.mxu0 0
    %580 = vmatpush1.bf16.msra.mxu0 0
    %581 = vmatprep.mubr.bf16.mxu0 0
    %582 = vmatmul.mubr.bf16.gmra.mrb[0].mxu0 %v384
    %v583 = vpop.f32.mrb[0].mxu0
    %v584 = vadd.f32 0.0, %v583
    %v585 = vpop.f32.mrb[0].mxu0
    %v586 = vpop.f32.mrb[0].mxu0
    %v587 = vadd.f32 0.0, %v586
    %v588 = vpop.f32.mrb[0].mxu0
    %589 = vdwg.mxu0
    %v594 = vunpack.c.l.b16 %v358
    %v595 = vunpack.c.l.b16 %v359
    %v596 = vunpack.c.l.b16 %v360
    %v597 = vunpack.c.l.b16 %v361
    %v598 = vpack.c.b16 %v595, %v594
    %v599 = vpack.c.b16 %v597, %v596
    %602 = vmatprep.subr.bf16.mxu0 0
    %603 = vmatpush1.bf16.msra.mxu0 %v598
    %604 = vmatprep.subr.bf16.mxu0 0
    %605 = vmatpush1.bf16.msra.mxu0 %v599
    %606 = vmatprep.subr.bf16.mxu0 0
    %607 = vmatpush1.bf16.msra.mxu0 0
    %608 = vmatprep.subr.bf16.mxu0 0
    %609 = vmatpush1.bf16.msra.mxu0 0
    %610 = vmatprep.subr.bf16.mxu0 0
    %611 = vmatpush1.bf16.msra.mxu0 0
    %612 = vmatprep.subr.bf16.mxu0 0
    %613 = vmatpush1.bf16.msra.mxu0 0
    %614 = vmatprep.subr.bf16.mxu0 0
    %615 = vmatpush1.bf16.msra.mxu0 0
    %616 = vmatprep.subr.bf16.mxu0 0
    %617 = vmatpush1.bf16.msra.mxu0 0
    %618 = vmatprep.subr.bf16.mxu0 0
    %619 = vmatpush1.bf16.msra.mxu0 0
    %620 = vmatprep.subr.bf16.mxu0 0
    %621 = vmatpush1.bf16.msra.mxu0 0
    %622 = vmatprep.subr.bf16.mxu0 0
    %623 = vmatpush1.bf16.msra.mxu0 0
    %624 = vmatprep.subr.bf16.mxu0 0
    %625 = vmatpush1.bf16.msra.mxu0 0
    %626 = vmatprep.subr.bf16.mxu0 0
    %627 = vmatpush1.bf16.msra.mxu0 0
    %628 = vmatprep.subr.bf16.mxu0 0
    %629 = vmatpush1.bf16.msra.mxu0 0
    %630 = vmatprep.subr.bf16.mxu0 0
    %631 = vmatpush1.bf16.msra.mxu0 0
    %632 = vmatprep.subr.bf16.mxu0 0
    %633 = vmatpush1.bf16.msra.mxu0 0
    %634 = vmatprep.mubr.bf16.mxu0 0
    %635 = vmatmul.mubr.bf16.gmra.mrb[0].mxu0 %v384
    %v636 = vpop.f32.mrb[0].mxu0
    %v637 = vadd.f32 0.0, %v636
    %v638 = vpop.f32.mrb[0].mxu0
    %v639 = vpop.f32.mrb[0].mxu0
    %v640 = vadd.f32 0.0, %v639
    %v641 = vpop.f32.mrb[0].mxu0
    %642 = vdwg.mxu0
    %v647 = vunpack.c.l.b16 %v362
    %v648 = vunpack.c.l.b16 %v363
    %v649 = vunpack.c.l.b16 %v364
    %v650 = vunpack.c.l.b16 %v365
    %v651 = vpack.c.b16 %v648, %v647
    %v652 = vpack.c.b16 %v650, %v649
    %655 = vmatprep.subr.bf16.mxu0 0
    %656 = vmatpush1.bf16.msra.mxu0 %v651
    %657 = vmatprep.subr.bf16.mxu0 0
    %658 = vmatpush1.bf16.msra.mxu0 %v652
    %659 = vmatprep.subr.bf16.mxu0 0
    %660 = vmatpush1.bf16.msra.mxu0 0
    %661 = vmatprep.subr.bf16.mxu0 0
    %662 = vmatpush1.bf16.msra.mxu0 0
    %663 = vmatprep.subr.bf16.mxu0 0
    %664 = vmatpush1.bf16.msra.mxu0 0
    %665 = vmatprep.subr.bf16.mxu0 0
    %666 = vmatpush1.bf16.msra.mxu0 0
    %667 = vmatprep.subr.bf16.mxu0 0
    %668 = vmatpush1.bf16.msra.mxu0 0
    %669 = vmatprep.subr.bf16.mxu0 0
    %670 = vmatpush1.bf16.msra.mxu0 0
    %671 = vmatprep.subr.bf16.mxu0 0
    %672 = vmatpush1.bf16.msra.mxu0 0
    %673 = vmatprep.subr.bf16.mxu0 0
    %674 = vmatpush1.bf16.msra.mxu0 0
    %675 = vmatprep.subr.bf16.mxu0 0
    %676 = vmatpush1.bf16.msra.mxu0 0
    %677 = vmatprep.subr.bf16.mxu0 0
    %678 = vmatpush1.bf16.msra.mxu0 0
    %679 = vmatprep.subr.bf16.mxu0 0
    %680 = vmatpush1.bf16.msra.mxu0 0
    %681 = vmatprep.subr.bf16.mxu0 0
    %682 = vmatpush1.bf16.msra.mxu0 0
    %683 = vmatprep.subr.bf16.mxu0 0
    %684 = vmatpush1.bf16.msra.mxu0 0
    %685 = vmatprep.subr.bf16.mxu0 0
    %686 = vmatpush1.bf16.msra.mxu0 0
    %687 = vmatprep.mubr.bf16.mxu0 0
    %688 = vmatmul.mubr.bf16.gmra.mrb[0].mxu0 %v384
    %v689 = vpop.f32.mrb[0].mxu0
    %v690 = vadd.f32 0.0, %v689
    %v691 = vpop.f32.mrb[0].mxu0
    %v692 = vpop.f32.mrb[0].mxu0
    %v693 = vadd.f32 0.0, %v692
    %v694 = vpop.f32.mrb[0].mxu0
    %695 = vdwg.mxu0
    %v697 = vlaneseq
    %v698 = vshrl.u32 %v697, 7
    %v699 = vsub.s32 0, %v698
    %v700 = vrot.slane %v281, %v699
    %vm702 = vcmask 130048
    %v704 = vsel %vm702, %v480, 0
    %v707 = vsel %vm702, %v531, 0
    %709 = vmatprep.subr.mxu0 0.0
    %710 = vmatpush1.xpose.msra.mxu0 %v707
    %711 = vmatprep.subr.mxu0 0.0
    %712 = vmatpush1.xpose.msra.mxu0 0.0
    %713 = vmatprep.subr.mxu0 0.0
    %714 = vmatpush1.xpose.msra.mxu0 0.0
    %715 = vmatprep.subr.mxu0 0.0
    %716 = vmatpush1.xpose.msra.mxu0 0.0
    %717 = vmatprep.subr.mxu0 0.0
    %718 = vmatpush1.xpose.msra.mxu0 0.0
    %719 = vmatprep.subr.mxu0 0.0
    %720 = vmatpush1.xpose.msra.mxu0 0.0
    %721 = vmatprep.subr.mxu0 0.0
    %722 = vmatpush1.xpose.msra.mxu0 0.0
    %723 = vmatprep.subr.mxu0 0.0
    %724 = vmatpush1.xpose.msra.mxu0 0.0
    %725 = vmatprep.subr.mxu0 0.0
    %726 = vmatpush1.xpose.msra.mxu0 0.0
    %727 = vmatprep.subr.mxu0 0.0
    %728 = vmatpush1.xpose.msra.mxu0 0.0
    %729 = vmatprep.subr.mxu0 0.0
    %730 = vmatpush1.xpose.msra.mxu0 0.0
    %731 = vmatprep.subr.mxu0 0.0
    %732 = vmatpush1.xpose.msra.mxu0 0.0
    %733 = vmatprep.subr.mxu0 0.0
    %734 = vmatpush1.xpose.msra.mxu0 0.0
    %735 = vmatprep.subr.mxu0 0.0
    %736 = vmatpush1.xpose.msra.mxu0 0.0
    %737 = vmatprep.subr.mxu0 0.0
    %738 = vmatpush1.xpose.msra.mxu0 0.0
    %739 = vmatprep.subr.mxu0 0.0
    %740 = vmatpush1.xpose.msra.mxu0 0.0
    %741 = vmatprep.subr.mxu0 0.0
    %742 = vmatpush1.xpose.msra.mxu0 0.0
    %743 = vmatprep.subr.mxu0 0.0
    %744 = vmatpush1.xpose.msra.mxu0 0.0
    %745 = vmatprep.subr.mxu0 0.0
    %746 = vmatpush1.xpose.msra.mxu0 0.0
    %747 = vmatprep.subr.mxu0 0.0
    %748 = vmatpush1.xpose.msra.mxu0 0.0
    %749 = vmatprep.subr.mxu0 0.0
    %750 = vmatpush1.xpose.msra.mxu0 0.0
    %751 = vmatprep.subr.mxu0 0.0
    %752 = vmatpush1.xpose.msra.mxu0 0.0
    %753 = vmatprep.subr.mxu0 0.0
    %754 = vmatpush1.xpose.msra.mxu0 0.0
    %755 = vmatprep.subr.mxu0 0.0
    %756 = vmatpush1.xpose.msra.mxu0 0.0
    %757 = vmatprep.subr.mxu0 0.0
    %758 = vmatpush1.xpose.msra.mxu0 0.0
    %759 = vmatprep.subr.mxu0 0.0
    %760 = vmatpush1.xpose.msra.mxu0 0.0
    %761 = vmatprep.subr.mxu0 0.0
    %762 = vmatpush1.xpose.msra.mxu0 0.0
    %763 = vmatprep.subr.mxu0 0.0
    %764 = vmatpush1.xpose.msra.mxu0 0.0
    %765 = vmatprep.subr.mxu0 0.0
    %766 = vmatpush1.xpose.msra.mxu0 0.0
    %767 = vmatprep.subr.mxu0 0.0
    %768 = vmatpush1.xpose.msra.mxu0 0.0
    %769 = vmatprep.subr.mxu0 0.0
    %770 = vmatpush1.xpose.msra.mxu0 0.0
    %771 = vmatprep.subr.mxu0 0.0
    %772 = vmatpush1.xpose.msra.mxu0 0.0
    %773 = vmatprep.mubr.f32.mxu0 0.0
    %774 = vmatmul.mubr.f32.gmra.mrb[0].mxu0 %v704
    %v775 = vpop.f32.mrb[0].mxu0
    %v776 = vadd.f32 %v700, %v775
    %v777 = vpop.f32.mrb[0].mxu0
    %778 = vdwg.mxu0
    %v780 = vsel %vm702, %v482, 0
    %v783 = vsel %vm702, %v584, 0
    %785 = vmatprep.subr.mxu0 0.0
    %786 = vmatpush1.xpose.msra.mxu0 %v783
    %787 = vmatprep.subr.mxu0 0.0
    %788 = vmatpush1.xpose.msra.mxu0 0.0
    %789 = vmatprep.subr.mxu0 0.0
    %790 = vmatpush1.xpose.msra.mxu0 0.0
    %791 = vmatprep.subr.mxu0 0.0
    %792 = vmatpush1.xpose.msra.mxu0 0.0
    %793 = vmatprep.subr.mxu0 0.0
    %794 = vmatpush1.xpose.msra.mxu0 0.0
    %795 = vmatprep.subr.mxu0 0.0
    %796 = vmatpush1.xpose.msra.mxu0 0.0
    %797 = vmatprep.subr.mxu0 0.0
    %798 = vmatpush1.xpose.msra.mxu0 0.0
    %799 = vmatprep.subr.mxu0 0.0
    %800 = vmatpush1.xpose.msra.mxu0 0.0
    %801 = vmatprep.subr.mxu0 0.0
    %802 = vmatpush1.xpose.msra.mxu0 0.0
    %803 = vmatprep.subr.mxu0 0.0
    %804 = vmatpush1.xpose.msra.mxu0 0.0
    %805 = vmatprep.subr.mxu0 0.0
    %806 = vmatpush1.xpose.msra.mxu0 0.0
    %807 = vmatprep.subr.mxu0 0.0
    %808 = vmatpush1.xpose.msra.mxu0 0.0
    %809 = vmatprep.subr.mxu0 0.0
    %810 = vmatpush1.xpose.msra.mxu0 0.0
    %811 = vmatprep.subr.mxu0 0.0
    %812 = vmatpush1.xpose.msra.mxu0 0.0
    %813 = vmatprep.subr.mxu0 0.0
    %814 = vmatpush1.xpose.msra.mxu0 0.0
    %815 = vmatprep.subr.mxu0 0.0
    %816 = vmatpush1.xpose.msra.mxu0 0.0
    %817 = vmatprep.subr.mxu0 0.0
    %818 = vmatpush1.xpose.msra.mxu0 0.0
    %819 = vmatprep.subr.mxu0 0.0
    %820 = vmatpush1.xpose.msra.mxu0 0.0
    %821 = vmatprep.subr.mxu0 0.0
    %822 = vmatpush1.xpose.msra.mxu0 0.0
    %823 = vmatprep.subr.mxu0 0.0
    %824 = vmatpush1.xpose.msra.mxu0 0.0
    %825 = vmatprep.subr.mxu0 0.0
    %826 = vmatpush1.xpose.msra.mxu0 0.0
    %827 = vmatprep.subr.mxu0 0.0
    %828 = vmatpush1.xpose.msra.mxu0 0.0
    %829 = vmatprep.subr.mxu0 0.0
    %830 = vmatpush1.xpose.msra.mxu0 0.0
    %831 = vmatprep.subr.mxu0 0.0
    %832 = vmatpush1.xpose.msra.mxu0 0.0
    %833 = vmatprep.subr.mxu0 0.0
    %834 = vmatpush1.xpose.msra.mxu0 0.0
    %835 = vmatprep.subr.mxu0 0.0
    %836 = vmatpush1.xpose.msra.mxu0 0.0
    %837 = vmatprep.subr.mxu0 0.0
    %838 = vmatpush1.xpose.msra.mxu0 0.0
    %839 = vmatprep.subr.mxu0 0.0
    %840 = vmatpush1.xpose.msra.mxu0 0.0
    %841 = vmatprep.subr.mxu0 0.0
    %842 = vmatpush1.xpose.msra.mxu0 0.0
    %843 = vmatprep.subr.mxu0 0.0
    %844 = vmatpush1.xpose.msra.mxu0 0.0
    %845 = vmatprep.subr.mxu0 0.0
    %846 = vmatpush1.xpose.msra.mxu0 0.0
    %847 = vmatprep.subr.mxu0 0.0
    %848 = vmatpush1.xpose.msra.mxu0 0.0
    %849 = vmatprep.mubr.f32.mxu0 0.0
    %850 = vmatmul.mubr.f32.gmra.mrb[0].mxu0 %v780
    %v851 = vpop.f32.mrb[0].mxu0
    %v852 = vadd.f32 %v700, %v851
    %v853 = vpop.f32.mrb[0].mxu0
    %854 = vdwg.mxu0
    %vm855 = vcmask 64512
    %v856 = vsel %vm855, %v776, -inf
    %857 = vmax.xlane.f32.xlu0 %v856
    %v858 = vpop.xlane.xlu0 %857
    %v859 = vsel %vm855, %v852, -inf
    %860 = vmax.xlane.f32.xlu0 %v859
    %v861 = vpop.xlane.xlu0 %860
    %v862 = vsub.f32 %v776, %v858
    %v863 = vsub.f32 %v852, %v861
    %v864 = vmul.f32 %v862, 1.442695
    %v865 = vpow.pop %v864
    %v866 = vmul.f32 %v863, 1.442695
    %v867 = vpow.pop %v866
    %v868 = vsel %vm855, %v865, 0.0
    %869 = vadd.xlane.f32.xlu0 %v868
    %v870 = vpop.xlane.xlu0 %869
    %v871 = vsel %vm855, %v867, 0.0
    %872 = vadd.xlane.f32.xlu0 %v871
    %v873 = vpop.xlane.xlu0 %872
    %v874 = vrcp.pop %v870
    %v875 = vrcp.pop %v873
    %v876 = vmul.f32 %v865, %v874
    %v877 = vmul.f32 %v867, %v875
    %v879 = vsel %vm855, %v876, 0
    %881 = vmatprep.subr.mxu0 0.0
    %882 = vmatpush1.msra.mxu0 %v637
    %883 = vmatprep.subr.mxu0 0.0
    %884 = vmatpush1.msra.mxu0 0.0
    %885 = vmatprep.subr.mxu0 0.0
    %886 = vmatpush1.msra.mxu0 0.0
    %887 = vmatprep.subr.mxu0 0.0
    %888 = vmatpush1.msra.mxu0 0.0
    %889 = vmatprep.subr.mxu0 0.0
    %890 = vmatpush1.msra.mxu0 0.0
    %891 = vmatprep.subr.mxu0 0.0
    %892 = vmatpush1.msra.mxu0 0.0
    %893 = vmatprep.subr.mxu0 0.0
    %894 = vmatpush1.msra.mxu0 0.0
    %895 = vmatprep.subr.mxu0 0.0
    %896 = vmatpush1.msra.mxu0 0.0
    %897 = vmatprep.subr.mxu0 0.0
    %898 = vmatpush1.msra.mxu0 0.0
    %899 = vmatprep.subr.mxu0 0.0
    %900 = vmatpush1.msra.mxu0 0.0
    %901 = vmatprep.subr.mxu0 0.0
    %902 = vmatpush1.msra.mxu0 0.0
    %903 = vmatprep.subr.mxu0 0.0
    %904 = vmatpush1.msra.mxu0 0.0
    %905 = vmatprep.subr.mxu0 0.0
    %906 = vmatpush1.msra.mxu0 0.0
    %907 = vmatprep.subr.mxu0 0.0
    %908 = vmatpush1.msra.mxu0 0.0
    %909 = vmatprep.subr.mxu0 0.0
    %910 = vmatpush1.msra.mxu0 0.0
    %911 = vmatprep.subr.mxu0 0.0
    %912 = vmatpush1.msra.mxu0 0.0
    %913 = vmatprep.subr.mxu0 0.0
    %914 = vmatpush1.msra.mxu0 0.0
    %915 = vmatprep.subr.mxu0 0.0
    %916 = vmatpush1.msra.mxu0 0.0
    %917 = vmatprep.subr.mxu0 0.0
    %918 = vmatpush1.msra.mxu0 0.0
    %919 = vmatprep.subr.mxu0 0.0
    %920 = vmatpush1.msra.mxu0 0.0
    %921 = vmatprep.subr.mxu0 0.0
    %922 = vmatpush1.msra.mxu0 0.0
    %923 = vmatprep.subr.mxu0 0.0
    %924 = vmatpush1.msra.mxu0 0.0
    %925 = vmatprep.subr.mxu0 0.0
    %926 = vmatpush1.msra.mxu0 0.0
    %927 = vmatprep.subr.mxu0 0.0
    %928 = vmatpush1.msra.mxu0 0.0
    %929 = vmatprep.subr.mxu0 0.0
    %930 = vmatpush1.msra.mxu0 0.0
    %931 = vmatprep.subr.mxu0 0.0
    %932 = vmatpush1.msra.mxu0 0.0
    %933 = vmatprep.subr.mxu0 0.0
    %934 = vmatpush1.msra.mxu0 0.0
    %935 = vmatprep.subr.mxu0 0.0
    %936 = vmatpush1.msra.mxu0 0.0
    %937 = vmatprep.subr.mxu0 0.0
    %938 = vmatpush1.msra.mxu0 0.0
    %939 = vmatprep.subr.mxu0 0.0
    %940 = vmatpush1.msra.mxu0 0.0
    %941 = vmatprep.subr.mxu0 0.0
    %942 = vmatpush1.msra.mxu0 0.0
    %943 = vmatprep.subr.mxu0 0.0
    %944 = vmatpush1.msra.mxu0 0.0
    %945 = vmatprep.mubr.f32.mxu0 0.0
    %946 = vmatmul.mubr.f32.gmra.mrb[0].mxu0 %v879
    %v947 = vpop.f32.mrb[0].mxu0
    %v948 = vadd.f32 0.0, %v947
    %v949 = vpop.f32.mrb[0].mxu0
    %950 = vdwg.mxu0
    %v952 = vsel %vm855, %v877, 0
    %954 = vmatprep.subr.mxu0 0.0
    %955 = vmatpush1.msra.mxu0 %v690
    %956 = vmatprep.subr.mxu0 0.0
    %957 = vmatpush1.msra.mxu0 0.0
    %958 = vmatprep.subr.mxu0 0.0
    %959 = vmatpush1.msra.mxu0 0.0
    %960 = vmatprep.subr.mxu0 0.0
    %961 = vmatpush1.msra.mxu0 0.0
    %962 = vmatprep.subr.mxu0 0.0
    %963 = vmatpush1.msra.mxu0 0.0
    %964 = vmatprep.subr.mxu0 0.0
    %965 = vmatpush1.msra.mxu0 0.0
    %966 = vmatprep.subr.mxu0 0.0
    %967 = vmatpush1.msra.mxu0 0.0
    %968 = vmatprep.subr.mxu0 0.0
    %969 = vmatpush1.msra.mxu0 0.0
    %970 = vmatprep.subr.mxu0 0.0
    %971 = vmatpush1.msra.mxu0 0.0
    %972 = vmatprep.subr.mxu0 0.0
    %973 = vmatpush1.msra.mxu0 0.0
    %974 = vmatprep.subr.mxu0 0.0
    %975 = vmatpush1.msra.mxu0 0.0
    %976 = vmatprep.subr.mxu0 0.0
    %977 = vmatpush1.msra.mxu0 0.0
    %978 = vmatprep.subr.mxu0 0.0
    %979 = vmatpush1.msra.mxu0 0.0
    %980 = vmatprep.subr.mxu0 0.0
    %981 = vmatpush1.msra.mxu0 0.0
    %982 = vmatprep.subr.mxu0 0.0
    %983 = vmatpush1.msra.mxu0 0.0
    %984 = vmatprep.subr.mxu0 0.0
    %985 = vmatpush1.msra.mxu0 0.0
    %986 = vmatprep.subr.mxu0 0.0
    %987 = vmatpush1.msra.mxu0 0.0
    %988 = vmatprep.subr.mxu0 0.0
    %989 = vmatpush1.msra.mxu0 0.0
    %990 = vmatprep.subr.mxu0 0.0
    %991 = vmatpush1.msra.mxu0 0.0
    %992 = vmatprep.subr.mxu0 0.0
    %993 = vmatpush1.msra.mxu0 0.0
    %994 = vmatprep.subr.mxu0 0.0
    %995 = vmatpush1.msra.mxu0 0.0
    %996 = vmatprep.subr.mxu0 0.0
    %997 = vmatpush1.msra.mxu0 0.0
    %998 = vmatprep.subr.mxu0 0.0
    %999 = vmatpush1.msra.mxu0 0.0
    %1000 = vmatprep.subr.mxu0 0.0
    %1001 = vmatpush1.msra.mxu0 0.0
    %1002 = vmatprep.subr.mxu0 0.0
    %1003 = vmatpush1.msra.mxu0 0.0
    %1004 = vmatprep.subr.mxu0 0.0
    %1005 = vmatpush1.msra.mxu0 0.0
    %1006 = vmatprep.subr.mxu0 0.0
    %1007 = vmatpush1.msra.mxu0 0.0
    %1008 = vmatprep.subr.mxu0 0.0
    %1009 = vmatpush1.msra.mxu0 0.0
    %1010 = vmatprep.subr.mxu0 0.0
    %1011 = vmatpush1.msra.mxu0 0.0
    %1012 = vmatprep.subr.mxu0 0.0
    %1013 = vmatpush1.msra.mxu0 0.0
    %1014 = vmatprep.subr.mxu0 0.0
    %1015 = vmatpush1.msra.mxu0 0.0
    %1016 = vmatprep.subr.mxu0 0.0
    %1017 = vmatpush1.msra.mxu0 0.0
    %1018 = vmatprep.mubr.f32.mxu0 0.0
    %1019 = vmatmul.mubr.f32.gmra.mrb[0].mxu0 %v952
    %v1020 = vpop.f32.mrb[0].mxu0
    %v1021 = vadd.f32 0.0, %v1020
    %v1022 = vpop.f32.mrb[0].mxu0
    %1023 = vdwg.mxu0
    %v1025 = vlaneseq
    %v1026 = vshrl.u32 %v1025, 7
    %v1027 = vsub.s32 0, %v1026
    %v1028 = vrot.slane %v282, %v1027
    %v1031 = vsel %vm702, %v481, 0
    %v1034 = vsel %vm702, %v534, 0
    %1036 = vmatprep.subr.mxu0 0.0
    %1037 = vmatpush1.xpose.msra.mxu0 %v1034
    %1038 = vmatprep.subr.mxu0 0.0
    %1039 = vmatpush1.xpose.msra.mxu0 0.0
    %1040 = vmatprep.subr.mxu0 0.0
    %1041 = vmatpush1.xpose.msra.mxu0 0.0
    %1042 = vmatprep.subr.mxu0 0.0
    %1043 = vmatpush1.xpose.msra.mxu0 0.0
    %1044 = vmatprep.subr.mxu0 0.0
    %1045 = vmatpush1.xpose.msra.mxu0 0.0
    %1046 = vmatprep.subr.mxu0 0.0
    %1047 = vmatpush1.xpose.msra.mxu0 0.0
    %1048 = vmatprep.subr.mxu0 0.0
    %1049 = vmatpush1.xpose.msra.mxu0 0.0
    %1050 = vmatprep.subr.mxu0 0.0
    %1051 = vmatpush1.xpose.msra.mxu0 0.0
    %1052 = vmatprep.subr.mxu0 0.0
    %1053 = vmatpush1.xpose.msra.mxu0 0.0
    %1054 = vmatprep.subr.mxu0 0.0
    %1055 = vmatpush1.xpose.msra.mxu0 0.0
    %1056 = vmatprep.subr.mxu0 0.0
    %1057 = vmatpush1.xpose.msra.mxu0 0.0
    %1058 = vmatprep.subr.mxu0 0.0
    %1059 = vmatpush1.xpose.msra.mxu0 0.0
    %1060 = vmatprep.subr.mxu0 0.0
    %1061 = vmatpush1.xpose.msra.mxu0 0.0
    %1062 = vmatprep.subr.mxu0 0.0
    %1063 = vmatpush1.xpose.msra.mxu0 0.0
    %1064 = vmatprep.subr.mxu0 0.0
    %1065 = vmatpush1.xpose.msra.mxu0 0.0
    %1066 = vmatprep.subr.mxu0 0.0
    %1067 = vmatpush1.xpose.msra.mxu0 0.0
    %1068 = vmatprep.subr.mxu0 0.0
    %1069 = vmatpush1.xpose.msra.mxu0 0.0
    %1070 = vmatprep.subr.mxu0 0.0
    %1071 = vmatpush1.xpose.msra.mxu0 0.0
    %1072 = vmatprep.subr.mxu0 0.0
    %1073 = vmatpush1.xpose.msra.mxu0 0.0
    %1074 = vmatprep.subr.mxu0 0.0
    %1075 = vmatpush1.xpose.msra.mxu0 0.0
    %1076 = vmatprep.subr.mxu0 0.0
    %1077 = vmatpush1.xpose.msra.mxu0 0.0
    %1078 = vmatprep.subr.mxu0 0.0
    %1079 = vmatpush1.xpose.msra.mxu0 0.0
    %1080 = vmatprep.subr.mxu0 0.0
    %1081 = vmatpush1.xpose.msra.mxu0 0.0
    %1082 = vmatprep.subr.mxu0 0.0
    %1083 = vmatpush1.xpose.msra.mxu0 0.0
    %1084 = vmatprep.subr.mxu0 0.0
    %1085 = vmatpush1.xpose.msra.mxu0 0.0
    %1086 = vmatprep.subr.mxu0 0.0
    %1087 = vmatpush1.xpose.msra.mxu0 0.0
    %1088 = vmatprep.subr.mxu0 0.0
    %1089 = vmatpush1.xpose.msra.mxu0 0.0
    %1090 = vmatprep.subr.mxu0 0.0
    %1091 = vmatpush1.xpose.msra.mxu0 0.0
    %1092 = vmatprep.subr.mxu0 0.0
    %1093 = vmatpush1.xpose.msra.mxu0 0.0
    %1094 = vmatprep.subr.mxu0 0.0
    %1095 = vmatpush1.xpose.msra.mxu0 0.0
    %1096 = vmatprep.subr.mxu0 0.0
    %1097 = vmatpush1.xpose.msra.mxu0 0.0
    %1098 = vmatprep.subr.mxu0 0.0
    %1099 = vmatpush1.xpose.msra.mxu0 0.0
    %1100 = vmatprep.mubr.f32.mxu0 0.0
    %1101 = vmatmul.mubr.f32.gmra.mrb[0].mxu0 %v1031
    %v1102 = vpop.f32.mrb[0].mxu0
    %v1103 = vadd.f32 %v1028, %v1102
    %v1104 = vpop.f32.mrb[0].mxu0
    %1105 = vdwg.mxu0
    %v1107 = vsel %vm702, %v483, 0
    %v1110 = vsel %vm702, %v587, 0
    %1112 = vmatprep.subr.mxu0 0.0
    %1113 = vmatpush1.xpose.msra.mxu0 %v1110
    %1114 = vmatprep.subr.mxu0 0.0
    %1115 = vmatpush1.xpose.msra.mxu0 0.0
    %1116 = vmatprep.subr.mxu0 0.0
    %1117 = vmatpush1.xpose.msra.mxu0 0.0
    %1118 = vmatprep.subr.mxu0 0.0
    %1119 = vmatpush1.xpose.msra.mxu0 0.0
    %1120 = vmatprep.subr.mxu0 0.0
    %1121 = vmatpush1.xpose.msra.mxu0 0.0
    %1122 = vmatprep.subr.mxu0 0.0
    %1123 = vmatpush1.xpose.msra.mxu0 0.0
    %1124 = vmatprep.subr.mxu0 0.0
    %1125 = vmatpush1.xpose.msra.mxu0 0.0
    %1126 = vmatprep.subr.mxu0 0.0
    %1127 = vmatpush1.xpose.msra.mxu0 0.0
    %1128 = vmatprep.subr.mxu0 0.0
    %1129 = vmatpush1.xpose.msra.mxu0 0.0
    %1130 = vmatprep.subr.mxu0 0.0
    %1131 = vmatpush1.xpose.msra.mxu0 0.0
    %1132 = vmatprep.subr.mxu0 0.0
    %1133 = vmatpush1.xpose.msra.mxu0 0.0
    %1134 = vmatprep.subr.mxu0 0.0
    %1135 = vmatpush1.xpose.msra.mxu0 0.0
    %1136 = vmatprep.subr.mxu0 0.0
    %1137 = vmatpush1.xpose.msra.mxu0 0.0
    %1138 = vmatprep.subr.mxu0 0.0
    %1139 = vmatpush1.xpose.msra.mxu0 0.0
    %1140 = vmatprep.subr.mxu0 0.0
    %1141 = vmatpush1.xpose.msra.mxu0 0.0
    %1142 = vmatprep.subr.mxu0 0.0
    %1143 = vmatpush1.xpose.msra.mxu0 0.0
    %1144 = vmatprep.subr.mxu0 0.0
    %1145 = vmatpush1.xpose.msra.mxu0 0.0
    %1146 = vmatprep.subr.mxu0 0.0
    %1147 = vmatpush1.xpose.msra.mxu0 0.0
    %1148 = vmatprep.subr.mxu0 0.0
    %1149 = vmatpush1.xpose.msra.mxu0 0.0
    %1150 = vmatprep.subr.mxu0 0.0
    %1151 = vmatpush1.xpose.msra.mxu0 0.0
    %1152 = vmatprep.subr.mxu0 0.0
    %1153 = vmatpush1.xpose.msra.mxu0 0.0
    %1154 = vmatprep.subr.mxu0 0.0
    %1155 = vmatpush1.xpose.msra.mxu0 0.0
    %1156 = vmatprep.subr.mxu0 0.0
    %1157 = vmatpush1.xpose.msra.mxu0 0.0
    %1158 = vmatprep.subr.mxu0 0.0
    %1159 = vmatpush1.xpose.msra.mxu0 0.0
    %1160 = vmatprep.subr.mxu0 0.0
    %1161 = vmatpush1.xpose.msra.mxu0 0.0
    %1162 = vmatprep.subr.mxu0 0.0
    %1163 = vmatpush1.xpose.msra.mxu0 0.0
    %1164 = vmatprep.subr.mxu0 0.0
    %1165 = vmatpush1.xpose.msra.mxu0 0.0
    %1166 = vmatprep.subr.mxu0 0.0
    %1167 = vmatpush1.xpose.msra.mxu0 0.0
    %1168 = vmatprep.subr.mxu0 0.0
    %1169 = vmatpush1.xpose.msra.mxu0 0.0
    %1170 = vmatprep.subr.mxu0 0.0
    %1171 = vmatpush1.xpose.msra.mxu0 0.0
    %1172 = vmatprep.subr.mxu0 0.0
    %1173 = vmatpush1.xpose.msra.mxu0 0.0
    %1174 = vmatprep.subr.mxu0 0.0
    %1175 = vmatpush1.xpose.msra.mxu0 0.0
    %1176 = vmatprep.mubr.f32.mxu0 0.0
    %1177 = vmatmul.mubr.f32.gmra.mrb[0].mxu0 %v1107
    %v1178 = vpop.f32.mrb[0].mxu0
    %v1179 = vadd.f32 %v1028, %v1178
    %v1180 = vpop.f32.mrb[0].mxu0
    %1181 = vdwg.mxu0
    %v1182 = vsel %vm855, %v1103, -inf
    %1183 = vmax.xlane.f32.xlu0 %v1182
    %v1184 = vpop.xlane.xlu0 %1183
    %v1185 = vsel %vm855, %v1179, -inf
    %1186 = vmax.xlane.f32.xlu0 %v1185
    %v1187 = vpop.xlane.xlu0 %1186
    %v1188 = vsub.f32 %v1103, %v1184
    %v1189 = vsub.f32 %v1179, %v1187
    %v1190 = vmul.f32 %v1188, 1.442695
    %v1191 = vpow.pop %v1190
    %v1192 = vmul.f32 %v1189, 1.442695
    %v1193 = vpow.pop %v1192
    %v1194 = vsel %vm855, %v1191, 0.0
    %1195 = vadd.xlane.f32.xlu0 %v1194
    %v1196 = vpop.xlane.xlu0 %1195
    %v1197 = vsel %vm855, %v1193, 0.0
    %1198 = vadd.xlane.f32.xlu0 %v1197
    %v1199 = vpop.xlane.xlu0 %1198
    %v1200 = vrcp.pop %v1196
    %v1201 = vrcp.pop %v1199
    %v1202 = vmul.f32 %v1191, %v1200
    %v1203 = vmul.f32 %v1193, %v1201
    %v1205 = vsel %vm855, %v1202, 0
    %1207 = vmatprep.subr.mxu0 0.0
    %1208 = vmatpush1.msra.mxu0 %v640
    %1209 = vmatprep.subr.mxu0 0.0
    %1210 = vmatpush1.msra.mxu0 0.0
    %1211 = vmatprep.subr.mxu0 0.0
    %1212 = vmatpush1.msra.mxu0 0.0
    %1213 = vmatprep.subr.mxu0 0.0
    %1214 = vmatpush1.msra.mxu0 0.0
    %1215 = vmatprep.subr.mxu0 0.0
    %1216 = vmatpush1.msra.mxu0 0.0
    %1217 = vmatprep.subr.mxu0 0.0
    %1218 = vmatpush1.msra.mxu0 0.0
    %1219 = vmatprep.subr.mxu0 0.0
    %1220 = vmatpush1.msra.mxu0 0.0
    %1221 = vmatprep.subr.mxu0 0.0
    %1222 = vmatpush1.msra.mxu0 0.0
    %1223 = vmatprep.subr.mxu0 0.0
    %1224 = vmatpush1.msra.mxu0 0.0
    %1225 = vmatprep.subr.mxu0 0.0
    %1226 = vmatpush1.msra.mxu0 0.0
    %1227 = vmatprep.subr.mxu0 0.0
    %1228 = vmatpush1.msra.mxu0 0.0
    %1229 = vmatprep.subr.mxu0 0.0
    %1230 = vmatpush1.msra.mxu0 0.0
    %1231 = vmatprep.subr.mxu0 0.0
    %1232 = vmatpush1.msra.mxu0 0.0
    %1233 = vmatprep.subr.mxu0 0.0
    %1234 = vmatpush1.msra.mxu0 0.0
    %1235 = vmatprep.subr.mxu0 0.0
    %1236 = vmatpush1.msra.mxu0 0.0
    %1237 = vmatprep.subr.mxu0 0.0
    %1238 = vmatpush1.msra.mxu0 0.0
    %1239 = vmatprep.subr.mxu0 0.0
    %1240 = vmatpush1.msra.mxu0 0.0
    %1241 = vmatprep.subr.mxu0 0.0
    %1242 = vmatpush1.msra.mxu0 0.0
    %1243 = vmatprep.subr.mxu0 0.0
    %1244 = vmatpush1.msra.mxu0 0.0
    %1245 = vmatprep.subr.mxu0 0.0
    %1246 = vmatpush1.msra.mxu0 0.0
    %1247 = vmatprep.subr.mxu0 0.0
    %1248 = vmatpush1.msra.mxu0 0.0
    %1249 = vmatprep.subr.mxu0 0.0
    %1250 = vmatpush1.msra.mxu0 0.0
    %1251 = vmatprep.subr.mxu0 0.0
    %1252 = vmatpush1.msra.mxu0 0.0
    %1253 = vmatprep.subr.mxu0 0.0
    %1254 = vmatpush1.msra.mxu0 0.0
    %1255 = vmatprep.subr.mxu0 0.0
    %1256 = vmatpush1.msra.mxu0 0.0
    %1257 = vmatprep.subr.mxu0 0.0
    %1258 = vmatpush1.msra.mxu0 0.0
    %1259 = vmatprep.subr.mxu0 0.0
    %1260 = vmatpush1.msra.mxu0 0.0
    %1261 = vmatprep.subr.mxu0 0.0
    %1262 = vmatpush1.msra.mxu0 0.0
    %1263 = vmatprep.subr.mxu0 0.0
    %1264 = vmatpush1.msra.mxu0 0.0
    %1265 = vmatprep.subr.mxu0 0.0
    %1266 = vmatpush1.msra.mxu0 0.0
    %1267 = vmatprep.subr.mxu0 0.0
    %1268 = vmatpush1.msra.mxu0 0.0
    %1269 = vmatprep.subr.mxu0 0.0
    %1270 = vmatpush1.msra.mxu0 0.0
    %1271 = vmatprep.mubr.f32.mxu0 0.0
    %1272 = vmatmul.mubr.f32.gmra.mrb[0].mxu0 %v1205
    %v1273 = vpop.f32.mrb[0].mxu0
    %v1274 = vadd.f32 0.0, %v1273
    %v1275 = vpop.f32.mrb[0].mxu0
    %1276 = vdwg.mxu0
    %v1278 = vsel %vm855, %v1203, 0
    %1280 = vmatprep.subr.mxu0 0.0
    %1281 = vmatpush1.msra.mxu0 %v693
    %1282 = vmatprep.subr.mxu0 0.0
    %1283 = vmatpush1.msra.mxu0 0.0
    %1284 = vmatprep.subr.mxu0 0.0
    %1285 = vmatpush1.msra.mxu0 0.0
    %1286 = vmatprep.subr.mxu0 0.0
    %1287 = vmatpush1.msra.mxu0 0.0
    %1288 = vmatprep.subr.mxu0 0.0
    %1289 = vmatpush1.msra.mxu0 0.0
    %1290 = vmatprep.subr.mxu0 0.0
    %1291 = vmatpush1.msra.mxu0 0.0
    %1292 = vmatprep.subr.mxu0 0.0
    %1293 = vmatpush1.msra.mxu0 0.0
    %1294 = vmatprep.subr.mxu0 0.0
    %1295 = vmatpush1.msra.mxu0 0.0
    %1296 = vmatprep.subr.mxu0 0.0
    %1297 = vmatpush1.msra.mxu0 0.0
    %1298 = vmatprep.subr.mxu0 0.0
    %1299 = vmatpush1.msra.mxu0 0.0
    %1300 = vmatprep.subr.mxu0 0.0
    %1301 = vmatpush1.msra.mxu0 0.0
    %1302 = vmatprep.subr.mxu0 0.0
    %1303 = vmatpush1.msra.mxu0 0.0
    %1304 = vmatprep.subr.mxu0 0.0
    %1305 = vmatpush1.msra.mxu0 0.0
    %1306 = vmatprep.subr.mxu0 0.0
    %1307 = vmatpush1.msra.mxu0 0.0
    %1308 = vmatprep.subr.mxu0 0.0
    %1309 = vmatpush1.msra.mxu0 0.0
    %1310 = vmatprep.subr.mxu0 0.0
    %1311 = vmatpush1.msra.mxu0 0.0
    %1312 = vmatprep.subr.mxu0 0.0
    %1313 = vmatpush1.msra.mxu0 0.0
    %1314 = vmatprep.subr.mxu0 0.0
    %1315 = vmatpush1.msra.mxu0 0.0
    %1316 = vmatprep.subr.mxu0 0.0
    %1317 = vmatpush1.msra.mxu0 0.0
    %1318 = vmatprep.subr.mxu0 0.0
    %1319 = vmatpush1.msra.mxu0 0.0
    %1320 = vmatprep.subr.mxu0 0.0
    %1321 = vmatpush1.msra.mxu0 0.0
    %1322 = vmatprep.subr.mxu0 0.0
    %1323 = vmatpush1.msra.mxu0 0.0
    %1324 = vmatprep.subr.mxu0 0.0
    %1325 = vmatpush1.msra.mxu0 0.0
    %1326 = vmatprep.subr.mxu0 0.0
    %1327 = vmatpush1.msra.mxu0 0.0
    %1328 = vmatprep.subr.mxu0 0.0
    %1329 = vmatpush1.msra.mxu0 0.0
    %1330 = vmatprep.subr.mxu0 0.0
    %1331 = vmatpush1.msra.mxu0 0.0
    %1332 = vmatprep.subr.mxu0 0.0
    %1333 = vmatpush1.msra.mxu0 0.0
    %1334 = vmatprep.subr.mxu0 0.0
    %1335 = vmatpush1.msra.mxu0 0.0
    %1336 = vmatprep.subr.mxu0 0.0
    %1337 = vmatpush1.msra.mxu0 0.0
    %1338 = vmatprep.subr.mxu0 0.0
    %1339 = vmatpush1.msra.mxu0 0.0
    %1340 = vmatprep.subr.mxu0 0.0
    %1341 = vmatpush1.msra.mxu0 0.0
    %1342 = vmatprep.subr.mxu0 0.0
    %1343 = vmatpush1.msra.mxu0 0.0
    %1344 = vmatprep.mubr.f32.mxu0 0.0
    %1345 = vmatmul.mubr.f32.gmra.mrb[0].mxu0 %v1278
    %v1346 = vpop.f32.mrb[0].mxu0
    %v1347 = vadd.f32 0.0, %v1346
    %v1348 = vpop.f32.mrb[0].mxu0
    %1349 = vdwg.mxu0
    %v1350 = vpack.c.bf16 %v1274, %v948
    %v1351 = vpack.c.bf16 %v1347, %v1021
    %v1354 = vunpack.c.l.b16 %v366
    %v1355 = vunpack.c.l.b16 %v367
    %v1356 = vpack.c.b16 %v1355, %v1354
    %v1359 = vsel %vm702, %v1350, 0
    %1361 = vmatprep.subr.bf16.mxu0 0
    %1362 = vmatpush1.bf16.msra.mxu0 %v1356
    %1363 = vmatprep.subr.bf16.mxu0 0
    %1364 = vmatpush1.bf16.msra.mxu0 0
    %1365 = vmatprep.subr.bf16.mxu0 0
    %1366 = vmatpush1.bf16.msra.mxu0 0
    %1367 = vmatprep.subr.bf16.mxu0 0
    %1368 = vmatpush1.bf16.msra.mxu0 0
    %1369 = vmatprep.subr.bf16.mxu0 0
    %1370 = vmatpush1.bf16.msra.mxu0 0
    %1371 = vmatprep.subr.bf16.mxu0 0
    %1372 = vmatpush1.bf16.msra.mxu0 0
    %1373 = vmatprep.subr.bf16.mxu0 0
    %1374 = vmatpush1.bf16.msra.mxu0 0
    %1375 = vmatprep.subr.bf16.mxu0 0
    %1376 = vmatpush1.bf16.msra.mxu0 0
    %1377 = vmatprep.subr.bf16.mxu0 0
    %1378 = vmatpush1.bf16.msra.mxu0 0
    %1379 = vmatprep.subr.bf16.mxu0 0
    %1380 = vmatpush1.bf16.msra.mxu0 0
    %1381 = vmatprep.subr.bf16.mxu0 0
    %1382 = vmatpush1.bf16.msra.mxu0 0
    %1383 = vmatprep.subr.bf16.mxu0 0
    %1384 = vmatpush1.bf16.msra.mxu0 0
    %1385 = vmatprep.subr.bf16.mxu0 0
    %1386 = vmatpush1.bf16.msra.mxu0 0
    %1387 = vmatprep.subr.bf16.mxu0 0
    %1388 = vmatpush1.bf16.msra.mxu0 0
    %1389 = vmatprep.subr.bf16.mxu0 0
    %1390 = vmatpush1.bf16.msra.mxu0 0
    %1391 = vmatprep.subr.bf16.mxu0 0
    %1392 = vmatpush1.bf16.msra.mxu0 0
    %1393 = vmatprep.mubr.bf16.mxu0 0
    %1394 = vmatmul.mubr.bf16.gmra.mrb[0].mxu0 %v1359
    %v1395 = vpop.f32.mrb[0].mxu0
    %v1396 = vadd.f32 0.0, %v1395
    %v1397 = vpop.f32.mrb[0].mxu0
    %v1398 = vpop.f32.mrb[0].mxu0
    %v1399 = vadd.f32 0.0, %v1398
    %v1400 = vpop.f32.mrb[0].mxu0
    %1401 = vdwg.mxu0
    %v1404 = vunpack.c.l.b16 %v368
    %v1405 = vunpack.c.l.b16 %v369
    %v1406 = vpack.c.b16 %v1405, %v1404
    %v1409 = vsel %vm702, %v1351, 0
    %1411 = vmatprep.subr.bf16.mxu0 0
    %1412 = vmatpush1.bf16.msra.mxu0 %v1406
    %1413 = vmatprep.subr.bf16.mxu0 0
    %1414 = vmatpush1.bf16.msra.mxu0 0
    %1415 = vmatprep.subr.bf16.mxu0 0
    %1416 = vmatpush1.bf16.msra.mxu0 0
    %1417 = vmatprep.subr.bf16.mxu0 0
    %1418 = vmatpush1.bf16.msra.mxu0 0
    %1419 = vmatprep.subr.bf16.mxu0 0
    %1420 = vmatpush1.bf16.msra.mxu0 0
    %1421 = vmatprep.subr.bf16.mxu0 0
    %1422 = vmatpush1.bf16.msra.mxu0 0
    %1423 = vmatprep.subr.bf16.mxu0 0
    %1424 = vmatpush1.bf16.msra.mxu0 0
    %1425 = vmatprep.subr.bf16.mxu0 0
    %1426 = vmatpush1.bf16.msra.mxu0 0
    %1427 = vmatprep.subr.bf16.mxu0 0
    %1428 = vmatpush1.bf16.msra.mxu0 0
    %1429 = vmatprep.subr.bf16.mxu0 0
    %1430 = vmatpush1.bf16.msra.mxu0 0
    %1431 = vmatprep.subr.bf16.mxu0 0
    %1432 = vmatpush1.bf16.msra.mxu0 0
    %1433 = vmatprep.subr.bf16.mxu0 0
    %1434 = vmatpush1.bf16.msra.mxu0 0
    %1435 = vmatprep.subr.bf16.mxu0 0
    %1436 = vmatpush1.bf16.msra.mxu0 0
    %1437 = vmatprep.subr.bf16.mxu0 0
    %1438 = vmatpush1.bf16.msra.mxu0 0
    %1439 = vmatprep.subr.bf16.mxu0 0
    %1440 = vmatpush1.bf16.msra.mxu0 0
    %1441 = vmatprep.subr.bf16.mxu0 0
    %1442 = vmatpush1.bf16.msra.mxu0 0
    %1443 = vmatprep.mubr.bf16.mxu0 0
    %1444 = vmatmul.mubr.bf16.gmra.mrb[0].mxu0 %v1409
    %v1445 = vpop.f32.mrb[0].mxu0
    %v1446 = vadd.f32 0.0, %v1445
    %v1447 = vpop.f32.mrb[0].mxu0
    %v1448 = vpop.f32.mrb[0].mxu0
    %v1449 = vadd.f32 0.0, %v1448
    %v1450 = vpop.f32.mrb[0].mxu0
    %1451 = vdwg.mxu0
    %v1452 = vsel %vm125, %v1396, 0.0
    %v1453 = vsel %vm125, %v1446, 0.0
    %v1454 = vadd.f32 %v1452, %v1453
    %v1455 = vsel %vm125, %v1399, 0.0
    %v1456 = vsel %vm125, %v1449, 0.0
    %v1457 = vadd.f32 %v1455, %v1456
    %v1458 = vadd.f32 %v277, %v1454
    %v1459 = vadd.f32 %v278, %v1457
    %v1460 = vld [vmem:[%s12] sm:$0x1]
    %v1461 = vld [vmem:[%s13] sm:$0x1]
    %v1462 = vsel %vm125, %v1458, 0.0
    %1463 = vadd.xlane.f32.xlu0 %v1462
    %v1464 = vpop.xlane.xlu0 %1463
    %v1465 = vsel %vm125, %v1459, 0.0
    %1466 = vadd.xlane.f32.xlu0 %v1465
    %v1467 = vpop.xlane.xlu0 %1466
    %v1468 = vmul.f32 %v1464, %v291
    %v1469 = vmul.f32 %v1467, %v291
    %v1470 = vsub.f32 %v1458, %v1468
    %v1471 = vsub.f32 %v1459, %v1469
    %v1472 = vmul.f32 %v1470, %v1470
    %v1473 = vmul.f32 %v1471, %v1471
    %v1474 = vsel %vm125, %v1472, 0.0
    %1475 = vadd.xlane.f32.xlu0 %v1474
    %v1476 = vpop.xlane.xlu0 %1475
    %v1477 = vsel %vm125, %v1473, 0.0
    %1478 = vadd.xlane.f32.xlu0 %v1477
    %v1479 = vpop.xlane.xlu0 %1478
    %v1480 = vmul.f32 %v1476, 0.032258064
    %v1481 = vmul.f32 %v1479, 0.032258064
    %v1482 = vrsqrt.pop %v1480
    %v1483 = vmul.f32 %v1480, %v1482
    %vm1484 = vcmp.eq.f32.partialorder %v1480, inf
    %v1485 = vsel %vm1484, %v1480, %v1483
    %vm1486 = vcmp.eq.f32.partialorder %v1480, 0.0
    %v1487 = vand.u32 %v1480, 2147483648
    %v1488 = vsel %vm1486, %v1487, %v1485
    %v1489 = vrsqrt.pop %v1481
    %v1490 = vmul.f32 %v1481, %v1489
    %vm1491 = vcmp.eq.f32.partialorder %v1481, inf
    %v1492 = vsel %vm1491, %v1481, %v1490
    %vm1493 = vcmp.eq.f32.partialorder %v1481, 0.0
    %v1494 = vand.u32 %v1481, 2147483648
    %v1495 = vsel %vm1493, %v1494, %v1492
    %v1496 = vadd.f32 %v1488, 1e-06
    %v1497 = vadd.f32 %v1495, 1e-06
    %v1498 = vrcp.pop %v1496
    %v1499 = vrcp.pop %v1497
    %v1500 = vmul.f32 %v1470, %v1498
    %v1501 = vmul.f32 %v1471, %v1499
    %v1503 = vlaneseq
    %v1504 = vshrl.u32 %v1503, 7
    %v1505 = vsub.s32 0, %v1504
    %v1506 = vrot.slane %v1460, %v1505
    %v1508 = vmul.f32 %v1506, %v1500
    %v1509 = vmul.f32 %v1506, %v1501
    %v1511 = vlaneseq
    %v1512 = vshrl.u32 %v1511, 7
    %v1513 = vsub.s32 0, %v1512
    %v1514 = vrot.slane %v1461, %v1513
    %v1516 = vadd.f32 %v1508, %v1514
    %v1517 = vadd.f32 %v1509, %v1514
    %v1518 = vld [vmem:[%s14] sm:$0xf]
    %v1519 = vld [vmem:[%s14 + $0x4] sm:$0xf]
    %v1520 = vld [vmem:[%s14 + $0x8] sm:$0xf]
    %v1521 = vld [vmem:[%s14 + $0xc] sm:$0xf]
    %v1522 = vld [vmem:[%s14 + $0x10] sm:$0xf]
    %v1523 = vld [vmem:[%s14 + $0x14] sm:$0xf]
    %v1524 = vld [vmem:[%s14 + $0x18] sm:$0xf]
    %v1525 = vld [vmem:[%s14 + $0x1c] sm:$0xf]
    %v1526 = vld [vmem:[%s14 + $0x20] sm:$0xf]
    %v1527 = vld [vmem:[%s14 + $0x24] sm:$0xf]
    %v1528 = vld [vmem:[%s14 + $0x28] sm:$0xf]
    %v1529 = vld [vmem:[%s14 + $0x2c] sm:$0xf]
    %v1530 = vld [vmem:[%s15] sm:$0x1]
    %v1532 = vrot.slane %v1517, 7
    %vm1535 = vcmask 1040384
    %v1536 = vrot.slane %v1516, 7
    %v1537 = vsel %vm1535, %v1536, %v1532
    %v1540 = vsel %vm1535, %v1532, %v1536
    %v1541 = vmul.f32 %v1540, %v98
    %v1542 = vmul.f32 %v1537, %v99
    %v1543 = vpack.c.bf16 %v1542, %v1541
    %v1544 = vpack.c.bf16 %v1517, %v1516
    %v1549 = vunpack.c.l.b16 %v1522
    %v1550 = vunpack.c.l.b16 %v1523
    %v1551 = vunpack.c.l.b16 %v1524
    %v1552 = vunpack.c.l.b16 %v1525
    %v1553 = vpack.c.b16 %v1550, %v1549
    %v1554 = vpack.c.b16 %v1552, %v1551
    %v1558 = vsel %vm125, %v1544, 0
    %1560 = vmatprep.subr.bf16.mxu0 0
    %1561 = vmatpush1.bf16.msra.mxu0 %v1553
    %1562 = vmatprep.subr.bf16.mxu0 0
    %1563 = vmatpush1.bf16.msra.mxu0 %v1554
    %1564 = vmatprep.subr.bf16.mxu0 0
    %1565 = vmatpush1.bf16.msra.mxu0 0
    %1566 = vmatprep.subr.bf16.mxu0 0
    %1567 = vmatpush1.bf16.msra.mxu0 0
    %1568 = vmatprep.subr.bf16.mxu0 0
    %1569 = vmatpush1.bf16.msra.mxu0 0
    %1570 = vmatprep.subr.bf16.mxu0 0
    %1571 = vmatpush1.bf16.msra.mxu0 0
    %1572 = vmatprep.subr.bf16.mxu0 0
    %1573 = vmatpush1.bf16.msra.mxu0 0
    %1574 = vmatprep.subr.bf16.mxu0 0
    %1575 = vmatpush1.bf16.msra.mxu0 0
    %1576 = vmatprep.subr.bf16.mxu0 0
    %1577 = vmatpush1.bf16.msra.mxu0 0
    %1578 = vmatprep.subr.bf16.mxu0 0
    %1579 = vmatpush1.bf16.msra.mxu0 0
    %1580 = vmatprep.subr.bf16.mxu0 0
    %1581 = vmatpush1.bf16.msra.mxu0 0
    %1582 = vmatprep.subr.bf16.mxu0 0
    %1583 = vmatpush1.bf16.msra.mxu0 0
    %1584 = vmatprep.subr.bf16.mxu0 0
    %1585 = vmatpush1.bf16.msra.mxu0 0
    %1586 = vmatprep.subr.bf16.mxu0 0
    %1587 = vmatpush1.bf16.msra.mxu0 0
    %1588 = vmatprep.subr.bf16.mxu0 0
    %1589 = vmatpush1.bf16.msra.mxu0 0
    %1590 = vmatprep.subr.bf16.mxu0 0
    %1591 = vmatpush1.bf16.msra.mxu0 0
    %1592 = vmatprep.mubr.bf16.mxu0 0
    %1593 = vmatmul.mubr.bf16.gmra.mrb[0].mxu0 %v1558
    %v1594 = vpop.f32.mrb[0].mxu0
    %v1595 = vadd.f32 0.0, %v1594
    %v1596 = vpop.f32.mrb[0].mxu0
    %v1597 = vpop.f32.mrb[0].mxu0
    %v1598 = vadd.f32 0.0, %v1597
    %v1599 = vpop.f32.mrb[0].mxu0
    %1600 = vdwg.mxu0
    %v1605 = vunpack.c.l.b16 %v1518
    %v1606 = vunpack.c.l.b16 %v1519
    %v1607 = vunpack.c.l.b16 %v1520
    %v1608 = vunpack.c.l.b16 %v1521
    %v1609 = vpack.c.b16 %v1606, %v1605
    %v1610 = vpack.c.b16 %v1608, %v1607
    %v1614 = vsel %vm125, %v1543, 0
    %1616 = vmatprep.subr.bf16.mxu0 0
    %1617 = vmatpush1.bf16.msra.mxu0 %v1609
    %1618 = vmatprep.subr.bf16.mxu0 0
    %1619 = vmatpush1.bf16.msra.mxu0 %v1610
    %1620 = vmatprep.subr.bf16.mxu0 0
    %1621 = vmatpush1.bf16.msra.mxu0 0
    %1622 = vmatprep.subr.bf16.mxu0 0
    %1623 = vmatpush1.bf16.msra.mxu0 0
    %1624 = vmatprep.subr.bf16.mxu0 0
    %1625 = vmatpush1.bf16.msra.mxu0 0
    %1626 = vmatprep.subr.bf16.mxu0 0
    %1627 = vmatpush1.bf16.msra.mxu0 0
    %1628 = vmatprep.subr.bf16.mxu0 0
    %1629 = vmatpush1.bf16.msra.mxu0 0
    %1630 = vmatprep.subr.bf16.mxu0 0
    %1631 = vmatpush1.bf16.msra.mxu0 0
    %1632 = vmatprep.subr.bf16.mxu0 0
    %1633 = vmatpush1.bf16.msra.mxu0 0
    %1634 = vmatprep.subr.bf16.mxu0 0
    %1635 = vmatpush1.bf16.msra.mxu0 0
    %1636 = vmatprep.subr.bf16.mxu0 0
    %1637 = vmatpush1.bf16.msra.mxu0 0
    %1638 = vmatprep.subr.bf16.mxu0 0
    %1639 = vmatpush1.bf16.msra.mxu0 0
    %1640 = vmatprep.subr.bf16.mxu0 0
    %1641 = vmatpush1.bf16.msra.mxu0 0
    %1642 = vmatprep.subr.bf16.mxu0 0
    %1643 = vmatpush1.bf16.msra.mxu0 0
    %1644 = vmatprep.subr.bf16.mxu0 0
    %1645 = vmatpush1.bf16.msra.mxu0 0
    %1646 = vmatprep.subr.bf16.mxu0 0
    %1647 = vmatpush1.bf16.msra.mxu0 0
    %1648 = vmatprep.mubr.bf16.mxu0 0
    %1649 = vmatmul.mubr.bf16.gmra.mrb[0].mxu0 %v1614
    %v1650 = vpop.f32.mrb[0].mxu0
    %v1651 = vadd.f32 %v1595, %v1650
    %v1652 = vpop.f32.mrb[0].mxu0
    %v1653 = vpop.f32.mrb[0].mxu0
    %v1654 = vadd.f32 %v1598, %v1653
    %v1655 = vpop.f32.mrb[0].mxu0
    %1656 = vdwg.mxu0
    %vm1657 = vcmask 1046528
    %v1658 = vrot.slane %v1516, 1
    %v1659 = vrot.slane %v1517, 1
    %v1660 = vsel %vm1657, %v1658, %v1659
    %v1664 = vsel %vm1657, %v1659, %v1658
    %v1665 = vmul.f32 %v1660, %v104
    %v1666 = vmul.f32 %v1664, %v105
    %v1667 = vpack.c.bf16 %v1666, %v1665
    %v1672 = vunpack.c.l.b16 %v1526
    %v1673 = vunpack.c.l.b16 %v1527
    %v1674 = vunpack.c.l.b16 %v1528
    %v1675 = vunpack.c.l.b16 %v1529
    %v1676 = vpack.c.b16 %v1673, %v1672
    %v1677 = vpack.c.b16 %v1675, %v1674
    %v1681 = vsel %vm125, %v1667, 0
    %1683 = vmatprep.subr.bf16.mxu0 0
    %1684 = vmatpush1.bf16.msra.mxu0 %v1676
    %1685 = vmatprep.subr.bf16.mxu0 0
    %1686 = vmatpush1.bf16.msra.mxu0 %v1677
    %1687 = vmatprep.subr.bf16.mxu0 0
    %1688 = vmatpush1.bf16.msra.mxu0 0
    %1689 = vmatprep.subr.bf16.mxu0 0
    %1690 = vmatpush1.bf16.msra.mxu0 0
    %1691 = vmatprep.subr.bf16.mxu0 0
    %1692 = vmatpush1.bf16.msra.mxu0 0
    %1693 = vmatprep.subr.bf16.mxu0 0
    %1694 = vmatpush1.bf16.msra.mxu0 0
    %1695 = vmatprep.subr.bf16.mxu0 0
    %1696 = vmatpush1.bf16.msra.mxu0 0
    %1697 = vmatprep.subr.bf16.mxu0 0
    %1698 = vmatpush1.bf16.msra.mxu0 0
    %1699 = vmatprep.subr.bf16.mxu0 0
    %1700 = vmatpush1.bf16.msra.mxu0 0
    %1701 = vmatprep.subr.bf16.mxu0 0
    %1702 = vmatpush1.bf16.msra.mxu0 0
    %1703 = vmatprep.subr.bf16.mxu0 0
    %1704 = vmatpush1.bf16.msra.mxu0 0
    %1705 = vmatprep.subr.bf16.mxu0 0
    %1706 = vmatpush1.bf16.msra.mxu0 0
    %1707 = vmatprep.subr.bf16.mxu0 0
    %1708 = vmatpush1.bf16.msra.mxu0 0
    %1709 = vmatprep.subr.bf16.mxu0 0
    %1710 = vmatpush1.bf16.msra.mxu0 0
    %1711 = vmatprep.subr.bf16.mxu0 0
    %1712 = vmatpush1.bf16.msra.mxu0 0
    %1713 = vmatprep.subr.bf16.mxu0 0
    %1714 = vmatpush1.bf16.msra.mxu0 0
    %1715 = vmatprep.mubr.bf16.mxu0 0
    %1716 = vmatmul.mubr.bf16.gmra.mrb[0].mxu0 %v1681
    %v1717 = vpop.f32.mrb[0].mxu0
    %v1718 = vadd.f32 0.0, %v1717
    %v1719 = vpop.f32.mrb[0].mxu0
    %v1720 = vpop.f32.mrb[0].mxu0
    %v1721 = vadd.f32 0.0, %v1720
    %v1722 = vpop.f32.mrb[0].mxu0
    %1723 = vdwg.mxu0
    %v1724 = vadd.f32 %v1651, %v1718
    %v1725 = vadd.f32 %v1654, %v1721
    %v1727 = vlaneseq
    %v1728 = vshrl.u32 %v1727, 7
    %v1729 = vsub.s32 0, %v1728
    %v1730 = vrot.slane %v1530, %v1729
    %v1732 = vadd.f32 %v1724, %v1730
    %v1733 = vadd.f32 %v1725, %v1730
    %v1734 = vmax.f32 %v1732, 0.0
    %v1735 = vmax.f32 %v1733, 0.0
    %v1736 = vld [vmem:[%s16] sm:$0xf]
    %v1737 = vld [vmem:[%s16 + $0x4] sm:$0xf]
    %v1738 = vld [vmem:[%s16 + $0x8] sm:$0xf]
    %v1739 = vld [vmem:[%s16 + $0xc] sm:$0xf]
    %v1740 = vld [vmem:[%s16 + $0x10] sm:$0xf]
    %v1741 = vld [vmem:[%s16 + $0x14] sm:$0xf]
    %v1742 = vld [vmem:[%s16 + $0x18] sm:$0xf]
    %v1743 = vld [vmem:[%s16 + $0x1c] sm:$0xf]
    %v1744 = vld [vmem:[%s16 + $0x20] sm:$0xf]
    %v1745 = vld [vmem:[%s16 + $0x24] sm:$0xf]
    %v1746 = vld [vmem:[%s16 + $0x28] sm:$0xf]
    %v1747 = vld [vmem:[%s16 + $0x2c] sm:$0xf]
    %v1748 = vld [vmem:[%s16 + $0x30] sm:$0xf]
    %v1749 = vld [vmem:[%s16 + $0x34] sm:$0xf]
    %v1750 = vld [vmem:[%s16 + $0x38] sm:$0xf]
    %v1751 = vld [vmem:[%s16 + $0x3c] sm:$0xf]
    %v1752 = vld [vmem:[%s16 + $0x40] sm:$0xf]
    %v1753 = vld [vmem:[%s16 + $0x44] sm:$0xf]
    %v1754 = vld [vmem:[%s16 + $0x48] sm:$0xf]
    %v1755 = vld [vmem:[%s16 + $0x4c] sm:$0xf]
    %v1756 = vld [vmem:[%s16 + $0x50] sm:$0xf]
    %v1757 = vld [vmem:[%s16 + $0x54] sm:$0xf]
    %v1758 = vld [vmem:[%s16 + $0x58] sm:$0xf]
    %v1759 = vld [vmem:[%s16 + $0x5c] sm:$0xf]
    %v1760 = vld [vmem:[%s17] sm:$0x1]
    %v1762 = vrot.slane %v1735, 7
    %v1765 = vrot.slane %v1734, 7
    %v1766 = vsel %vm1535, %v1765, %v1762
    %v1769 = vsel %vm1535, %v1762, %v1765
    %v1770 = vmul.f32 %v1769, %v98
    %v1771 = vmul.f32 %v1766, %v99
    %v1772 = vpack.c.bf16 %v1771, %v1770
    %v1773 = vpack.c.bf16 %v1735, %v1734
    %v1782 = vunpack.c.l.b16 %v1744
    %v1783 = vunpack.c.l.b16 %v1745
    %v1784 = vunpack.c.l.b16 %v1746
    %v1785 = vunpack.c.l.b16 %v1747
    %v1786 = vunpack.c.l.b16 %v1748
    %v1787 = vunpack.c.l.b16 %v1749
    %v1788 = vunpack.c.l.b16 %v1750
    %v1789 = vunpack.c.l.b16 %v1751
    %v1790 = vpack.c.b16 %v1783, %v1782
    %v1791 = vpack.c.b16 %v1785, %v1784
    %v1792 = vpack.c.b16 %v1787, %v1786
    %v1793 = vpack.c.b16 %v1789, %v1788
    %vm1798 = vcmask 523264
    %v1800 = vsel %vm1798, %v1773, 0
    %1802 = vmatprep.subr.bf16.mxu0 0
    %1803 = vmatpush1.bf16.msra.mxu0 %v1790
    %1804 = vmatprep.subr.bf16.mxu0 0
    %1805 = vmatpush1.bf16.msra.mxu0 %v1791
    %1806 = vmatprep.subr.bf16.mxu0 0
    %1807 = vmatpush1.bf16.msra.mxu0 %v1792
    %1808 = vmatprep.subr.bf16.mxu0 0
    %1809 = vmatpush1.bf16.msra.mxu0 %v1793
    %1810 = vmatprep.subr.bf16.mxu0 0
    %1811 = vmatpush1.bf16.msra.mxu0 0
    %1812 = vmatprep.subr.bf16.mxu0 0
    %1813 = vmatpush1.bf16.msra.mxu0 0
    %1814 = vmatprep.subr.bf16.mxu0 0
    %1815 = vmatpush1.bf16.msra.mxu0 0
    %1816 = vmatprep.subr.bf16.mxu0 0
    %1817 = vmatpush1.bf16.msra.mxu0 0
    %1818 = vmatprep.subr.bf16.mxu0 0
    %1819 = vmatpush1.bf16.msra.mxu0 0
    %1820 = vmatprep.subr.bf16.mxu0 0
    %1821 = vmatpush1.bf16.msra.mxu0 0
    %1822 = vmatprep.subr.bf16.mxu0 0
    %1823 = vmatpush1.bf16.msra.mxu0 0
    %1824 = vmatprep.subr.bf16.mxu0 0
    %1825 = vmatpush1.bf16.msra.mxu0 0
    %1826 = vmatprep.subr.bf16.mxu0 0
    %1827 = vmatpush1.bf16.msra.mxu0 0
    %1828 = vmatprep.subr.bf16.mxu0 0
    %1829 = vmatpush1.bf16.msra.mxu0 0
    %1830 = vmatprep.subr.bf16.mxu0 0
    %1831 = vmatpush1.bf16.msra.mxu0 0
    %1832 = vmatprep.subr.bf16.mxu0 0
    %1833 = vmatpush1.bf16.msra.mxu0 0
    %1834 = vmatprep.mubr.bf16.mxu0 0
    %1835 = vmatmul.mubr.bf16.gmra.mrb[0].mxu0 %v1800
    %v1836 = vpop.f32.mrb[0].mxu0
    %v1837 = vadd.f32 0.0, %v1836
    %v1838 = vpop.f32.mrb[0].mxu0
    %v1839 = vpop.f32.mrb[0].mxu0
    %v1840 = vadd.f32 0.0, %v1839
    %v1841 = vpop.f32.mrb[0].mxu0
    %1842 = vdwg.mxu0
    %v1851 = vunpack.c.l.b16 %v1736
    %v1852 = vunpack.c.l.b16 %v1737
    %v1853 = vunpack.c.l.b16 %v1738
    %v1854 = vunpack.c.l.b16 %v1739
    %v1855 = vunpack.c.l.b16 %v1740
    %v1856 = vunpack.c.l.b16 %v1741
    %v1857 = vunpack.c.l.b16 %v1742
    %v1858 = vunpack.c.l.b16 %v1743
    %v1859 = vpack.c.b16 %v1852, %v1851
    %v1860 = vpack.c.b16 %v1854, %v1853
    %v1861 = vpack.c.b16 %v1856, %v1855
    %v1862 = vpack.c.b16 %v1858, %v1857
    %v1868 = vsel %vm1798, %v1772, 0
    %1870 = vmatprep.subr.bf16.mxu0 0
    %1871 = vmatpush1.bf16.msra.mxu0 %v1859
    %1872 = vmatprep.subr.bf16.mxu0 0
    %1873 = vmatpush1.bf16.msra.mxu0 %v1860
    %1874 = vmatprep.subr.bf16.mxu0 0
    %1875 = vmatpush1.bf16.msra.mxu0 %v1861
    %1876 = vmatprep.subr.bf16.mxu0 0
    %1877 = vmatpush1.bf16.msra.mxu0 %v1862
    %1878 = vmatprep.subr.bf16.mxu0 0
    %1879 = vmatpush1.bf16.msra.mxu0 0
    %1880 = vmatprep.subr.bf16.mxu0 0
    %1881 = vmatpush1.bf16.msra.mxu0 0
    %1882 = vmatprep.subr.bf16.mxu0 0
    %1883 = vmatpush1.bf16.msra.mxu0 0
    %1884 = vmatprep.subr.bf16.mxu0 0
    %1885 = vmatpush1.bf16.msra.mxu0 0
    %1886 = vmatprep.subr.bf16.mxu0 0
    %1887 = vmatpush1.bf16.msra.mxu0 0
    %1888 = vmatprep.subr.bf16.mxu0 0
    %1889 = vmatpush1.bf16.msra.mxu0 0
    %1890 = vmatprep.subr.bf16.mxu0 0
    %1891 = vmatpush1.bf16.msra.mxu0 0
    %1892 = vmatprep.subr.bf16.mxu0 0
    %1893 = vmatpush1.bf16.msra.mxu0 0
    %1894 = vmatprep.subr.bf16.mxu0 0
    %1895 = vmatpush1.bf16.msra.mxu0 0
    %1896 = vmatprep.subr.bf16.mxu0 0
    %1897 = vmatpush1.bf16.msra.mxu0 0
    %1898 = vmatprep.subr.bf16.mxu0 0
    %1899 = vmatpush1.bf16.msra.mxu0 0
    %1900 = vmatprep.subr.bf16.mxu0 0
    %1901 = vmatpush1.bf16.msra.mxu0 0
    %1902 = vmatprep.mubr.bf16.mxu0 0
    %1903 = vmatmul.mubr.bf16.gmra.mrb[0].mxu0 %v1868
    %v1904 = vpop.f32.mrb[0].mxu0
    %v1905 = vadd.f32 %v1837, %v1904
    %v1906 = vpop.f32.mrb[0].mxu0
    %v1907 = vpop.f32.mrb[0].mxu0
    %v1908 = vadd.f32 %v1840, %v1907
    %v1909 = vpop.f32.mrb[0].mxu0
    %1910 = vdwg.mxu0
    %v1911 = vrot.slane %v1734, 1
    %v1912 = vrot.slane %v1735, 1
    %v1913 = vsel %vm1657, %v1911, %v1912
    %v1917 = vsel %vm1657, %v1912, %v1911
    %v1918 = vmul.f32 %v1913, %v104
    %v1919 = vmul.f32 %v1917, %v105
    %v1920 = vpack.c.bf16 %v1919, %v1918
    %v1929 = vunpack.c.l.b16 %v1752
    %v1930 = vunpack.c.l.b16 %v1753
    %v1931 = vunpack.c.l.b16 %v1754
    %v1932 = vunpack.c.l.b16 %v1755
    %v1933 = vunpack.c.l.b16 %v1756
    %v1934 = vunpack.c.l.b16 %v1757
    %v1935 = vunpack.c.l.b16 %v1758
    %v1936 = vunpack.c.l.b16 %v1759
    %v1937 = vpack.c.b16 %v1930, %v1929
    %v1938 = vpack.c.b16 %v1932, %v1931
    %v1939 = vpack.c.b16 %v1934, %v1933
    %v1940 = vpack.c.b16 %v1936, %v1935
    %v1946 = vsel %vm1798, %v1920, 0
    %1948 = vmatprep.subr.bf16.mxu0 0
    %1949 = vmatpush1.bf16.msra.mxu0 %v1937
    %1950 = vmatprep.subr.bf16.mxu0 0
    %1951 = vmatpush1.bf16.msra.mxu0 %v1938
    %1952 = vmatprep.subr.bf16.mxu0 0
    %1953 = vmatpush1.bf16.msra.mxu0 %v1939
    %1954 = vmatprep.subr.bf16.mxu0 0
    %1955 = vmatpush1.bf16.msra.mxu0 %v1940
    %1956 = vmatprep.subr.bf16.mxu0 0
    %1957 = vmatpush1.bf16.msra.mxu0 0
    %1958 = vmatprep.subr.bf16.mxu0 0
    %1959 = vmatpush1.bf16.msra.mxu0 0
    %1960 = vmatprep.subr.bf16.mxu0 0
    %1961 = vmatpush1.bf16.msra.mxu0 0
    %1962 = vmatprep.subr.bf16.mxu0 0
    %1963 = vmatpush1.bf16.msra.mxu0 0
    %1964 = vmatprep.subr.bf16.mxu0 0
    %1965 = vmatpush1.bf16.msra.mxu0 0
    %1966 = vmatprep.subr.bf16.mxu0 0
    %1967 = vmatpush1.bf16.msra.mxu0 0
    %1968 = vmatprep.subr.bf16.mxu0 0
    %1969 = vmatpush1.bf16.msra.mxu0 0
    %1970 = vmatprep.subr.bf16.mxu0 0
    %1971 = vmatpush1.bf16.msra.mxu0 0
    %1972 = vmatprep.subr.bf16.mxu0 0
    %1973 = vmatpush1.bf16.msra.mxu0 0
    %1974 = vmatprep.subr.bf16.mxu0 0
    %1975 = vmatpush1.bf16.msra.mxu0 0
    %1976 = vmatprep.subr.bf16.mxu0 0
    %1977 = vmatpush1.bf16.msra.mxu0 0
    %1978 = vmatprep.subr.bf16.mxu0 0
    %1979 = vmatpush1.bf16.msra.mxu0 0
    %1980 = vmatprep.mubr.bf16.mxu0 0
    %1981 = vmatmul.mubr.bf16.gmra.mrb[0].mxu0 %v1946
    %v1982 = vpop.f32.mrb[0].mxu0
    %v1983 = vadd.f32 0.0, %v1982
    %v1984 = vpop.f32.mrb[0].mxu0
    %v1985 = vpop.f32.mrb[0].mxu0
    %v1986 = vadd.f32 0.0, %v1985
    %v1987 = vpop.f32.mrb[0].mxu0
    %1988 = vdwg.mxu0
    %v1989 = vadd.f32 %v1905, %v1983
    %v1990 = vadd.f32 %v1908, %v1986
    %v1992 = vlaneseq
    %v1993 = vshrl.u32 %v1992, 7
    %v1994 = vsub.s32 0, %v1993
    %v1995 = vrot.slane %v1760, %v1994
    %v1997 = vadd.f32 %v1989, %v1995
    %v1998 = vadd.f32 %v1990, %v1995
    %v1999 = vadd.f32 %v1458, %v1997
    %v2000 = vadd.f32 %v1459, %v1998
    %s2001 = scalar_lea.vmem %s6, 1
    %v2002 = vld [vmem:[%s2001] sm:$0x1]
    %s2003 = scalar_lea.vmem %s7, 1
    %v2004 = vld [vmem:[%s2003] sm:$0x1]
    %v2005 = vsel %vm125, %v1999, 0.0
    %2006 = vadd.xlane.f32.xlu0 %v2005
    %v2007 = vpop.xlane.xlu0 %2006
    %v2008 = vsel %vm125, %v2000, 0.0
    %2009 = vadd.xlane.f32.xlu0 %v2008
    %v2010 = vpop.xlane.xlu0 %2009
    %v2011 = vmul.f32 %v2007, %v291
    %v2012 = vmul.f32 %v2010, %v291
    %v2013 = vsub.f32 %v1999, %v2011
    %v2014 = vsub.f32 %v2000, %v2012
    %v2015 = vmul.f32 %v2013, %v2013
    %v2016 = vmul.f32 %v2014, %v2014
    %v2017 = vsel %vm125, %v2015, 0.0
    %2018 = vadd.xlane.f32.xlu0 %v2017
    %v2019 = vpop.xlane.xlu0 %2018
    %v2020 = vsel %vm125, %v2016, 0.0
    %2021 = vadd.xlane.f32.xlu0 %v2020
    %v2022 = vpop.xlane.xlu0 %2021
    %v2023 = vmul.f32 %v2019, 0.032258064
    %v2024 = vmul.f32 %v2022, 0.032258064
    %v2025 = vrsqrt.pop %v2023
    %v2026 = vmul.f32 %v2023, %v2025
    %vm2027 = vcmp.eq.f32.partialorder %v2023, inf
    %v2028 = vsel %vm2027, %v2023, %v2026
    %vm2029 = vcmp.eq.f32.partialorder %v2023, 0.0
    %v2030 = vand.u32 %v2023, 2147483648
    %v2031 = vsel %vm2029, %v2030, %v2028
    %v2032 = vrsqrt.pop %v2024
    %v2033 = vmul.f32 %v2024, %v2032
    %vm2034 = vcmp.eq.f32.partialorder %v2024, inf
    %v2035 = vsel %vm2034, %v2024, %v2033
    %vm2036 = vcmp.eq.f32.partialorder %v2024, 0.0
    %v2037 = vand.u32 %v2024, 2147483648
    %v2038 = vsel %vm2036, %v2037, %v2035
    %v2039 = vadd.f32 %v2031, 1e-06
    %v2040 = vadd.f32 %v2038, 1e-06
    %v2041 = vrcp.pop %v2039
    %v2042 = vrcp.pop %v2040
    %v2043 = vmul.f32 %v2013, %v2041
    %v2044 = vmul.f32 %v2014, %v2042
    %v2046 = vlaneseq
    %v2047 = vshrl.u32 %v2046, 7
    %v2048 = vsub.s32 0, %v2047
    %v2049 = vrot.slane %v2002, %v2048
    %v2051 = vmul.f32 %v2049, %v2043
    %v2052 = vmul.f32 %v2049, %v2044
    %v2054 = vlaneseq
    %v2055 = vshrl.u32 %v2054, 7
    %v2056 = vsub.s32 0, %v2055
    %v2057 = vrot.slane %v2004, %v2056
    %v2059 = vadd.f32 %v2051, %v2057
    %v2060 = vadd.f32 %v2052, %v2057
    %s2061 = scalar_lea.vmem %s8, 32
    %v2062 = vld [vmem:[%s2061] sm:$0xf]
    %v2063 = vld [vmem:[%s2061 + $0x4] sm:$0xf]
    %v2064 = vld [vmem:[%s2061 + $0x8] sm:$0xf]
    %v2065 = vld [vmem:[%s2061 + $0xc] sm:$0xf]
    %v2066 = vld [vmem:[%s2061 + $0x10] sm:$0xf]
    %v2067 = vld [vmem:[%s2061 + $0x14] sm:$0xf]
    %v2068 = vld [vmem:[%s2061 + $0x18] sm:$0xf]
    %v2069 = vld [vmem:[%s2061 + $0x1c] sm:$0xf]
    %s2070 = scalar_lea.vmem %s9, 32
    %v2071 = vld [vmem:[%s2070] sm:$0xf]
    %v2072 = vld [vmem:[%s2070 + $0x4] sm:$0xf]
    %v2073 = vld [vmem:[%s2070 + $0x8] sm:$0xf]
    %v2074 = vld [vmem:[%s2070 + $0xc] sm:$0xf]
    %v2075 = vld [vmem:[%s2070 + $0x10] sm:$0xf]
    %v2076 = vld [vmem:[%s2070 + $0x14] sm:$0xf]
    %v2077 = vld [vmem:[%s2070 + $0x18] sm:$0xf]
    %v2078 = vld [vmem:[%s2070 + $0x1c] sm:$0xf]
    %s2079 = scalar_lea.vmem %s10, 32
    %v2080 = vld [vmem:[%s2079] sm:$0xf]
    %v2081 = vld [vmem:[%s2079 + $0x4] sm:$0xf]
    %v2082 = vld [vmem:[%s2079 + $0x8] sm:$0xf]
    %v2083 = vld [vmem:[%s2079 + $0xc] sm:$0xf]
    %v2084 = vld [vmem:[%s2079 + $0x10] sm:$0xf]
    %v2085 = vld [vmem:[%s2079 + $0x14] sm:$0xf]
    %v2086 = vld [vmem:[%s2079 + $0x18] sm:$0xf]
    %v2087 = vld [vmem:[%s2079 + $0x1c] sm:$0xf]
    %s2088 = scalar_lea.vmem %s11, 16
    %v2089 = vld [vmem:[%s2088] sm:$0xf]
    %v2090 = vld [vmem:[%s2088 + $0x4] sm:$0xf]
    %v2091 = vld [vmem:[%s2088 + $0x8] sm:$0xf]
    %v2092 = vld [vmem:[%s2088 + $0xc] sm:$0xf]
    %v2093 = vpack.c.bf16 %v2060, %v2059
    %v2098 = vunpack.c.l.b16 %v2062
    %v2099 = vunpack.c.l.b16 %v2063
    %v2100 = vunpack.c.l.b16 %v2064
    %v2101 = vunpack.c.l.b16 %v2065
    %v2102 = vpack.c.b16 %v2099, %v2098
    %v2103 = vpack.c.b16 %v2101, %v2100
    %v2107 = vsel %vm125, %v2093, 0
    %2109 = vmatprep.subr.bf16.mxu0 0
    %2110 = vmatpush1.bf16.msra.mxu0 %v2102
    %2111 = vmatprep.subr.bf16.mxu0 0
    %2112 = vmatpush1.bf16.msra.mxu0 %v2103
    %2113 = vmatprep.subr.bf16.mxu0 0
    %2114 = vmatpush1.bf16.msra.mxu0 0
    %2115 = vmatprep.subr.bf16.mxu0 0
    %2116 = vmatpush1.bf16.msra.mxu0 0
    %2117 = vmatprep.subr.bf16.mxu0 0
    %2118 = vmatpush1.bf16.msra.mxu0 0
    %2119 = vmatprep.subr.bf16.mxu0 0
    %2120 = vmatpush1.bf16.msra.mxu0 0
    %2121 = vmatprep.subr.bf16.mxu0 0
    %2122 = vmatpush1.bf16.msra.mxu0 0
    %2123 = vmatprep.subr.bf16.mxu0 0
    %2124 = vmatpush1.bf16.msra.mxu0 0
    %2125 = vmatprep.subr.bf16.mxu0 0
    %2126 = vmatpush1.bf16.msra.mxu0 0
    %2127 = vmatprep.subr.bf16.mxu0 0
    %2128 = vmatpush1.bf16.msra.mxu0 0
    %2129 = vmatprep.subr.bf16.mxu0 0
    %2130 = vmatpush1.bf16.msra.mxu0 0
    %2131 = vmatprep.subr.bf16.mxu0 0
    %2132 = vmatpush1.bf16.msra.mxu0 0
    %2133 = vmatprep.subr.bf16.mxu0 0
    %2134 = vmatpush1.bf16.msra.mxu0 0
    %2135 = vmatprep.subr.bf16.mxu0 0
    %2136 = vmatpush1.bf16.msra.mxu0 0
    %2137 = vmatprep.subr.bf16.mxu0 0
    %2138 = vmatpush1.bf16.msra.mxu0 0
    %2139 = vmatprep.subr.bf16.mxu0 0
    %2140 = vmatpush1.bf16.msra.mxu0 0
    %2141 = vmatprep.mubr.bf16.mxu0 0
    %2142 = vmatmul.mubr.bf16.gmra.mrb[0].mxu0 %v2107
    %v2143 = vpop.f32.mrb[0].mxu0
    %v2144 = vadd.f32 0.0, %v2143
    %v2145 = vpop.f32.mrb[0].mxu0
    %v2146 = vpop.f32.mrb[0].mxu0
    %v2147 = vadd.f32 0.0, %v2146
    %v2148 = vpop.f32.mrb[0].mxu0
    %2149 = vdwg.mxu0
    %v2154 = vunpack.c.l.b16 %v2066
    %v2155 = vunpack.c.l.b16 %v2067
    %v2156 = vunpack.c.l.b16 %v2068
    %v2157 = vunpack.c.l.b16 %v2069
    %v2158 = vpack.c.b16 %v2155, %v2154
    %v2159 = vpack.c.b16 %v2157, %v2156
    %2162 = vmatprep.subr.bf16.mxu0 0
    %2163 = vmatpush1.bf16.msra.mxu0 %v2158
    %2164 = vmatprep.subr.bf16.mxu0 0
    %2165 = vmatpush1.bf16.msra.mxu0 %v2159
    %2166 = vmatprep.subr.bf16.mxu0 0
    %2167 = vmatpush1.bf16.msra.mxu0 0
    %2168 = vmatprep.subr.bf16.mxu0 0
    %2169 = vmatpush1.bf16.msra.mxu0 0
    %2170 = vmatprep.subr.bf16.mxu0 0
    %2171 = vmatpush1.bf16.msra.mxu0 0
    %2172 = vmatprep.subr.bf16.mxu0 0
    %2173 = vmatpush1.bf16.msra.mxu0 0
    %2174 = vmatprep.subr.bf16.mxu0 0
    %2175 = vmatpush1.bf16.msra.mxu0 0
    %2176 = vmatprep.subr.bf16.mxu0 0
    %2177 = vmatpush1.bf16.msra.mxu0 0
    %2178 = vmatprep.subr.bf16.mxu0 0
    %2179 = vmatpush1.bf16.msra.mxu0 0
    %2180 = vmatprep.subr.bf16.mxu0 0
    %2181 = vmatpush1.bf16.msra.mxu0 0
    %2182 = vmatprep.subr.bf16.mxu0 0
    %2183 = vmatpush1.bf16.msra.mxu0 0
    %2184 = vmatprep.subr.bf16.mxu0 0
    %2185 = vmatpush1.bf16.msra.mxu0 0
    %2186 = vmatprep.subr.bf16.mxu0 0
    %2187 = vmatpush1.bf16.msra.mxu0 0
    %2188 = vmatprep.subr.bf16.mxu0 0
    %2189 = vmatpush1.bf16.msra.mxu0 0
    %2190 = vmatprep.subr.bf16.mxu0 0
    %2191 = vmatpush1.bf16.msra.mxu0 0
    %2192 = vmatprep.subr.bf16.mxu0 0
    %2193 = vmatpush1.bf16.msra.mxu0 0
    %2194 = vmatprep.mubr.bf16.mxu0 0
    %2195 = vmatmul.mubr.bf16.gmra.mrb[0].mxu0 %v2107
    %v2196 = vpop.f32.mrb[0].mxu0
    %v2197 = vadd.f32 0.0, %v2196
    %v2198 = vpop.f32.mrb[0].mxu0
    %v2199 = vpop.f32.mrb[0].mxu0
    %v2200 = vadd.f32 0.0, %v2199
    %v2201 = vpop.f32.mrb[0].mxu0
    %2202 = vdwg.mxu0
    %v2203 = vmul.f32 %v2144, 0.25
    %v2204 = vmul.f32 %v2147, 0.25
    %v2205 = vmul.f32 %v2197, 0.25
    %v2206 = vmul.f32 %v2200, 0.25
    %v2211 = vunpack.c.l.b16 %v2071
    %v2212 = vunpack.c.l.b16 %v2072
    %v2213 = vunpack.c.l.b16 %v2073
    %v2214 = vunpack.c.l.b16 %v2074
    %v2215 = vpack.c.b16 %v2212, %v2211
    %v2216 = vpack.c.b16 %v2214, %v2213
    %2219 = vmatprep.subr.bf16.mxu0 0
    %2220 = vmatpush1.bf16.msra.mxu0 %v2215
    %2221 = vmatprep.subr.bf16.mxu0 0
    %2222 = vmatpush1.bf16.msra.mxu0 %v2216
    %2223 = vmatprep.subr.bf16.mxu0 0
    %2224 = vmatpush1.bf16.msra.mxu0 0
    %2225 = vmatprep.subr.bf16.mxu0 0
    %2226 = vmatpush1.bf16.msra.mxu0 0
    %2227 = vmatprep.subr.bf16.mxu0 0
    %2228 = vmatpush1.bf16.msra.mxu0 0
    %2229 = vmatprep.subr.bf16.mxu0 0
    %2230 = vmatpush1.bf16.msra.mxu0 0
    %2231 = vmatprep.subr.bf16.mxu0 0
    %2232 = vmatpush1.bf16.msra.mxu0 0
    %2233 = vmatprep.subr.bf16.mxu0 0
    %2234 = vmatpush1.bf16.msra.mxu0 0
    %2235 = vmatprep.subr.bf16.mxu0 0
    %2236 = vmatpush1.bf16.msra.mxu0 0
    %2237 = vmatprep.subr.bf16.mxu0 0
    %2238 = vmatpush1.bf16.msra.mxu0 0
    %2239 = vmatprep.subr.bf16.mxu0 0
    %2240 = vmatpush1.bf16.msra.mxu0 0
    %2241 = vmatprep.subr.bf16.mxu0 0
    %2242 = vmatpush1.bf16.msra.mxu0 0
    %2243 = vmatprep.subr.bf16.mxu0 0
    %2244 = vmatpush1.bf16.msra.mxu0 0
    %2245 = vmatprep.subr.bf16.mxu0 0
    %2246 = vmatpush1.bf16.msra.mxu0 0
    %2247 = vmatprep.subr.bf16.mxu0 0
    %2248 = vmatpush1.bf16.msra.mxu0 0
    %2249 = vmatprep.subr.bf16.mxu0 0
    %2250 = vmatpush1.bf16.msra.mxu0 0
    %2251 = vmatprep.mubr.bf16.mxu0 0
    %2252 = vmatmul.mubr.bf16.gmra.mrb[0].mxu0 %v2107
    %v2253 = vpop.f32.mrb[0].mxu0
    %v2254 = vadd.f32 0.0, %v2253
    %v2255 = vpop.f32.mrb[0].mxu0
    %v2256 = vpop.f32.mrb[0].mxu0
    %v2257 = vadd.f32 0.0, %v2256
    %v2258 = vpop.f32.mrb[0].mxu0
    %2259 = vdwg.mxu0
    %v2264 = vunpack.c.l.b16 %v2075
    %v2265 = vunpack.c.l.b16 %v2076
    %v2266 = vunpack.c.l.b16 %v2077
    %v2267 = vunpack.c.l.b16 %v2078
    %v2268 = vpack.c.b16 %v2265, %v2264
    %v2269 = vpack.c.b16 %v2267, %v2266
    %2272 = vmatprep.subr.bf16.mxu0 0
    %2273 = vmatpush1.bf16.msra.mxu0 %v2268
    %2274 = vmatprep.subr.bf16.mxu0 0
    %2275 = vmatpush1.bf16.msra.mxu0 %v2269
    %2276 = vmatprep.subr.bf16.mxu0 0
    %2277 = vmatpush1.bf16.msra.mxu0 0
    %2278 = vmatprep.subr.bf16.mxu0 0
    %2279 = vmatpush1.bf16.msra.mxu0 0
    %2280 = vmatprep.subr.bf16.mxu0 0
    %2281 = vmatpush1.bf16.msra.mxu0 0
    %2282 = vmatprep.subr.bf16.mxu0 0
    %2283 = vmatpush1.bf16.msra.mxu0 0
    %2284 = vmatprep.subr.bf16.mxu0 0
    %2285 = vmatpush1.bf16.msra.mxu0 0
    %2286 = vmatprep.subr.bf16.mxu0 0
    %2287 = vmatpush1.bf16.msra.mxu0 0
    %2288 = vmatprep.subr.bf16.mxu0 0
    %2289 = vmatpush1.bf16.msra.mxu0 0
    %2290 = vmatprep.subr.bf16.mxu0 0
    %2291 = vmatpush1.bf16.msra.mxu0 0
    %2292 = vmatprep.subr.bf16.mxu0 0
    %2293 = vmatpush1.bf16.msra.mxu0 0
    %2294 = vmatprep.subr.bf16.mxu0 0
    %2295 = vmatpush1.bf16.msra.mxu0 0
    %2296 = vmatprep.subr.bf16.mxu0 0
    %2297 = vmatpush1.bf16.msra.mxu0 0
    %2298 = vmatprep.subr.bf16.mxu0 0
    %2299 = vmatpush1.bf16.msra.mxu0 0
    %2300 = vmatprep.subr.bf16.mxu0 0
    %2301 = vmatpush1.bf16.msra.mxu0 0
    %2302 = vmatprep.subr.bf16.mxu0 0
    %2303 = vmatpush1.bf16.msra.mxu0 0
    %2304 = vmatprep.mubr.bf16.mxu0 0
    %2305 = vmatmul.mubr.bf16.gmra.mrb[0].mxu0 %v2107
    %v2306 = vpop.f32.mrb[0].mxu0
    %v2307 = vadd.f32 0.0, %v2306
    %v2308 = vpop.f32.mrb[0].mxu0
    %v2309 = vpop.f32.mrb[0].mxu0
    %v2310 = vadd.f32 0.0, %v2309
    %v2311 = vpop.f32.mrb[0].mxu0
    %2312 = vdwg.mxu0
    %v2317 = vunpack.c.l.b16 %v2080
    %v2318 = vunpack.c.l.b16 %v2081
    %v2319 = vunpack.c.l.b16 %v2082
    %v2320 = vunpack.c.l.b16 %v2083
    %v2321 = vpack.c.b16 %v2318, %v2317
    %v2322 = vpack.c.b16 %v2320, %v2319
    %2325 = vmatprep.subr.bf16.mxu0 0
    %2326 = vmatpush1.bf16.msra.mxu0 %v2321
    %2327 = vmatprep.subr.bf16.mxu0 0
    %2328 = vmatpush1.bf16.msra.mxu0 %v2322
    %2329 = vmatprep.subr.bf16.mxu0 0
    %2330 = vmatpush1.bf16.msra.mxu0 0
    %2331 = vmatprep.subr.bf16.mxu0 0
    %2332 = vmatpush1.bf16.msra.mxu0 0
    %2333 = vmatprep.subr.bf16.mxu0 0
    %2334 = vmatpush1.bf16.msra.mxu0 0
    %2335 = vmatprep.subr.bf16.mxu0 0
    %2336 = vmatpush1.bf16.msra.mxu0 0
    %2337 = vmatprep.subr.bf16.mxu0 0
    %2338 = vmatpush1.bf16.msra.mxu0 0
    %2339 = vmatprep.subr.bf16.mxu0 0
    %2340 = vmatpush1.bf16.msra.mxu0 0
    %2341 = vmatprep.subr.bf16.mxu0 0
    %2342 = vmatpush1.bf16.msra.mxu0 0
    %2343 = vmatprep.subr.bf16.mxu0 0
    %2344 = vmatpush1.bf16.msra.mxu0 0
    %2345 = vmatprep.subr.bf16.mxu0 0
    %2346 = vmatpush1.bf16.msra.mxu0 0
    %2347 = vmatprep.subr.bf16.mxu0 0
    %2348 = vmatpush1.bf16.msra.mxu0 0
    %2349 = vmatprep.subr.bf16.mxu0 0
    %2350 = vmatpush1.bf16.msra.mxu0 0
    %2351 = vmatprep.subr.bf16.mxu0 0
    %2352 = vmatpush1.bf16.msra.mxu0 0
    %2353 = vmatprep.subr.bf16.mxu0 0
    %2354 = vmatpush1.bf16.msra.mxu0 0
    %2355 = vmatprep.subr.bf16.mxu0 0
    %2356 = vmatpush1.bf16.msra.mxu0 0
    %2357 = vmatprep.mubr.bf16.mxu0 0
    %2358 = vmatmul.mubr.bf16.gmra.mrb[0].mxu0 %v2107
    %v2359 = vpop.f32.mrb[0].mxu0
    %v2360 = vadd.f32 0.0, %v2359
    %v2361 = vpop.f32.mrb[0].mxu0
    %v2362 = vpop.f32.mrb[0].mxu0
    %v2363 = vadd.f32 0.0, %v2362
    %v2364 = vpop.f32.mrb[0].mxu0
    %2365 = vdwg.mxu0
    %v2370 = vunpack.c.l.b16 %v2084
    %v2371 = vunpack.c.l.b16 %v2085
    %v2372 = vunpack.c.l.b16 %v2086
    %v2373 = vunpack.c.l.b16 %v2087
    %v2374 = vpack.c.b16 %v2371, %v2370
    %v2375 = vpack.c.b16 %v2373, %v2372
    %2378 = vmatprep.subr.bf16.mxu0 0
    %2379 = vmatpush1.bf16.msra.mxu0 %v2374
    %2380 = vmatprep.subr.bf16.mxu0 0
    %2381 = vmatpush1.bf16.msra.mxu0 %v2375
    %2382 = vmatprep.subr.bf16.mxu0 0
    %2383 = vmatpush1.bf16.msra.mxu0 0
    %2384 = vmatprep.subr.bf16.mxu0 0
    %2385 = vmatpush1.bf16.msra.mxu0 0
    %2386 = vmatprep.subr.bf16.mxu0 0
    %2387 = vmatpush1.bf16.msra.mxu0 0
    %2388 = vmatprep.subr.bf16.mxu0 0
    %2389 = vmatpush1.bf16.msra.mxu0 0
    %2390 = vmatprep.subr.bf16.mxu0 0
    %2391 = vmatpush1.bf16.msra.mxu0 0
    %2392 = vmatprep.subr.bf16.mxu0 0
    %2393 = vmatpush1.bf16.msra.mxu0 0
    %2394 = vmatprep.subr.bf16.mxu0 0
    %2395 = vmatpush1.bf16.msra.mxu0 0
    %2396 = vmatprep.subr.bf16.mxu0 0
    %2397 = vmatpush1.bf16.msra.mxu0 0
    %2398 = vmatprep.subr.bf16.mxu0 0
    %2399 = vmatpush1.bf16.msra.mxu0 0
    %2400 = vmatprep.subr.bf16.mxu0 0
    %2401 = vmatpush1.bf16.msra.mxu0 0
    %2402 = vmatprep.subr.bf16.mxu0 0
    %2403 = vmatpush1.bf16.msra.mxu0 0
    %2404 = vmatprep.subr.bf16.mxu0 0
    %2405 = vmatpush1.bf16.msra.mxu0 0
    %2406 = vmatprep.subr.bf16.mxu0 0
    %2407 = vmatpush1.bf16.msra.mxu0 0
    %2408 = vmatprep.subr.bf16.mxu0 0
    %2409 = vmatpush1.bf16.msra.mxu0 0
    %2410 = vmatprep.mubr.bf16.mxu0 0
    %2411 = vmatmul.mubr.bf16.gmra.mrb[0].mxu0 %v2107
    %v2412 = vpop.f32.mrb[0].mxu0
    %v2413 = vadd.f32 0.0, %v2412
    %v2414 = vpop.f32.mrb[0].mxu0
    %v2415 = vpop.f32.mrb[0].mxu0
    %v2416 = vadd.f32 0.0, %v2415
    %v2417 = vpop.f32.mrb[0].mxu0
    %2418 = vdwg.mxu0
    %v2420 = vsel %vm702, %v2203, 0
    %v2423 = vsel %vm702, %v2254, 0
    %2425 = vmatprep.subr.mxu0 0.0
    %2426 = vmatpush1.xpose.msra.mxu0 %v2423
    %2427 = vmatprep.subr.mxu0 0.0
    %2428 = vmatpush1.xpose.msra.mxu0 0.0
    %2429 = vmatprep.subr.mxu0 0.0
    %2430 = vmatpush1.xpose.msra.mxu0 0.0
    %2431 = vmatprep.subr.mxu0 0.0
    %2432 = vmatpush1.xpose.msra.mxu0 0.0
    %2433 = vmatprep.subr.mxu0 0.0
    %2434 = vmatpush1.xpose.msra.mxu0 0.0
    %2435 = vmatprep.subr.mxu0 0.0
    %2436 = vmatpush1.xpose.msra.mxu0 0.0
    %2437 = vmatprep.subr.mxu0 0.0
    %2438 = vmatpush1.xpose.msra.mxu0 0.0
    %2439 = vmatprep.subr.mxu0 0.0
    %2440 = vmatpush1.xpose.msra.mxu0 0.0
    %2441 = vmatprep.subr.mxu0 0.0
    %2442 = vmatpush1.xpose.msra.mxu0 0.0
    %2443 = vmatprep.subr.mxu0 0.0
    %2444 = vmatpush1.xpose.msra.mxu0 0.0
    %2445 = vmatprep.subr.mxu0 0.0
    %2446 = vmatpush1.xpose.msra.mxu0 0.0
    %2447 = vmatprep.subr.mxu0 0.0
    %2448 = vmatpush1.xpose.msra.mxu0 0.0
    %2449 = vmatprep.subr.mxu0 0.0
    %2450 = vmatpush1.xpose.msra.mxu0 0.0
    %2451 = vmatprep.subr.mxu0 0.0
    %2452 = vmatpush1.xpose.msra.mxu0 0.0
    %2453 = vmatprep.subr.mxu0 0.0
    %2454 = vmatpush1.xpose.msra.mxu0 0.0
    %2455 = vmatprep.subr.mxu0 0.0
    %2456 = vmatpush1.xpose.msra.mxu0 0.0
    %2457 = vmatprep.subr.mxu0 0.0
    %2458 = vmatpush1.xpose.msra.mxu0 0.0
    %2459 = vmatprep.subr.mxu0 0.0
    %2460 = vmatpush1.xpose.msra.mxu0 0.0
    %2461 = vmatprep.subr.mxu0 0.0
    %2462 = vmatpush1.xpose.msra.mxu0 0.0
    %2463 = vmatprep.subr.mxu0 0.0
    %2464 = vmatpush1.xpose.msra.mxu0 0.0
    %2465 = vmatprep.subr.mxu0 0.0
    %2466 = vmatpush1.xpose.msra.mxu0 0.0
    %2467 = vmatprep.subr.mxu0 0.0
    %2468 = vmatpush1.xpose.msra.mxu0 0.0
    %2469 = vmatprep.subr.mxu0 0.0
    %2470 = vmatpush1.xpose.msra.mxu0 0.0
    %2471 = vmatprep.subr.mxu0 0.0
    %2472 = vmatpush1.xpose.msra.mxu0 0.0
    %2473 = vmatprep.subr.mxu0 0.0
    %2474 = vmatpush1.xpose.msra.mxu0 0.0
    %2475 = vmatprep.subr.mxu0 0.0
    %2476 = vmatpush1.xpose.msra.mxu0 0.0
    %2477 = vmatprep.subr.mxu0 0.0
    %2478 = vmatpush1.xpose.msra.mxu0 0.0
    %2479 = vmatprep.subr.mxu0 0.0
    %2480 = vmatpush1.xpose.msra.mxu0 0.0
    %2481 = vmatprep.subr.mxu0 0.0
    %2482 = vmatpush1.xpose.msra.mxu0 0.0
    %2483 = vmatprep.subr.mxu0 0.0
    %2484 = vmatpush1.xpose.msra.mxu0 0.0
    %2485 = vmatprep.subr.mxu0 0.0
    %2486 = vmatpush1.xpose.msra.mxu0 0.0
    %2487 = vmatprep.subr.mxu0 0.0
    %2488 = vmatpush1.xpose.msra.mxu0 0.0
    %2489 = vmatprep.mubr.f32.mxu0 0.0
    %2490 = vmatmul.mubr.f32.gmra.mrb[0].mxu0 %v2420
    %v2491 = vpop.f32.mrb[0].mxu0
    %v2492 = vadd.f32 %v700, %v2491
    %v2493 = vpop.f32.mrb[0].mxu0
    %2494 = vdwg.mxu0
    %v2496 = vsel %vm702, %v2205, 0
    %v2499 = vsel %vm702, %v2307, 0
    %2501 = vmatprep.subr.mxu0 0.0
    %2502 = vmatpush1.xpose.msra.mxu0 %v2499
    %2503 = vmatprep.subr.mxu0 0.0
    %2504 = vmatpush1.xpose.msra.mxu0 0.0
    %2505 = vmatprep.subr.mxu0 0.0
    %2506 = vmatpush1.xpose.msra.mxu0 0.0
    %2507 = vmatprep.subr.mxu0 0.0
    %2508 = vmatpush1.xpose.msra.mxu0 0.0
    %2509 = vmatprep.subr.mxu0 0.0
    %2510 = vmatpush1.xpose.msra.mxu0 0.0
    %2511 = vmatprep.subr.mxu0 0.0
    %2512 = vmatpush1.xpose.msra.mxu0 0.0
    %2513 = vmatprep.subr.mxu0 0.0
    %2514 = vmatpush1.xpose.msra.mxu0 0.0
    %2515 = vmatprep.subr.mxu0 0.0
    %2516 = vmatpush1.xpose.msra.mxu0 0.0
    %2517 = vmatprep.subr.mxu0 0.0
    %2518 = vmatpush1.xpose.msra.mxu0 0.0
    %2519 = vmatprep.subr.mxu0 0.0
    %2520 = vmatpush1.xpose.msra.mxu0 0.0
    %2521 = vmatprep.subr.mxu0 0.0
    %2522 = vmatpush1.xpose.msra.mxu0 0.0
    %2523 = vmatprep.subr.mxu0 0.0
    %2524 = vmatpush1.xpose.msra.mxu0 0.0
    %2525 = vmatprep.subr.mxu0 0.0
    %2526 = vmatpush1.xpose.msra.mxu0 0.0
    %2527 = vmatprep.subr.mxu0 0.0
    %2528 = vmatpush1.xpose.msra.mxu0 0.0
    %2529 = vmatprep.subr.mxu0 0.0
    %2530 = vmatpush1.xpose.msra.mxu0 0.0
    %2531 = vmatprep.subr.mxu0 0.0
    %2532 = vmatpush1.xpose.msra.mxu0 0.0
    %2533 = vmatprep.subr.mxu0 0.0
    %2534 = vmatpush1.xpose.msra.mxu0 0.0
    %2535 = vmatprep.subr.mxu0 0.0
    %2536 = vmatpush1.xpose.msra.mxu0 0.0
    %2537 = vmatprep.subr.mxu0 0.0
    %2538 = vmatpush1.xpose.msra.mxu0 0.0
    %2539 = vmatprep.subr.mxu0 0.0
    %2540 = vmatpush1.xpose.msra.mxu0 0.0
    %2541 = vmatprep.subr.mxu0 0.0
    %2542 = vmatpush1.xpose.msra.mxu0 0.0
    %2543 = vmatprep.subr.mxu0 0.0
    %2544 = vmatpush1.xpose.msra.mxu0 0.0
    %2545 = vmatprep.subr.mxu0 0.0
    %2546 = vmatpush1.xpose.msra.mxu0 0.0
    %2547 = vmatprep.subr.mxu0 0.0
    %2548 = vmatpush1.xpose.msra.mxu0 0.0
    %2549 = vmatprep.subr.mxu0 0.0
    %2550 = vmatpush1.xpose.msra.mxu0 0.0
    %2551 = vmatprep.subr.mxu0 0.0
    %2552 = vmatpush1.xpose.msra.mxu0 0.0
    %2553 = vmatprep.subr.mxu0 0.0
    %2554 = vmatpush1.xpose.msra.mxu0 0.0
    %2555 = vmatprep.subr.mxu0 0.0
    %2556 = vmatpush1.xpose.msra.mxu0 0.0
    %2557 = vmatprep.subr.mxu0 0.0
    %2558 = vmatpush1.xpose.msra.mxu0 0.0
    %2559 = vmatprep.subr.mxu0 0.0
    %2560 = vmatpush1.xpose.msra.mxu0 0.0
    %2561 = vmatprep.subr.mxu0 0.0
    %2562 = vmatpush1.xpose.msra.mxu0 0.0
    %2563 = vmatprep.subr.mxu0 0.0
    %2564 = vmatpush1.xpose.msra.mxu0 0.0
    %2565 = vmatprep.mubr.f32.mxu0 0.0
    %2566 = vmatmul.mubr.f32.gmra.mrb[0].mxu0 %v2496
    %v2567 = vpop.f32.mrb[0].mxu0
    %v2568 = vadd.f32 %v700, %v2567
    %v2569 = vpop.f32.mrb[0].mxu0
    %2570 = vdwg.mxu0
    %v2571 = vsel %vm855, %v2492, -inf
    %2572 = vmax.xlane.f32.xlu0 %v2571
    %v2573 = vpop.xlane.xlu0 %2572
    %v2574 = vsel %vm855, %v2568, -inf
    %2575 = vmax.xlane.f32.xlu0 %v2574
    %v2576 = vpop.xlane.xlu0 %2575
    %v2577 = vsub.f32 %v2492, %v2573
    %v2578 = vsub.f32 %v2568, %v2576
    %v2579 = vmul.f32 %v2577, 1.442695
    %v2580 = vpow.pop %v2579
    %v2581 = vmul.f32 %v2578, 1.442695
    %v2582 = vpow.pop %v2581
    %v2583 = vsel %vm855, %v2580, 0.0
    %2584 = vadd.xlane.f32.xlu0 %v2583
    %v2585 = vpop.xlane.xlu0 %2584
    %v2586 = vsel %vm855, %v2582, 0.0
    %2587 = vadd.xlane.f32.xlu0 %v2586
    %v2588 = vpop.xlane.xlu0 %2587
    %v2589 = vrcp.pop %v2585
    %v2590 = vrcp.pop %v2588
    %v2591 = vmul.f32 %v2580, %v2589
    %v2592 = vmul.f32 %v2582, %v2590
    %v2594 = vsel %vm855, %v2591, 0
    %2596 = vmatprep.subr.mxu0 0.0
    %2597 = vmatpush1.msra.mxu0 %v2360
    %2598 = vmatprep.subr.mxu0 0.0
    %2599 = vmatpush1.msra.mxu0 0.0
    %2600 = vmatprep.subr.mxu0 0.0
    %2601 = vmatpush1.msra.mxu0 0.0
    %2602 = vmatprep.subr.mxu0 0.0
    %2603 = vmatpush1.msra.mxu0 0.0
    %2604 = vmatprep.subr.mxu0 0.0
    %2605 = vmatpush1.msra.mxu0 0.0
    %2606 = vmatprep.subr.mxu0 0.0
    %2607 = vmatpush1.msra.mxu0 0.0
    %2608 = vmatprep.subr.mxu0 0.0
    %2609 = vmatpush1.msra.mxu0 0.0
    %2610 = vmatprep.subr.mxu0 0.0
    %2611 = vmatpush1.msra.mxu0 0.0
    %2612 = vmatprep.subr.mxu0 0.0
    %2613 = vmatpush1.msra.mxu0 0.0
    %2614 = vmatprep.subr.mxu0 0.0
    %2615 = vmatpush1.msra.mxu0 0.0
    %2616 = vmatprep.subr.mxu0 0.0
    %2617 = vmatpush1.msra.mxu0 0.0
    %2618 = vmatprep.subr.mxu0 0.0
    %2619 = vmatpush1.msra.mxu0 0.0
    %2620 = vmatprep.subr.mxu0 0.0
    %2621 = vmatpush1.msra.mxu0 0.0
    %2622 = vmatprep.subr.mxu0 0.0
    %2623 = vmatpush1.msra.mxu0 0.0
    %2624 = vmatprep.subr.mxu0 0.0
    %2625 = vmatpush1.msra.mxu0 0.0
    %2626 = vmatprep.subr.mxu0 0.0
    %2627 = vmatpush1.msra.mxu0 0.0
    %2628 = vmatprep.subr.mxu0 0.0
    %2629 = vmatpush1.msra.mxu0 0.0
    %2630 = vmatprep.subr.mxu0 0.0
    %2631 = vmatpush1.msra.mxu0 0.0
    %2632 = vmatprep.subr.mxu0 0.0
    %2633 = vmatpush1.msra.mxu0 0.0
    %2634 = vmatprep.subr.mxu0 0.0
    %2635 = vmatpush1.msra.mxu0 0.0
    %2636 = vmatprep.subr.mxu0 0.0
    %2637 = vmatpush1.msra.mxu0 0.0
    %2638 = vmatprep.subr.mxu0 0.0
    %2639 = vmatpush1.msra.mxu0 0.0
    %2640 = vmatprep.subr.mxu0 0.0
    %2641 = vmatpush1.msra.mxu0 0.0
    %2642 = vmatprep.subr.mxu0 0.0
    %2643 = vmatpush1.msra.mxu0 0.0
    %2644 = vmatprep.subr.mxu0 0.0
    %2645 = vmatpush1.msra.mxu0 0.0
    %2646 = vmatprep.subr.mxu0 0.0
    %2647 = vmatpush1.msra.mxu0 0.0
    %2648 = vmatprep.subr.mxu0 0.0
    %2649 = vmatpush1.msra.mxu0 0.0
    %2650 = vmatprep.subr.mxu0 0.0
    %2651 = vmatpush1.msra.mxu0 0.0
    %2652 = vmatprep.subr.mxu0 0.0
    %2653 = vmatpush1.msra.mxu0 0.0
    %2654 = vmatprep.subr.mxu0 0.0
    %2655 = vmatpush1.msra.mxu0 0.0
    %2656 = vmatprep.subr.mxu0 0.0
    %2657 = vmatpush1.msra.mxu0 0.0
    %2658 = vmatprep.subr.mxu0 0.0
    %2659 = vmatpush1.msra.mxu0 0.0
    %2660 = vmatprep.mubr.f32.mxu0 0.0
    %2661 = vmatmul.mubr.f32.gmra.mrb[0].mxu0 %v2594
    %v2662 = vpop.f32.mrb[0].mxu0
    %v2663 = vadd.f32 0.0, %v2662
    %v2664 = vpop.f32.mrb[0].mxu0
    %2665 = vdwg.mxu0
    %v2667 = vsel %vm855, %v2592, 0
    %2669 = vmatprep.subr.mxu0 0.0
    %2670 = vmatpush1.msra.mxu0 %v2413
    %2671 = vmatprep.subr.mxu0 0.0
    %2672 = vmatpush1.msra.mxu0 0.0
    %2673 = vmatprep.subr.mxu0 0.0
    %2674 = vmatpush1.msra.mxu0 0.0
    %2675 = vmatprep.subr.mxu0 0.0
    %2676 = vmatpush1.msra.mxu0 0.0
    %2677 = vmatprep.subr.mxu0 0.0
    %2678 = vmatpush1.msra.mxu0 0.0
    %2679 = vmatprep.subr.mxu0 0.0
    %2680 = vmatpush1.msra.mxu0 0.0
    %2681 = vmatprep.subr.mxu0 0.0
    %2682 = vmatpush1.msra.mxu0 0.0
    %2683 = vmatprep.subr.mxu0 0.0
    %2684 = vmatpush1.msra.mxu0 0.0
    %2685 = vmatprep.subr.mxu0 0.0
    %2686 = vmatpush1.msra.mxu0 0.0
    %2687 = vmatprep.subr.mxu0 0.0
    %2688 = vmatpush1.msra.mxu0 0.0
    %2689 = vmatprep.subr.mxu0 0.0
    %2690 = vmatpush1.msra.mxu0 0.0
    %2691 = vmatprep.subr.mxu0 0.0
    %2692 = vmatpush1.msra.mxu0 0.0
    %2693 = vmatprep.subr.mxu0 0.0
    %2694 = vmatpush1.msra.mxu0 0.0
    %2695 = vmatprep.subr.mxu0 0.0
    %2696 = vmatpush1.msra.mxu0 0.0
    %2697 = vmatprep.subr.mxu0 0.0
    %2698 = vmatpush1.msra.mxu0 0.0
    %2699 = vmatprep.subr.mxu0 0.0
    %2700 = vmatpush1.msra.mxu0 0.0
    %2701 = vmatprep.subr.mxu0 0.0
    %2702 = vmatpush1.msra.mxu0 0.0
    %2703 = vmatprep.subr.mxu0 0.0
    %2704 = vmatpush1.msra.mxu0 0.0
    %2705 = vmatprep.subr.mxu0 0.0
    %2706 = vmatpush1.msra.mxu0 0.0
    %2707 = vmatprep.subr.mxu0 0.0
    %2708 = vmatpush1.msra.mxu0 0.0
    %2709 = vmatprep.subr.mxu0 0.0
    %2710 = vmatpush1.msra.mxu0 0.0
    %2711 = vmatprep.subr.mxu0 0.0
    %2712 = vmatpush1.msra.mxu0 0.0
    %2713 = vmatprep.subr.mxu0 0.0
    %2714 = vmatpush1.msra.mxu0 0.0
    %2715 = vmatprep.subr.mxu0 0.0
    %2716 = vmatpush1.msra.mxu0 0.0
    %2717 = vmatprep.subr.mxu0 0.0
    %2718 = vmatpush1.msra.mxu0 0.0
    %2719 = vmatprep.subr.mxu0 0.0
    %2720 = vmatpush1.msra.mxu0 0.0
    %2721 = vmatprep.subr.mxu0 0.0
    %2722 = vmatpush1.msra.mxu0 0.0
    %2723 = vmatprep.subr.mxu0 0.0
    %2724 = vmatpush1.msra.mxu0 0.0
    %2725 = vmatprep.subr.mxu0 0.0
    %2726 = vmatpush1.msra.mxu0 0.0
    %2727 = vmatprep.subr.mxu0 0.0
    %2728 = vmatpush1.msra.mxu0 0.0
    %2729 = vmatprep.subr.mxu0 0.0
    %2730 = vmatpush1.msra.mxu0 0.0
    %2731 = vmatprep.subr.mxu0 0.0
    %2732 = vmatpush1.msra.mxu0 0.0
    %2733 = vmatprep.mubr.f32.mxu0 0.0
    %2734 = vmatmul.mubr.f32.gmra.mrb[0].mxu0 %v2667
    %v2735 = vpop.f32.mrb[0].mxu0
    %v2736 = vadd.f32 0.0, %v2735
    %v2737 = vpop.f32.mrb[0].mxu0
    %2738 = vdwg.mxu0
    %v2740 = vsel %vm702, %v2204, 0
    %v2743 = vsel %vm702, %v2257, 0
    %2745 = vmatprep.subr.mxu0 0.0
    %2746 = vmatpush1.xpose.msra.mxu0 %v2743
    %2747 = vmatprep.subr.mxu0 0.0
    %2748 = vmatpush1.xpose.msra.mxu0 0.0
    %2749 = vmatprep.subr.mxu0 0.0
    %2750 = vmatpush1.xpose.msra.mxu0 0.0
    %2751 = vmatprep.subr.mxu0 0.0
    %2752 = vmatpush1.xpose.msra.mxu0 0.0
    %2753 = vmatprep.subr.mxu0 0.0
    %2754 = vmatpush1.xpose.msra.mxu0 0.0
    %2755 = vmatprep.subr.mxu0 0.0
    %2756 = vmatpush1.xpose.msra.mxu0 0.0
    %2757 = vmatprep.subr.mxu0 0.0
    %2758 = vmatpush1.xpose.msra.mxu0 0.0
    %2759 = vmatprep.subr.mxu0 0.0
    %2760 = vmatpush1.xpose.msra.mxu0 0.0
    %2761 = vmatprep.subr.mxu0 0.0
    %2762 = vmatpush1.xpose.msra.mxu0 0.0
    %2763 = vmatprep.subr.mxu0 0.0
    %2764 = vmatpush1.xpose.msra.mxu0 0.0
    %2765 = vmatprep.subr.mxu0 0.0
    %2766 = vmatpush1.xpose.msra.mxu0 0.0
    %2767 = vmatprep.subr.mxu0 0.0
    %2768 = vmatpush1.xpose.msra.mxu0 0.0
    %2769 = vmatprep.subr.mxu0 0.0
    %2770 = vmatpush1.xpose.msra.mxu0 0.0
    %2771 = vmatprep.subr.mxu0 0.0
    %2772 = vmatpush1.xpose.msra.mxu0 0.0
    %2773 = vmatprep.subr.mxu0 0.0
    %2774 = vmatpush1.xpose.msra.mxu0 0.0
    %2775 = vmatprep.subr.mxu0 0.0
    %2776 = vmatpush1.xpose.msra.mxu0 0.0
    %2777 = vmatprep.subr.mxu0 0.0
    %2778 = vmatpush1.xpose.msra.mxu0 0.0
    %2779 = vmatprep.subr.mxu0 0.0
    %2780 = vmatpush1.xpose.msra.mxu0 0.0
    %2781 = vmatprep.subr.mxu0 0.0
    %2782 = vmatpush1.xpose.msra.mxu0 0.0
    %2783 = vmatprep.subr.mxu0 0.0
    %2784 = vmatpush1.xpose.msra.mxu0 0.0
    %2785 = vmatprep.subr.mxu0 0.0
    %2786 = vmatpush1.xpose.msra.mxu0 0.0
    %2787 = vmatprep.subr.mxu0 0.0
    %2788 = vmatpush1.xpose.msra.mxu0 0.0
    %2789 = vmatprep.subr.mxu0 0.0
    %2790 = vmatpush1.xpose.msra.mxu0 0.0
    %2791 = vmatprep.subr.mxu0 0.0
    %2792 = vmatpush1.xpose.msra.mxu0 0.0
    %2793 = vmatprep.subr.mxu0 0.0
    %2794 = vmatpush1.xpose.msra.mxu0 0.0
    %2795 = vmatprep.subr.mxu0 0.0
    %2796 = vmatpush1.xpose.msra.mxu0 0.0
    %2797 = vmatprep.subr.mxu0 0.0
    %2798 = vmatpush1.xpose.msra.mxu0 0.0
    %2799 = vmatprep.subr.mxu0 0.0
    %2800 = vmatpush1.xpose.msra.mxu0 0.0
    %2801 = vmatprep.subr.mxu0 0.0
    %2802 = vmatpush1.xpose.msra.mxu0 0.0
    %2803 = vmatprep.subr.mxu0 0.0
    %2804 = vmatpush1.xpose.msra.mxu0 0.0
    %2805 = vmatprep.subr.mxu0 0.0
    %2806 = vmatpush1.xpose.msra.mxu0 0.0
    %2807 = vmatprep.subr.mxu0 0.0
    %2808 = vmatpush1.xpose.msra.mxu0 0.0
    %2809 = vmatprep.mubr.f32.mxu0 0.0
    %2810 = vmatmul.mubr.f32.gmra.mrb[0].mxu0 %v2740
    %v2811 = vpop.f32.mrb[0].mxu0
    %v2812 = vadd.f32 %v1028, %v2811
    %v2813 = vpop.f32.mrb[0].mxu0
    %2814 = vdwg.mxu0
    %v2816 = vsel %vm702, %v2206, 0
    %v2819 = vsel %vm702, %v2310, 0
    %2821 = vmatprep.subr.mxu0 0.0
    %2822 = vmatpush1.xpose.msra.mxu0 %v2819
    %2823 = vmatprep.subr.mxu0 0.0
    %2824 = vmatpush1.xpose.msra.mxu0 0.0
    %2825 = vmatprep.subr.mxu0 0.0
    %2826 = vmatpush1.xpose.msra.mxu0 0.0
    %2827 = vmatprep.subr.mxu0 0.0
    %2828 = vmatpush1.xpose.msra.mxu0 0.0
    %2829 = vmatprep.subr.mxu0 0.0
    %2830 = vmatpush1.xpose.msra.mxu0 0.0
    %2831 = vmatprep.subr.mxu0 0.0
    %2832 = vmatpush1.xpose.msra.mxu0 0.0
    %2833 = vmatprep.subr.mxu0 0.0
    %2834 = vmatpush1.xpose.msra.mxu0 0.0
    %2835 = vmatprep.subr.mxu0 0.0
    %2836 = vmatpush1.xpose.msra.mxu0 0.0
    %2837 = vmatprep.subr.mxu0 0.0
    %2838 = vmatpush1.xpose.msra.mxu0 0.0
    %2839 = vmatprep.subr.mxu0 0.0
    %2840 = vmatpush1.xpose.msra.mxu0 0.0
    %2841 = vmatprep.subr.mxu0 0.0
    %2842 = vmatpush1.xpose.msra.mxu0 0.0
    %2843 = vmatprep.subr.mxu0 0.0
    %2844 = vmatpush1.xpose.msra.mxu0 0.0
    %2845 = vmatprep.subr.mxu0 0.0
    %2846 = vmatpush1.xpose.msra.mxu0 0.0
    %2847 = vmatprep.subr.mxu0 0.0
    %2848 = vmatpush1.xpose.msra.mxu0 0.0
    %2849 = vmatprep.subr.mxu0 0.0
    %2850 = vmatpush1.xpose.msra.mxu0 0.0
    %2851 = vmatprep.subr.mxu0 0.0
    %2852 = vmatpush1.xpose.msra.mxu0 0.0
    %2853 = vmatprep.subr.mxu0 0.0
    %2854 = vmatpush1.xpose.msra.mxu0 0.0
    %2855 = vmatprep.subr.mxu0 0.0
    %2856 = vmatpush1.xpose.msra.mxu0 0.0
    %2857 = vmatprep.subr.mxu0 0.0
    %2858 = vmatpush1.xpose.msra.mxu0 0.0
    %2859 = vmatprep.subr.mxu0 0.0
    %2860 = vmatpush1.xpose.msra.mxu0 0.0
    %2861 = vmatprep.subr.mxu0 0.0
    %2862 = vmatpush1.xpose.msra.mxu0 0.0
    %2863 = vmatprep.subr.mxu0 0.0
    %2864 = vmatpush1.xpose.msra.mxu0 0.0
    %2865 = vmatprep.subr.mxu0 0.0
    %2866 = vmatpush1.xpose.msra.mxu0 0.0
    %2867 = vmatprep.subr.mxu0 0.0
    %2868 = vmatpush1.xpose.msra.mxu0 0.0
    %2869 = vmatprep.subr.mxu0 0.0
    %2870 = vmatpush1.xpose.msra.mxu0 0.0
    %2871 = vmatprep.subr.mxu0 0.0
    %2872 = vmatpush1.xpose.msra.mxu0 0.0
    %2873 = vmatprep.subr.mxu0 0.0
    %2874 = vmatpush1.xpose.msra.mxu0 0.0
    %2875 = vmatprep.subr.mxu0 0.0
    %2876 = vmatpush1.xpose.msra.mxu0 0.0
    %2877 = vmatprep.subr.mxu0 0.0
    %2878 = vmatpush1.xpose.msra.mxu0 0.0
    %2879 = vmatprep.subr.mxu0 0.0
    %2880 = vmatpush1.xpose.msra.mxu0 0.0
    %2881 = vmatprep.subr.mxu0 0.0
    %2882 = vmatpush1.xpose.msra.mxu0 0.0
    %2883 = vmatprep.subr.mxu0 0.0
    %2884 = vmatpush1.xpose.msra.mxu0 0.0
    %2885 = vmatprep.mubr.f32.mxu0 0.0
    %2886 = vmatmul.mubr.f32.gmra.mrb[0].mxu0 %v2816
    %v2887 = vpop.f32.mrb[0].mxu0
    %v2888 = vadd.f32 %v1028, %v2887
    %v2889 = vpop.f32.mrb[0].mxu0
    %2890 = vdwg.mxu0
    %v2891 = vsel %vm855, %v2812, -inf
    %2892 = vmax.xlane.f32.xlu0 %v2891
    %v2893 = vpop.xlane.xlu0 %2892
    %v2894 = vsel %vm855, %v2888, -inf
    %2895 = vmax.xlane.f32.xlu0 %v2894
    %v2896 = vpop.xlane.xlu0 %2895
    %v2897 = vsub.f32 %v2812, %v2893
    %v2898 = vsub.f32 %v2888, %v2896
    %v2899 = vmul.f32 %v2897, 1.442695
    %v2900 = vpow.pop %v2899
    %v2901 = vmul.f32 %v2898, 1.442695
    %v2902 = vpow.pop %v2901
    %v2903 = vsel %vm855, %v2900, 0.0
    %2904 = vadd.xlane.f32.xlu0 %v2903
    %v2905 = vpop.xlane.xlu0 %2904
    %v2906 = vsel %vm855, %v2902, 0.0
    %2907 = vadd.xlane.f32.xlu0 %v2906
    %v2908 = vpop.xlane.xlu0 %2907
    %v2909 = vrcp.pop %v2905
    %v2910 = vrcp.pop %v2908
    %v2911 = vmul.f32 %v2900, %v2909
    %v2912 = vmul.f32 %v2902, %v2910
    %v2914 = vsel %vm855, %v2911, 0
    %2916 = vmatprep.subr.mxu0 0.0
    %2917 = vmatpush1.msra.mxu0 %v2363
    %2918 = vmatprep.subr.mxu0 0.0
    %2919 = vmatpush1.msra.mxu0 0.0
    %2920 = vmatprep.subr.mxu0 0.0
    %2921 = vmatpush1.msra.mxu0 0.0
    %2922 = vmatprep.subr.mxu0 0.0
    %2923 = vmatpush1.msra.mxu0 0.0
    %2924 = vmatprep.subr.mxu0 0.0
    %2925 = vmatpush1.msra.mxu0 0.0
    %2926 = vmatprep.subr.mxu0 0.0
    %2927 = vmatpush1.msra.mxu0 0.0
    %2928 = vmatprep.subr.mxu0 0.0
    %2929 = vmatpush1.msra.mxu0 0.0
    %2930 = vmatprep.subr.mxu0 0.0
    %2931 = vmatpush1.msra.mxu0 0.0
    %2932 = vmatprep.subr.mxu0 0.0
    %2933 = vmatpush1.msra.mxu0 0.0
    %2934 = vmatprep.subr.mxu0 0.0
    %2935 = vmatpush1.msra.mxu0 0.0
    %2936 = vmatprep.subr.mxu0 0.0
    %2937 = vmatpush1.msra.mxu0 0.0
    %2938 = vmatprep.subr.mxu0 0.0
    %2939 = vmatpush1.msra.mxu0 0.0
    %2940 = vmatprep.subr.mxu0 0.0
    %2941 = vmatpush1.msra.mxu0 0.0
    %2942 = vmatprep.subr.mxu0 0.0
    %2943 = vmatpush1.msra.mxu0 0.0
    %2944 = vmatprep.subr.mxu0 0.0
    %2945 = vmatpush1.msra.mxu0 0.0
    %2946 = vmatprep.subr.mxu0 0.0
    %2947 = vmatpush1.msra.mxu0 0.0
    %2948 = vmatprep.subr.mxu0 0.0
    %2949 = vmatpush1.msra.mxu0 0.0
    %2950 = vmatprep.subr.mxu0 0.0
    %2951 = vmatpush1.msra.mxu0 0.0
    %2952 = vmatprep.subr.mxu0 0.0
    %2953 = vmatpush1.msra.mxu0 0.0
    %2954 = vmatprep.subr.mxu0 0.0
    %2955 = vmatpush1.msra.mxu0 0.0
    %2956 = vmatprep.subr.mxu0 0.0
    %2957 = vmatpush1.msra.mxu0 0.0
    %2958 = vmatprep.subr.mxu0 0.0
    %2959 = vmatpush1.msra.mxu0 0.0
    %2960 = vmatprep.subr.mxu0 0.0
    %2961 = vmatpush1.msra.mxu0 0.0
    %2962 = vmatprep.subr.mxu0 0.0
    %2963 = vmatpush1.msra.mxu0 0.0
    %2964 = vmatprep.subr.mxu0 0.0
    %2965 = vmatpush1.msra.mxu0 0.0
    %2966 = vmatprep.subr.mxu0 0.0
    %2967 = vmatpush1.msra.mxu0 0.0
    %2968 = vmatprep.subr.mxu0 0.0
    %2969 = vmatpush1.msra.mxu0 0.0
    %2970 = vmatprep.subr.mxu0 0.0
    %2971 = vmatpush1.msra.mxu0 0.0
    %2972 = vmatprep.subr.mxu0 0.0
    %2973 = vmatpush1.msra.mxu0 0.0
    %2974 = vmatprep.subr.mxu0 0.0
    %2975 = vmatpush1.msra.mxu0 0.0
    %2976 = vmatprep.subr.mxu0 0.0
    %2977 = vmatpush1.msra.mxu0 0.0
    %2978 = vmatprep.subr.mxu0 0.0
    %2979 = vmatpush1.msra.mxu0 0.0
    %2980 = vmatprep.mubr.f32.mxu0 0.0
    %2981 = vmatmul.mubr.f32.gmra.mrb[0].mxu0 %v2914
    %v2982 = vpop.f32.mrb[0].mxu0
    %v2983 = vadd.f32 0.0, %v2982
    %v2984 = vpop.f32.mrb[0].mxu0
    %2985 = vdwg.mxu0
    %v2987 = vsel %vm855, %v2912, 0
    %2989 = vmatprep.subr.mxu0 0.0
    %2990 = vmatpush1.msra.mxu0 %v2416
    %2991 = vmatprep.subr.mxu0 0.0
    %2992 = vmatpush1.msra.mxu0 0.0
    %2993 = vmatprep.subr.mxu0 0.0
    %2994 = vmatpush1.msra.mxu0 0.0
    %2995 = vmatprep.subr.mxu0 0.0
    %2996 = vmatpush1.msra.mxu0 0.0
    %2997 = vmatprep.subr.mxu0 0.0
    %2998 = vmatpush1.msra.mxu0 0.0
    %2999 = vmatprep.subr.mxu0 0.0
    %3000 = vmatpush1.msra.mxu0 0.0
    %3001 = vmatprep.subr.mxu0 0.0
    %3002 = vmatpush1.msra.mxu0 0.0
    %3003 = vmatprep.subr.mxu0 0.0
    %3004 = vmatpush1.msra.mxu0 0.0
    %3005 = vmatprep.subr.mxu0 0.0
    %3006 = vmatpush1.msra.mxu0 0.0
    %3007 = vmatprep.subr.mxu0 0.0
    %3008 = vmatpush1.msra.mxu0 0.0
    %3009 = vmatprep.subr.mxu0 0.0
    %3010 = vmatpush1.msra.mxu0 0.0
    %3011 = vmatprep.subr.mxu0 0.0
    %3012 = vmatpush1.msra.mxu0 0.0
    %3013 = vmatprep.subr.mxu0 0.0
    %3014 = vmatpush1.msra.mxu0 0.0
    %3015 = vmatprep.subr.mxu0 0.0
    %3016 = vmatpush1.msra.mxu0 0.0
    %3017 = vmatprep.subr.mxu0 0.0
    %3018 = vmatpush1.msra.mxu0 0.0
    %3019 = vmatprep.subr.mxu0 0.0
    %3020 = vmatpush1.msra.mxu0 0.0
    %3021 = vmatprep.subr.mxu0 0.0
    %3022 = vmatpush1.msra.mxu0 0.0
    %3023 = vmatprep.subr.mxu0 0.0
    %3024 = vmatpush1.msra.mxu0 0.0
    %3025 = vmatprep.subr.mxu0 0.0
    %3026 = vmatpush1.msra.mxu0 0.0
    %3027 = vmatprep.subr.mxu0 0.0
    %3028 = vmatpush1.msra.mxu0 0.0
    %3029 = vmatprep.subr.mxu0 0.0
    %3030 = vmatpush1.msra.mxu0 0.0
    %3031 = vmatprep.subr.mxu0 0.0
    %3032 = vmatpush1.msra.mxu0 0.0
    %3033 = vmatprep.subr.mxu0 0.0
    %3034 = vmatpush1.msra.mxu0 0.0
    %3035 = vmatprep.subr.mxu0 0.0
    %3036 = vmatpush1.msra.mxu0 0.0
    %3037 = vmatprep.subr.mxu0 0.0
    %3038 = vmatpush1.msra.mxu0 0.0
    %3039 = vmatprep.subr.mxu0 0.0
    %3040 = vmatpush1.msra.mxu0 0.0
    %3041 = vmatprep.subr.mxu0 0.0
    %3042 = vmatpush1.msra.mxu0 0.0
    %3043 = vmatprep.subr.mxu0 0.0
    %3044 = vmatpush1.msra.mxu0 0.0
    %3045 = vmatprep.subr.mxu0 0.0
    %3046 = vmatpush1.msra.mxu0 0.0
    %3047 = vmatprep.subr.mxu0 0.0
    %3048 = vmatpush1.msra.mxu0 0.0
    %3049 = vmatprep.subr.mxu0 0.0
    %3050 = vmatpush1.msra.mxu0 0.0
    %3051 = vmatprep.subr.mxu0 0.0
    %3052 = vmatpush1.msra.mxu0 0.0
    %3053 = vmatprep.mubr.f32.mxu0 0.0
    %3054 = vmatmul.mubr.f32.gmra.mrb[0].mxu0 %v2987
    %v3055 = vpop.f32.mrb[0].mxu0
    %v3056 = vadd.f32 0.0, %v3055
    %v3057 = vpop.f32.mrb[0].mxu0
    %3058 = vdwg.mxu0
    %v3059 = vpack.c.bf16 %v2983, %v2663
    %v3060 = vpack.c.bf16 %v3056, %v2736
    %v3063 = vunpack.c.l.b16 %v2089
    %v3064 = vunpack.c.l.b16 %v2090
    %v3065 = vpack.c.b16 %v3064, %v3063
    %v3068 = vsel %vm702, %v3059, 0
    %3070 = vmatprep.subr.bf16.mxu0 0
    %3071 = vmatpush1.bf16.msra.mxu0 %v3065
    %3072 = vmatprep.subr.bf16.mxu0 0
    %3073 = vmatpush1.bf16.msra.mxu0 0
    %3074 = vmatprep.subr.bf16.mxu0 0
    %3075 = vmatpush1.bf16.msra.mxu0 0
    %3076 = vmatprep.subr.bf16.mxu0 0
    %3077 = vmatpush1.bf16.msra.mxu0 0
    %3078 = vmatprep.subr.bf16.mxu0 0
    %3079 = vmatpush1.bf16.msra.mxu0 0
    %3080 = vmatprep.subr.bf16.mxu0 0
    %3081 = vmatpush1.bf16.msra.mxu0 0
    %3082 = vmatprep.subr.bf16.mxu0 0
    %3083 = vmatpush1.bf16.msra.mxu0 0
    %3084 = vmatprep.subr.bf16.mxu0 0
    %3085 = vmatpush1.bf16.msra.mxu0 0
    %3086 = vmatprep.subr.bf16.mxu0 0
    %3087 = vmatpush1.bf16.msra.mxu0 0
    %3088 = vmatprep.subr.bf16.mxu0 0
    %3089 = vmatpush1.bf16.msra.mxu0 0
    %3090 = vmatprep.subr.bf16.mxu0 0
    %3091 = vmatpush1.bf16.msra.mxu0 0
    %3092 = vmatprep.subr.bf16.mxu0 0
    %3093 = vmatpush1.bf16.msra.mxu0 0
    %3094 = vmatprep.subr.bf16.mxu0 0
    %3095 = vmatpush1.bf16.msra.mxu0 0
    %3096 = vmatprep.subr.bf16.mxu0 0
    %3097 = vmatpush1.bf16.msra.mxu0 0
    %3098 = vmatprep.subr.bf16.mxu0 0
    %3099 = vmatpush1.bf16.msra.mxu0 0
    %3100 = vmatprep.subr.bf16.mxu0 0
    %3101 = vmatpush1.bf16.msra.mxu0 0
    %3102 = vmatprep.mubr.bf16.mxu0 0
    %3103 = vmatmul.mubr.bf16.gmra.mrb[0].mxu0 %v3068
    %v3104 = vpop.f32.mrb[0].mxu0
    %v3105 = vadd.f32 0.0, %v3104
    %v3106 = vpop.f32.mrb[0].mxu0
    %v3107 = vpop.f32.mrb[0].mxu0
    %v3108 = vadd.f32 0.0, %v3107
    %v3109 = vpop.f32.mrb[0].mxu0
    %3110 = vdwg.mxu0
    %v3113 = vunpack.c.l.b16 %v2091
    %v3114 = vunpack.c.l.b16 %v2092
    %v3115 = vpack.c.b16 %v3114, %v3113
    %v3118 = vsel %vm702, %v3060, 0
    %3120 = vmatprep.subr.bf16.mxu0 0
    %3121 = vmatpush1.bf16.msra.mxu0 %v3115
    %3122 = vmatprep.subr.bf16.mxu0 0
    %3123 = vmatpush1.bf16.msra.mxu0 0
    %3124 = vmatprep.subr.bf16.mxu0 0
    %3125 = vmatpush1.bf16.msra.mxu0 0
    %3126 = vmatprep.subr.bf16.mxu0 0
    %3127 = vmatpush1.bf16.msra.mxu0 0
    %3128 = vmatprep.subr.bf16.mxu0 0
    %3129 = vmatpush1.bf16.msra.mxu0 0
    %3130 = vmatprep.subr.bf16.mxu0 0
    %3131 = vmatpush1.bf16.msra.mxu0 0
    %3132 = vmatprep.subr.bf16.mxu0 0
    %3133 = vmatpush1.bf16.msra.mxu0 0
    %3134 = vmatprep.subr.bf16.mxu0 0
    %3135 = vmatpush1.bf16.msra.mxu0 0
    %3136 = vmatprep.subr.bf16.mxu0 0
    %3137 = vmatpush1.bf16.msra.mxu0 0
    %3138 = vmatprep.subr.bf16.mxu0 0
    %3139 = vmatpush1.bf16.msra.mxu0 0
    %3140 = vmatprep.subr.bf16.mxu0 0
    %3141 = vmatpush1.bf16.msra.mxu0 0
    %3142 = vmatprep.subr.bf16.mxu0 0
    %3143 = vmatpush1.bf16.msra.mxu0 0
    %3144 = vmatprep.subr.bf16.mxu0 0
    %3145 = vmatpush1.bf16.msra.mxu0 0
    %3146 = vmatprep.subr.bf16.mxu0 0
    %3147 = vmatpush1.bf16.msra.mxu0 0
    %3148 = vmatprep.subr.bf16.mxu0 0
    %3149 = vmatpush1.bf16.msra.mxu0 0
    %3150 = vmatprep.subr.bf16.mxu0 0
    %3151 = vmatpush1.bf16.msra.mxu0 0
    %3152 = vmatprep.mubr.bf16.mxu0 0
    %3153 = vmatmul.mubr.bf16.gmra.mrb[0].mxu0 %v3118
    %v3154 = vpop.f32.mrb[0].mxu0
    %v3155 = vadd.f32 0.0, %v3154
    %v3156 = vpop.f32.mrb[0].mxu0
    %v3157 = vpop.f32.mrb[0].mxu0
    %v3158 = vadd.f32 0.0, %v3157
    %v3159 = vpop.f32.mrb[0].mxu0
    %3160 = vdwg.mxu0
    %v3161 = vsel %vm125, %v3105, 0.0
    %v3162 = vsel %vm125, %v3155, 0.0
    %v3163 = vadd.f32 %v3161, %v3162
    %v3164 = vsel %vm125, %v3108, 0.0
    %v3165 = vsel %vm125, %v3158, 0.0
    %v3166 = vadd.f32 %v3164, %v3165
    %v3167 = vadd.f32 %v1999, %v3163
    %v3168 = vadd.f32 %v2000, %v3166
    %s3169 = scalar_lea.vmem %s12, 1
    %v3170 = vld [vmem:[%s3169] sm:$0x1]
    %s3171 = scalar_lea.vmem %s13, 1
    %v3172 = vld [vmem:[%s3171] sm:$0x1]
    %v3173 = vsel %vm125, %v3167, 0.0
    %3174 = vadd.xlane.f32.xlu0 %v3173
    %v3175 = vpop.xlane.xlu0 %3174
    %v3176 = vsel %vm125, %v3168, 0.0
    %3177 = vadd.xlane.f32.xlu0 %v3176
    %v3178 = vpop.xlane.xlu0 %3177
    %v3179 = vmul.f32 %v3175, %v291
    %v3180 = vmul.f32 %v3178, %v291
    %v3181 = vsub.f32 %v3167, %v3179
    %v3182 = vsub.f32 %v3168, %v3180
    %v3183 = vmul.f32 %v3181, %v3181
    %v3184 = vmul.f32 %v3182, %v3182
    %v3185 = vsel %vm125, %v3183, 0.0
    %3186 = vadd.xlane.f32.xlu0 %v3185
    %v3187 = vpop.xlane.xlu0 %3186
    %v3188 = vsel %vm125, %v3184, 0.0
    %3189 = vadd.xlane.f32.xlu0 %v3188
    %v3190 = vpop.xlane.xlu0 %3189
    %v3191 = vmul.f32 %v3187, 0.032258064
    %v3192 = vmul.f32 %v3190, 0.032258064
    %v3193 = vrsqrt.pop %v3191
    %v3194 = vmul.f32 %v3191, %v3193
    %vm3195 = vcmp.eq.f32.partialorder %v3191, inf
    %v3196 = vsel %vm3195, %v3191, %v3194
    %vm3197 = vcmp.eq.f32.partialorder %v3191, 0.0
    %v3198 = vand.u32 %v3191, 2147483648
    %v3199 = vsel %vm3197, %v3198, %v3196
    %v3200 = vrsqrt.pop %v3192
    %v3201 = vmul.f32 %v3192, %v3200
    %vm3202 = vcmp.eq.f32.partialorder %v3192, inf
    %v3203 = vsel %vm3202, %v3192, %v3201
    %vm3204 = vcmp.eq.f32.partialorder %v3192, 0.0
    %v3205 = vand.u32 %v3192, 2147483648
    %v3206 = vsel %vm3204, %v3205, %v3203
    %v3207 = vadd.f32 %v3199, 1e-06
    %v3208 = vadd.f32 %v3206, 1e-06
    %v3209 = vrcp.pop %v3207
    %v3210 = vrcp.pop %v3208
    %v3211 = vmul.f32 %v3181, %v3209
    %v3212 = vmul.f32 %v3182, %v3210
    %v3214 = vlaneseq
    %v3215 = vshrl.u32 %v3214, 7
    %v3216 = vsub.s32 0, %v3215
    %v3217 = vrot.slane %v3170, %v3216
    %v3219 = vmul.f32 %v3217, %v3211
    %v3220 = vmul.f32 %v3217, %v3212
    %v3222 = vlaneseq
    %v3223 = vshrl.u32 %v3222, 7
    %v3224 = vsub.s32 0, %v3223
    %v3225 = vrot.slane %v3172, %v3224
    %v3227 = vadd.f32 %v3219, %v3225
    %v3228 = vadd.f32 %v3220, %v3225
    %s3229 = scalar_lea.vmem %s14, 48
    %v3230 = vld [vmem:[%s3229] sm:$0xf]
    %v3231 = vld [vmem:[%s3229 + $0x4] sm:$0xf]
    %v3232 = vld [vmem:[%s3229 + $0x8] sm:$0xf]
    %v3233 = vld [vmem:[%s3229 + $0xc] sm:$0xf]
    %v3234 = vld [vmem:[%s3229 + $0x10] sm:$0xf]
    %v3235 = vld [vmem:[%s3229 + $0x14] sm:$0xf]
    %v3236 = vld [vmem:[%s3229 + $0x18] sm:$0xf]
    %v3237 = vld [vmem:[%s3229 + $0x1c] sm:$0xf]
    %v3238 = vld [vmem:[%s3229 + $0x20] sm:$0xf]
    %v3239 = vld [vmem:[%s3229 + $0x24] sm:$0xf]
    %v3240 = vld [vmem:[%s3229 + $0x28] sm:$0xf]
    %v3241 = vld [vmem:[%s3229 + $0x2c] sm:$0xf]
    %s3242 = scalar_lea.vmem %s15, 1
    %v3243 = vld [vmem:[%s3242] sm:$0x1]
    %v3245 = vrot.slane %v3228, 7
    %v3248 = vrot.slane %v3227, 7
    %v3249 = vsel %vm1535, %v3248, %v3245
    %v3252 = vsel %vm1535, %v3245, %v3248
    %v3253 = vmul.f32 %v3252, %v98
    %v3254 = vmul.f32 %v3249, %v99
    %v3255 = vpack.c.bf16 %v3254, %v3253
    %v3256 = vpack.c.bf16 %v3228, %v3227
    %v3261 = vunpack.c.l.b16 %v3234
    %v3262 = vunpack.c.l.b16 %v3235
    %v3263 = vunpack.c.l.b16 %v3236
    %v3264 = vunpack.c.l.b16 %v3237
    %v3265 = vpack.c.b16 %v3262, %v3261
    %v3266 = vpack.c.b16 %v3264, %v3263
    %v3270 = vsel %vm125, %v3256, 0
    %3272 = vmatprep.subr.bf16.mxu0 0
    %3273 = vmatpush1.bf16.msra.mxu0 %v3265
    %3274 = vmatprep.subr.bf16.mxu0 0
    %3275 = vmatpush1.bf16.msra.mxu0 %v3266
    %3276 = vmatprep.subr.bf16.mxu0 0
    %3277 = vmatpush1.bf16.msra.mxu0 0
    %3278 = vmatprep.subr.bf16.mxu0 0
    %3279 = vmatpush1.bf16.msra.mxu0 0
    %3280 = vmatprep.subr.bf16.mxu0 0
    %3281 = vmatpush1.bf16.msra.mxu0 0
    %3282 = vmatprep.subr.bf16.mxu0 0
    %3283 = vmatpush1.bf16.msra.mxu0 0
    %3284 = vmatprep.subr.bf16.mxu0 0
    %3285 = vmatpush1.bf16.msra.mxu0 0
    %3286 = vmatprep.subr.bf16.mxu0 0
    %3287 = vmatpush1.bf16.msra.mxu0 0
    %3288 = vmatprep.subr.bf16.mxu0 0
    %3289 = vmatpush1.bf16.msra.mxu0 0
    %3290 = vmatprep.subr.bf16.mxu0 0
    %3291 = vmatpush1.bf16.msra.mxu0 0
    %3292 = vmatprep.subr.bf16.mxu0 0
    %3293 = vmatpush1.bf16.msra.mxu0 0
    %3294 = vmatprep.subr.bf16.mxu0 0
    %3295 = vmatpush1.bf16.msra.mxu0 0
    %3296 = vmatprep.subr.bf16.mxu0 0
    %3297 = vmatpush1.bf16.msra.mxu0 0
    %3298 = vmatprep.subr.bf16.mxu0 0
    %3299 = vmatpush1.bf16.msra.mxu0 0
    %3300 = vmatprep.subr.bf16.mxu0 0
    %3301 = vmatpush1.bf16.msra.mxu0 0
    %3302 = vmatprep.subr.bf16.mxu0 0
    %3303 = vmatpush1.bf16.msra.mxu0 0
    %3304 = vmatprep.mubr.bf16.mxu0 0
    %3305 = vmatmul.mubr.bf16.gmra.mrb[0].mxu0 %v3270
    %v3306 = vpop.f32.mrb[0].mxu0
    %v3307 = vadd.f32 0.0, %v3306
    %v3308 = vpop.f32.mrb[0].mxu0
    %v3309 = vpop.f32.mrb[0].mxu0
    %v3310 = vadd.f32 0.0, %v3309
    %v3311 = vpop.f32.mrb[0].mxu0
    %3312 = vdwg.mxu0
    %v3317 = vunpack.c.l.b16 %v3230
    %v3318 = vunpack.c.l.b16 %v3231
    %v3319 = vunpack.c.l.b16 %v3232
    %v3320 = vunpack.c.l.b16 %v3233
    %v3321 = vpack.c.b16 %v3318, %v3317
    %v3322 = vpack.c.b16 %v3320, %v3319
    %v3326 = vsel %vm125, %v3255, 0
    %3328 = vmatprep.subr.bf16.mxu0 0
    %3329 = vmatpush1.bf16.msra.mxu0 %v3321
    %3330 = vmatprep.subr.bf16.mxu0 0
    %3331 = vmatpush1.bf16.msra.mxu0 %v3322
    %3332 = vmatprep.subr.bf16.mxu0 0
    %3333 = vmatpush1.bf16.msra.mxu0 0
    %3334 = vmatprep.subr.bf16.mxu0 0
    %3335 = vmatpush1.bf16.msra.mxu0 0
    %3336 = vmatprep.subr.bf16.mxu0 0
    %3337 = vmatpush1.bf16.msra.mxu0 0
    %3338 = vmatprep.subr.bf16.mxu0 0
    %3339 = vmatpush1.bf16.msra.mxu0 0
    %3340 = vmatprep.subr.bf16.mxu0 0
    %3341 = vmatpush1.bf16.msra.mxu0 0
    %3342 = vmatprep.subr.bf16.mxu0 0
    %3343 = vmatpush1.bf16.msra.mxu0 0
    %3344 = vmatprep.subr.bf16.mxu0 0
    %3345 = vmatpush1.bf16.msra.mxu0 0
    %3346 = vmatprep.subr.bf16.mxu0 0
    %3347 = vmatpush1.bf16.msra.mxu0 0
    %3348 = vmatprep.subr.bf16.mxu0 0
    %3349 = vmatpush1.bf16.msra.mxu0 0
    %3350 = vmatprep.subr.bf16.mxu0 0
    %3351 = vmatpush1.bf16.msra.mxu0 0
    %3352 = vmatprep.subr.bf16.mxu0 0
    %3353 = vmatpush1.bf16.msra.mxu0 0
    %3354 = vmatprep.subr.bf16.mxu0 0
    %3355 = vmatpush1.bf16.msra.mxu0 0
    %3356 = vmatprep.subr.bf16.mxu0 0
    %3357 = vmatpush1.bf16.msra.mxu0 0
    %3358 = vmatprep.subr.bf16.mxu0 0
    %3359 = vmatpush1.bf16.msra.mxu0 0
    %3360 = vmatprep.mubr.bf16.mxu0 0
    %3361 = vmatmul.mubr.bf16.gmra.mrb[0].mxu0 %v3326
    %v3362 = vpop.f32.mrb[0].mxu0
    %v3363 = vadd.f32 %v3307, %v3362
    %v3364 = vpop.f32.mrb[0].mxu0
    %v3365 = vpop.f32.mrb[0].mxu0
    %v3366 = vadd.f32 %v3310, %v3365
    %v3367 = vpop.f32.mrb[0].mxu0
    %3368 = vdwg.mxu0
    %v3369 = vrot.slane %v3227, 1
    %v3370 = vrot.slane %v3228, 1
    %v3371 = vsel %vm1657, %v3369, %v3370
    %v3375 = vsel %vm1657, %v3370, %v3369
    %v3376 = vmul.f32 %v3371, %v104
    %v3377 = vmul.f32 %v3375, %v105
    %v3378 = vpack.c.bf16 %v3377, %v3376
    %v3383 = vunpack.c.l.b16 %v3238
    %v3384 = vunpack.c.l.b16 %v3239
    %v3385 = vunpack.c.l.b16 %v3240
    %v3386 = vunpack.c.l.b16 %v3241
    %v3387 = vpack.c.b16 %v3384, %v3383
    %v3388 = vpack.c.b16 %v3386, %v3385
    %v3392 = vsel %vm125, %v3378, 0
    %3394 = vmatprep.subr.bf16.mxu0 0
    %3395 = vmatpush1.bf16.msra.mxu0 %v3387
    %3396 = vmatprep.subr.bf16.mxu0 0
    %3397 = vmatpush1.bf16.msra.mxu0 %v3388
    %3398 = vmatprep.subr.bf16.mxu0 0
    %3399 = vmatpush1.bf16.msra.mxu0 0
    %3400 = vmatprep.subr.bf16.mxu0 0
    %3401 = vmatpush1.bf16.msra.mxu0 0
    %3402 = vmatprep.subr.bf16.mxu0 0
    %3403 = vmatpush1.bf16.msra.mxu0 0
    %3404 = vmatprep.subr.bf16.mxu0 0
    %3405 = vmatpush1.bf16.msra.mxu0 0
    %3406 = vmatprep.subr.bf16.mxu0 0
    %3407 = vmatpush1.bf16.msra.mxu0 0
    %3408 = vmatprep.subr.bf16.mxu0 0
    %3409 = vmatpush1.bf16.msra.mxu0 0
    %3410 = vmatprep.subr.bf16.mxu0 0
    %3411 = vmatpush1.bf16.msra.mxu0 0
    %3412 = vmatprep.subr.bf16.mxu0 0
    %3413 = vmatpush1.bf16.msra.mxu0 0
    %3414 = vmatprep.subr.bf16.mxu0 0
    %3415 = vmatpush1.bf16.msra.mxu0 0
    %3416 = vmatprep.subr.bf16.mxu0 0
    %3417 = vmatpush1.bf16.msra.mxu0 0
    %3418 = vmatprep.subr.bf16.mxu0 0
    %3419 = vmatpush1.bf16.msra.mxu0 0
    %3420 = vmatprep.subr.bf16.mxu0 0
    %3421 = vmatpush1.bf16.msra.mxu0 0
    %3422 = vmatprep.subr.bf16.mxu0 0
    %3423 = vmatpush1.bf16.msra.mxu0 0
    %3424 = vmatprep.subr.bf16.mxu0 0
    %3425 = vmatpush1.bf16.msra.mxu0 0
    %3426 = vmatprep.mubr.bf16.mxu0 0
    %3427 = vmatmul.mubr.bf16.gmra.mrb[0].mxu0 %v3392
    %v3428 = vpop.f32.mrb[0].mxu0
    %v3429 = vadd.f32 0.0, %v3428
    %v3430 = vpop.f32.mrb[0].mxu0
    %v3431 = vpop.f32.mrb[0].mxu0
    %v3432 = vadd.f32 0.0, %v3431
    %v3433 = vpop.f32.mrb[0].mxu0
    %3434 = vdwg.mxu0
    %v3435 = vadd.f32 %v3363, %v3429
    %v3436 = vadd.f32 %v3366, %v3432
    %v3438 = vlaneseq
    %v3439 = vshrl.u32 %v3438, 7
    %v3440 = vsub.s32 0, %v3439
    %v3441 = vrot.slane %v3243, %v3440
    %v3443 = vadd.f32 %v3435, %v3441
    %v3444 = vadd.f32 %v3436, %v3441
    %v3445 = vmax.f32 %v3443, 0.0
    %v3446 = vmax.f32 %v3444, 0.0
    %s3447 = scalar_lea.vmem %s16, 96
    %v3448 = vld [vmem:[%s3447] sm:$0xf]
    %v3449 = vld [vmem:[%s3447 + $0x4] sm:$0xf]
    %v3450 = vld [vmem:[%s3447 + $0x8] sm:$0xf]
    %v3451 = vld [vmem:[%s3447 + $0xc] sm:$0xf]
    %v3452 = vld [vmem:[%s3447 + $0x10] sm:$0xf]
    %v3453 = vld [vmem:[%s3447 + $0x14] sm:$0xf]
    %v3454 = vld [vmem:[%s3447 + $0x18] sm:$0xf]
    %v3455 = vld [vmem:[%s3447 + $0x1c] sm:$0xf]
    %v3456 = vld [vmem:[%s3447 + $0x20] sm:$0xf]
    %v3457 = vld [vmem:[%s3447 + $0x24] sm:$0xf]
    %v3458 = vld [vmem:[%s3447 + $0x28] sm:$0xf]
    %v3459 = vld [vmem:[%s3447 + $0x2c] sm:$0xf]
    %v3460 = vld [vmem:[%s3447 + $0x30] sm:$0xf]
    %v3461 = vld [vmem:[%s3447 + $0x34] sm:$0xf]
    %v3462 = vld [vmem:[%s3447 + $0x38] sm:$0xf]
    %v3463 = vld [vmem:[%s3447 + $0x3c] sm:$0xf]
    %v3464 = vld [vmem:[%s3447 + $0x40] sm:$0xf]
    %v3465 = vld [vmem:[%s3447 + $0x44] sm:$0xf]
    %v3466 = vld [vmem:[%s3447 + $0x48] sm:$0xf]
    %v3467 = vld [vmem:[%s3447 + $0x4c] sm:$0xf]
    %v3468 = vld [vmem:[%s3447 + $0x50] sm:$0xf]
    %v3469 = vld [vmem:[%s3447 + $0x54] sm:$0xf]
    %v3470 = vld [vmem:[%s3447 + $0x58] sm:$0xf]
    %v3471 = vld [vmem:[%s3447 + $0x5c] sm:$0xf]
    %s3472 = scalar_lea.vmem %s17, 1
    %v3473 = vld [vmem:[%s3472] sm:$0x1]
    %v3475 = vrot.slane %v3446, 7
    %v3478 = vrot.slane %v3445, 7
    %v3479 = vsel %vm1535, %v3478, %v3475
    %v3482 = vsel %vm1535, %v3475, %v3478
    %v3483 = vmul.f32 %v3482, %v98
    %v3484 = vmul.f32 %v3479, %v99
    %v3485 = vpack.c.bf16 %v3484, %v3483
    %v3486 = vpack.c.bf16 %v3446, %v3445
    %v3495 = vunpack.c.l.b16 %v3456
    %v3496 = vunpack.c.l.b16 %v3457
    %v3497 = vunpack.c.l.b16 %v3458
    %v3498 = vunpack.c.l.b16 %v3459
    %v3499 = vunpack.c.l.b16 %v3460
    %v3500 = vunpack.c.l.b16 %v3461
    %v3501 = vunpack.c.l.b16 %v3462
    %v3502 = vunpack.c.l.b16 %v3463
    %v3503 = vpack.c.b16 %v3496, %v3495
    %v3504 = vpack.c.b16 %v3498, %v3497
    %v3505 = vpack.c.b16 %v3500, %v3499
    %v3506 = vpack.c.b16 %v3502, %v3501
    %v3512 = vsel %vm1798, %v3486, 0
    %3514 = vmatprep.subr.bf16.mxu0 0
    %3515 = vmatpush1.bf16.msra.mxu0 %v3503
    %3516 = vmatprep.subr.bf16.mxu0 0
    %3517 = vmatpush1.bf16.msra.mxu0 %v3504
    %3518 = vmatprep.subr.bf16.mxu0 0
    %3519 = vmatpush1.bf16.msra.mxu0 %v3505
    %3520 = vmatprep.subr.bf16.mxu0 0
    %3521 = vmatpush1.bf16.msra.mxu0 %v3506
    %3522 = vmatprep.subr.bf16.mxu0 0
    %3523 = vmatpush1.bf16.msra.mxu0 0
    %3524 = vmatprep.subr.bf16.mxu0 0
    %3525 = vmatpush1.bf16.msra.mxu0 0
    %3526 = vmatprep.subr.bf16.mxu0 0
    %3527 = vmatpush1.bf16.msra.mxu0 0
    %3528 = vmatprep.subr.bf16.mxu0 0
    %3529 = vmatpush1.bf16.msra.mxu0 0
    %3530 = vmatprep.subr.bf16.mxu0 0
    %3531 = vmatpush1.bf16.msra.mxu0 0
    %3532 = vmatprep.subr.bf16.mxu0 0
    %3533 = vmatpush1.bf16.msra.mxu0 0
    %3534 = vmatprep.subr.bf16.mxu0 0
    %3535 = vmatpush1.bf16.msra.mxu0 0
    %3536 = vmatprep.subr.bf16.mxu0 0
    %3537 = vmatpush1.bf16.msra.mxu0 0
    %3538 = vmatprep.subr.bf16.mxu0 0
    %3539 = vmatpush1.bf16.msra.mxu0 0
    %3540 = vmatprep.subr.bf16.mxu0 0
    %3541 = vmatpush1.bf16.msra.mxu0 0
    %3542 = vmatprep.subr.bf16.mxu0 0
    %3543 = vmatpush1.bf16.msra.mxu0 0
    %3544 = vmatprep.subr.bf16.mxu0 0
    %3545 = vmatpush1.bf16.msra.mxu0 0
    %3546 = vmatprep.mubr.bf16.mxu0 0
    %3547 = vmatmul.mubr.bf16.gmra.mrb[0].mxu0 %v3512
    %v3548 = vpop.f32.mrb[0].mxu0
    %v3549 = vadd.f32 0.0, %v3548
    %v3550 = vpop.f32.mrb[0].mxu0
    %v3551 = vpop.f32.mrb[0].mxu0
    %v3552 = vadd.f32 0.0, %v3551
    %v3553 = vpop.f32.mrb[0].mxu0
    %3554 = vdwg.mxu0
    %v3563 = vunpack.c.l.b16 %v3448
    %v3564 = vunpack.c.l.b16 %v3449
    %v3565 = vunpack.c.l.b16 %v3450
    %v3566 = vunpack.c.l.b16 %v3451
    %v3567 = vunpack.c.l.b16 %v3452
    %v3568 = vunpack.c.l.b16 %v3453
    %v3569 = vunpack.c.l.b16 %v3454
    %v3570 = vunpack.c.l.b16 %v3455
    %v3571 = vpack.c.b16 %v3564, %v3563
    %v3572 = vpack.c.b16 %v3566, %v3565
    %v3573 = vpack.c.b16 %v3568, %v3567
    %v3574 = vpack.c.b16 %v3570, %v3569
    %v3580 = vsel %vm1798, %v3485, 0
    %3582 = vmatprep.subr.bf16.mxu0 0
    %3583 = vmatpush1.bf16.msra.mxu0 %v3571
    %3584 = vmatprep.subr.bf16.mxu0 0
    %3585 = vmatpush1.bf16.msra.mxu0 %v3572
    %3586 = vmatprep.subr.bf16.mxu0 0
    %3587 = vmatpush1.bf16.msra.mxu0 %v3573
    %3588 = vmatprep.subr.bf16.mxu0 0
    %3589 = vmatpush1.bf16.msra.mxu0 %v3574
    %3590 = vmatprep.subr.bf16.mxu0 0
    %3591 = vmatpush1.bf16.msra.mxu0 0
    %3592 = vmatprep.subr.bf16.mxu0 0
    %3593 = vmatpush1.bf16.msra.mxu0 0
    %3594 = vmatprep.subr.bf16.mxu0 0
    %3595 = vmatpush1.bf16.msra.mxu0 0
    %3596 = vmatprep.subr.bf16.mxu0 0
    %3597 = vmatpush1.bf16.msra.mxu0 0
    %3598 = vmatprep.subr.bf16.mxu0 0
    %3599 = vmatpush1.bf16.msra.mxu0 0
    %3600 = vmatprep.subr.bf16.mxu0 0
    %3601 = vmatpush1.bf16.msra.mxu0 0
    %3602 = vmatprep.subr.bf16.mxu0 0
    %3603 = vmatpush1.bf16.msra.mxu0 0
    %3604 = vmatprep.subr.bf16.mxu0 0
    %3605 = vmatpush1.bf16.msra.mxu0 0
    %3606 = vmatprep.subr.bf16.mxu0 0
    %3607 = vmatpush1.bf16.msra.mxu0 0
    %3608 = vmatprep.subr.bf16.mxu0 0
    %3609 = vmatpush1.bf16.msra.mxu0 0
    %3610 = vmatprep.subr.bf16.mxu0 0
    %3611 = vmatpush1.bf16.msra.mxu0 0
    %3612 = vmatprep.subr.bf16.mxu0 0
    %3613 = vmatpush1.bf16.msra.mxu0 0
    %3614 = vmatprep.mubr.bf16.mxu0 0
    %3615 = vmatmul.mubr.bf16.gmra.mrb[0].mxu0 %v3580
    %v3616 = vpop.f32.mrb[0].mxu0
    %v3617 = vadd.f32 %v3549, %v3616
    %v3618 = vpop.f32.mrb[0].mxu0
    %v3619 = vpop.f32.mrb[0].mxu0
    %v3620 = vadd.f32 %v3552, %v3619
    %v3621 = vpop.f32.mrb[0].mxu0
    %3622 = vdwg.mxu0
    %v3623 = vrot.slane %v3445, 1
    %v3624 = vrot.slane %v3446, 1
    %v3625 = vsel %vm1657, %v3623, %v3624
    %v3629 = vsel %vm1657, %v3624, %v3623
    %v3630 = vmul.f32 %v3625, %v104
    %v3631 = vmul.f32 %v3629, %v105
    %v3632 = vpack.c.bf16 %v3631, %v3630
    %v3641 = vunpack.c.l.b16 %v3464
    %v3642 = vunpack.c.l.b16 %v3465
    %v3643 = vunpack.c.l.b16 %v3466
    %v3644 = vunpack.c.l.b16 %v3467
    %v3645 = vunpack.c.l.b16 %v3468
    %v3646 = vunpack.c.l.b16 %v3469
    %v3647 = vunpack.c.l.b16 %v3470
    %v3648 = vunpack.c.l.b16 %v3471
    %v3649 = vpack.c.b16 %v3642, %v3641
    %v3650 = vpack.c.b16 %v3644, %v3643
    %v3651 = vpack.c.b16 %v3646, %v3645
    %v3652 = vpack.c.b16 %v3648, %v3647
    %v3658 = vsel %vm1798, %v3632, 0
    %3660 = vmatprep.subr.bf16.mxu0 0
    %3661 = vmatpush1.bf16.msra.mxu0 %v3649
    %3662 = vmatprep.subr.bf16.mxu0 0
    %3663 = vmatpush1.bf16.msra.mxu0 %v3650
    %3664 = vmatprep.subr.bf16.mxu0 0
    %3665 = vmatpush1.bf16.msra.mxu0 %v3651
    %3666 = vmatprep.subr.bf16.mxu0 0
    %3667 = vmatpush1.bf16.msra.mxu0 %v3652
    %3668 = vmatprep.subr.bf16.mxu0 0
    %3669 = vmatpush1.bf16.msra.mxu0 0
    %3670 = vmatprep.subr.bf16.mxu0 0
    %3671 = vmatpush1.bf16.msra.mxu0 0
    %3672 = vmatprep.subr.bf16.mxu0 0
    %3673 = vmatpush1.bf16.msra.mxu0 0
    %3674 = vmatprep.subr.bf16.mxu0 0
    %3675 = vmatpush1.bf16.msra.mxu0 0
    %3676 = vmatprep.subr.bf16.mxu0 0
    %3677 = vmatpush1.bf16.msra.mxu0 0
    %3678 = vmatprep.subr.bf16.mxu0 0
    %3679 = vmatpush1.bf16.msra.mxu0 0
    %3680 = vmatprep.subr.bf16.mxu0 0
    %3681 = vmatpush1.bf16.msra.mxu0 0
    %3682 = vmatprep.subr.bf16.mxu0 0
    %3683 = vmatpush1.bf16.msra.mxu0 0
    %3684 = vmatprep.subr.bf16.mxu0 0
    %3685 = vmatpush1.bf16.msra.mxu0 0
    %3686 = vmatprep.subr.bf16.mxu0 0
    %3687 = vmatpush1.bf16.msra.mxu0 0
    %3688 = vmatprep.subr.bf16.mxu0 0
    %3689 = vmatpush1.bf16.msra.mxu0 0
    %3690 = vmatprep.subr.bf16.mxu0 0
    %3691 = vmatpush1.bf16.msra.mxu0 0
    %3692 = vmatprep.mubr.bf16.mxu0 0
    %3693 = vmatmul.mubr.bf16.gmra.mrb[0].mxu0 %v3658
    %v3694 = vpop.f32.mrb[0].mxu0
    %v3695 = vadd.f32 0.0, %v3694
    %v3696 = vpop.f32.mrb[0].mxu0
    %v3697 = vpop.f32.mrb[0].mxu0
    %v3698 = vadd.f32 0.0, %v3697
    %v3699 = vpop.f32.mrb[0].mxu0
    %3700 = vdwg.mxu0
    %v3701 = vadd.f32 %v3617, %v3695
    %v3702 = vadd.f32 %v3620, %v3698
    %v3704 = vlaneseq
    %v3705 = vshrl.u32 %v3704, 7
    %v3706 = vsub.s32 0, %v3705
    %v3707 = vrot.slane %v3473, %v3706
    %v3709 = vadd.f32 %v3701, %v3707
    %v3710 = vadd.f32 %v3702, %v3707
    %v3711 = vadd.f32 %v3167, %v3709
    %v3712 = vadd.f32 %v3168, %v3710
    %v3713 = vld [vmem:[%s18] sm:$0x1]
    %v3714 = vld [vmem:[%s19] sm:$0x1]
    %v3715 = vsel %vm125, %v3711, 0.0
    %3716 = vadd.xlane.f32.xlu0 %v3715
    %v3717 = vpop.xlane.xlu0 %3716
    %v3718 = vsel %vm125, %v3712, 0.0
    %3719 = vadd.xlane.f32.xlu0 %v3718
    %v3720 = vpop.xlane.xlu0 %3719
    %v3721 = vmul.f32 %v3717, %v291
    %v3722 = vmul.f32 %v3720, %v291
    %v3723 = vsub.f32 %v3711, %v3721
    %v3724 = vsub.f32 %v3712, %v3722
    %v3725 = vmul.f32 %v3723, %v3723
    %v3726 = vmul.f32 %v3724, %v3724
    %v3727 = vsel %vm125, %v3725, 0.0
    %3728 = vadd.xlane.f32.xlu0 %v3727
    %v3729 = vpop.xlane.xlu0 %3728
    %v3730 = vsel %vm125, %v3726, 0.0
    %3731 = vadd.xlane.f32.xlu0 %v3730
    %v3732 = vpop.xlane.xlu0 %3731
    %v3733 = vmul.f32 %v3729, 0.032258064
    %v3734 = vmul.f32 %v3732, 0.032258064
    %v3735 = vrsqrt.pop %v3733
    %v3736 = vmul.f32 %v3733, %v3735
    %vm3737 = vcmp.eq.f32.partialorder %v3733, inf
    %v3738 = vsel %vm3737, %v3733, %v3736
    %vm3739 = vcmp.eq.f32.partialorder %v3733, 0.0
    %v3740 = vand.u32 %v3733, 2147483648
    %v3741 = vsel %vm3739, %v3740, %v3738
    %v3742 = vrsqrt.pop %v3734
    %v3743 = vmul.f32 %v3734, %v3742
    %vm3744 = vcmp.eq.f32.partialorder %v3734, inf
    %v3745 = vsel %vm3744, %v3734, %v3743
    %vm3746 = vcmp.eq.f32.partialorder %v3734, 0.0
    %v3747 = vand.u32 %v3734, 2147483648
    %v3748 = vsel %vm3746, %v3747, %v3745
    %v3749 = vadd.f32 %v3741, 1e-06
    %v3750 = vadd.f32 %v3748, 1e-06
    %v3751 = vrcp.pop %v3749
    %v3752 = vrcp.pop %v3750
    %v3753 = vmul.f32 %v3723, %v3751
    %v3754 = vmul.f32 %v3724, %v3752
    %v3756 = vlaneseq
    %v3757 = vshrl.u32 %v3756, 7
    %v3758 = vsub.s32 0, %v3757
    %v3759 = vrot.slane %v3713, %v3758
    %v3761 = vmul.f32 %v3759, %v3753
    %v3762 = vmul.f32 %v3759, %v3754
    %v3764 = vlaneseq
    %v3765 = vshrl.u32 %v3764, 7
    %v3766 = vsub.s32 0, %v3765
    %v3767 = vrot.slane %v3714, %v3766
    %v3769 = vadd.f32 %v3761, %v3767
    %v3770 = vadd.f32 %v3762, %v3767
    %3771 = vst.msk [vmem:[#allocation2] sm:$0xff] %vm125, %v3769
    %3772 = vst.msk [vmem:[#allocation2 + $0x8] sm:$0xff] %vm125, %v3770
    // Predicated region
    $region82: #{tpu_custom_call.1} parent=1 // pred_check
      _
    $region83: #{tpu_custom_call.1} parent=1 // pred_check_branch
      %3774 = sbr.rel (0) target = $region85
    $region84: #{tpu_custom_call.1} parent=1 // pred_region
      %s3776 = ssub.s32 256, 256
      %3777 = vsyncadd [#allocation3], %s3776
      %s3778 = sshll.u32 [#allocation2], 4
      %s3779 = int_to_ptr.vmem [resolvable:$true] %s3778
      %3784 = dma.vmem_to_hbm [thread:$0]  %s3779, 256, %s20, [#allocation3], 128, 128, 8
    $region85: #{tpu_custom_call.1} parent=1 // pred_fallthru
      _
    // Predicated region
    $region86: #{tpu_custom_call.1} parent=1 // pred_check
      _
    $region87: #{tpu_custom_call.1} parent=1 // pred_check_branch
      %3786 = sbr.rel (0) target = $region89
    $region88: #{tpu_custom_call.1} parent=1 // pred_region
      %3787 = dma.done [#allocation3], 256
    $region89: #{tpu_custom_call.1} parent=1 // pred_fallthru
      _
    %3788 = vsyncpa [#allocation3], 1

</llo_original>
